<compile_context>
chip_gen: v5e
topology: v5e:2x2
jax: 0.10.0
libtpu: 0.0.40
codegen_flags: <defaults>
</compile_context>

<pallas_src>
import functools

import jax
import jax.numpy as jnp
from jax import lax
from jax.experimental import pallas as pl
from jax.experimental.pallas import tpu as pltpu


# ----------------------------------------------------------------------------
# Kernel
# ----------------------------------------------------------------------------
def _string_ae_kernel(idx_ref, emb_ref, w1_ref, b1_ref, w2_ref, b2_ref,
                      w3_ref, b3_ref, w4_ref, b4_ref,
                      x_ref, hid_ref, out_ref, *, norm, activate):
    idx = idx_ref[...]                        # (TB, M) int32
    emb = emb_ref[...]                        # (Vp, E) f32 (row 0 = padding_idx, zeroed)
    tb, m = idx.shape
    v = emb.shape[0]

    # --- char-embedding gather, fused into the kernel ------------------------
    # Exact one-hot gather on the MXU (f32 x f32, f32 accumulate => bit-exact
    # vs. an f32 table lookup).  V is tiny, so the M small (TB,V)x(V,E) matmuls
    # are noise next to the HBM streams.  Out-of-range indices gather zeros
    # (PyTorch would raise).  Padded rows of a partial last batch block compute
    # on garbage but their writeback is masked by Pallas; there are no
    # cross-row reductions in this kernel, so that is safe.
    iota_v = lax.broadcasted_iota(jnp.int32, (tb, v), 1)
    pieces = []
    for j in range(m):                                        # static, M small
        onehot = (idx[:, j:j + 1] == iota_v).astype(jnp.float32)   # (TB, V)
        pieces.append(jnp.dot(onehot, emb, preferred_element_type=jnp.float32))
    x = jnp.concatenate(pieces, axis=-1)      # (TB, M*E) f32
    x_ref[...] = x

    # --- encoder: lin1 -> relu -> lin2 (bf16 operands, f32 MXU accumulate) ---
    h1 = jnp.dot(x.astype(jnp.bfloat16), w1_ref[...],
                 preferred_element_type=jnp.float32) + b1_ref[...]
    h1 = jnp.maximum(h1, 0.0)                 # (TB, 2H) f32
    hidden = jnp.dot(h1.astype(jnp.bfloat16), w2_ref[...],
                     preferred_element_type=jnp.float32) + b2_ref[...]

    if norm:
        # F.normalize(hidden, p=2, dim=1, eps=1e-12): x / max(||x||, 1e-12)
        sq = jnp.sum(hidden * hidden, axis=-1, keepdims=True)
        hidden = hidden * lax.rsqrt(jnp.maximum(sq, 1e-24))   # EUP rsqrt

    if activate == "relu":
        hidden = jnp.maximum(hidden, 0.0)
    elif activate == "tanh":
        hidden = jnp.tanh(hidden)
    elif activate == "sigmoid":
        hidden = jax.nn.sigmoid(hidden)

    hid_ref[...] = hidden.astype(hid_ref.dtype)               # (TB, H)

    # --- decoder: lin3 -> relu -> lin4 ---------------------------------------
    # (narrow N=32 / K=32 matmuls left as-is: memory-bound kernel, padding to
    #  MXU-native sizes adds VMEM + VPU work for zero wall-time benefit)
    h3 = jnp.dot(hidden.astype(jnp.bfloat16), w3_ref[...],
                 preferred_element_type=jnp.float32) + b3_ref[...]
    h3 = jnp.maximum(h3, 0.0)                 # (TB, 2H) f32
    out = jnp.dot(h3.astype(jnp.bfloat16), w4_ref[...],
                  preferred_element_type=jnp.float32) + b4_ref[...]
    out_ref[...] = out.astype(out_ref.dtype)  # (TB, M*E)


# ----------------------------------------------------------------------------
# Parameter prep (one-time, outside the per-call trace)
# ----------------------------------------------------------------------------
def prepare_params(params):
    """Transpose PyTorch (out,in) weights to (in,out), cast to bf16, reshape
    biases to (1,out) f32.  Call once so no transpose/copy runs per forward."""
    prepped = {}
    for n in (1, 2, 3, 4):
        prepped[f"w{n}"] = jnp.asarray(params[f"w{n}"], jnp.float32).T.astype(jnp.bfloat16)
        prepped[f"b{n}"] = jnp.asarray(params[f"b{n}"], jnp.float32)[None, :]
    return prepped


# ----------------------------------------------------------------------------
# Tile picking + realistic VMEM accounting
# ----------------------------------------------------------------------------
_VMEM_BUDGET_BYTES = 40 * 1024 * 1024     # conservative vs. v7x's 64 MiB physical


def _round_up(x, mult):
    return ((x + mult - 1) // mult) * mult


def _padded_tile_bytes(rows, cols, itemsize):
    """VMEM bytes for one buffer of a (rows, cols) tile after (sublane, lane)
    padding.  bf16 packs two rows per sublane word -> 16-row sublane tiles."""
    sub = 16 if itemsize == 2 else 8
    return _round_up(max(rows, 1), sub) * _round_up(max(cols, 1), 128) * itemsize


def _vmem_bytes(tb, me, h, m, vocab):
    """Realistic footprint: batch-tiled I/O double-buffered by the pipeline,
    residents counted with their actual (small) sizes, true live intermediates
    (no 3x slack)."""
    h2 = 2 * h
    e = me // m
    total = 0
    # batch-tiled I/O, double-buffered
    total += 2 * _padded_tile_bytes(tb, m, 4)          # char indices (int32)
    total += 2 * _padded_tile_bytes(tb, me, 4)         # x_flat output
    total += 2 * _padded_tile_bytes(tb, h, 4)          # hidden output
    total += 2 * _padded_tile_bytes(tb, me, 4)         # decoder output (<= f32)
    # residents (constant index_map).  Counted x2 only because we have not yet
    # enabled pipeline_mode=pl.Buffered(1) (see TODO); they are tiny anyway.
    wts = (_padded_tile_bytes(vocab, e, 4)
           + _padded_tile_bytes(me, h2, 2) + _padded_tile_bytes(h2, h, 2)
           + _padded_tile_bytes(h, h2, 2) + _padded_tile_bytes(h2, me, 2)
           + 2 * _padded_tile_bytes(1, h2, 4) + _padded_tile_bytes(1, h, 4)
           + _padded_tile_bytes(1, me, 4))
    total += 2 * wts
    # live in-body intermediates: x (f32 + bf16 copy), h1/h3 (f32 + bf16),
    # one one-hot block + one gather piece
    total += _padded_tile_bytes(tb, me, 4) + _padded_tile_bytes(tb, me, 2)
    total += 2 * (_padded_tile_bytes(tb, h2, 4) + _padded_tile_bytes(tb, h2, 2))
    total += _padded_tile_bytes(tb, vocab, 4) + _padded_tile_bytes(tb, e, 4)
    return total


def _pick_batch_tile(batch, me, h, m, vocab, budget=_VMEM_BUDGET_BYTES):
    """Large batch tiles (up to 4096) to amortize the ~0.35 us per-grid-step
    overhead, while keeping enough grid steps for v7x's two TensorCores and
    the DMA pipeline, and fitting the VMEM budget."""
    if batch <= 128:
        return batch                                   # single full-batch block
    tb = min(4096, 1 << (batch.bit_length() - 1))      # largest pow2 <= batch
    # aim for >= 8 grid steps (v7x megacore + pipeline depth), but never drop
    # below 512-row tiles (HBM-roofline sweet spot) just for grid depth
    while tb > 512 and pl.cdiv(batch, tb) < 8:
        tb //= 2
    # always leave >= 2 steps so both TCs get work and DMA overlaps compute
    while tb > 128 and pl.cdiv(batch, tb) < 2:
        tb //= 2
    # fit the realistic VMEM footprint into the budget
    while tb > 128 and _vmem_bytes(tb, me, h, m, vocab) > budget:
        tb //= 2
    return tb


# ----------------------------------------------------------------------------
# Forward wrappers
# ----------------------------------------------------------------------------
def _apply_activation(hidden, activate):
    if activate == "relu":
        return jnp.maximum(hidden, 0.0)
    if activate == "tanh":
        return jnp.tanh(hidden)
    if activate == "sigmoid":
        return jax.nn.sigmoid(hidden)
    return hidden


def _jnp_forward(indices, emb_table, p, *, norm, activate, output_dtype):
    """Small-batch path: plain jnp with the same bf16/f32 numerics as the
    kernel (no pallas_call launch / DMA-setup overhead).
    NOTE: jnp.take clamps out-of-range indices (PyTorch would raise)."""
    B, M = indices.shape
    E = emb_table.shape[1]
    x = jnp.take(emb_table, indices, axis=0).reshape(B, M * E)
    h1 = jnp.maximum(jnp.dot(x.astype(jnp.bfloat16), p["w1"],
                             preferred_element_type=jnp.float32) + p["b1"], 0.0)
    hidden = jnp.dot(h1.astype(jnp.bfloat16), p["w2"],
                     preferred_element_type=jnp.float32) + p["b2"]
    if norm:
        sq = jnp.sum(hidden * hidden, axis=-1, keepdims=True)
        hidden = hidden * lax.rsqrt(jnp.maximum(sq, 1e-24))
    hidden = _apply_activation(hidden, activate)
    h3 = jnp.maximum(jnp.dot(hidden.astype(jnp.bfloat16), p["w3"],
                             preferred_element_type=jnp.float32) + p["b3"], 0.0)
    out = jnp.dot(h3.astype(jnp.bfloat16), p["w4"],
                  preferred_element_type=jnp.float32) + p["b4"]
    return x, hidden, out.astype(output_dtype)


def string_autoencoder_forward(indices, emb_table, prepped_params, *,
                               norm=False, activate=None,
                               output_dtype=jnp.float32,
                               min_pallas_batch=32):
    """indices: (B, max_char_size) int; emb_table: (V, E) f32 (row 0 zeroed).
    prepped_params: output of prepare_params().
    Returns (input_flat, hidden, output) matching the PyTorch module.
    output_dtype=jnp.bfloat16 halves the largest HBM stream if callers accept it."""
    indices = indices.astype(jnp.int32)
    emb_table = emb_table.astype(jnp.float32)

    B, M = indices.shape
    V, E = emb_table.shape
    ME = M * E

    p = prepped_params
    H2 = p["w1"].shape[1]
    H = p["w2"].shape[1]

    if B < min_pallas_batch:
        # Fixed launch/DMA-setup overhead dwarfs the ~41 KFLOP/row at tiny B.
        return _jnp_forward(indices, emb_table, p, norm=norm,
                            activate=activate, output_dtype=output_dtype)

    # Pad the (tiny) vocab axis to a sublane multiple; padded rows are zero and
    # are never selected by the one-hot (indices < V), so results are unchanged.
    V_pad = _round_up(V, 8)
    if V_pad != V:
        emb_table = jnp.pad(emb_table, ((0, V_pad - V), (0, 0)))

    TB = _pick_batch_tile(B, ME, H, M, V_pad)
    grid = (pl.cdiv(B, TB),)

    def batch_block(shape):                      # tiled along the batch axis
        return pl.BlockSpec(shape, lambda i: (i, 0))

    def resident(shape):                         # constant block -> VMEM-resident
        return pl.BlockSpec(shape, lambda i: (0, 0))

    kernel = functools.partial(_string_ae_kernel, norm=norm, activate=activate)

    footprint = _vmem_bytes(TB, ME, H, M, V_pad)
    vmem_limit = int(min(max(footprint * 5 // 4, 16 * 1024 * 1024),
                         56 * 1024 * 1024))

    x_flat, hidden, output = pl.pallas_call(
        kernel,
        grid=grid,
        out_shape=(
            jax.ShapeDtypeStruct((B, ME), jnp.float32),      # input (x_flat)
            jax.ShapeDtypeStruct((B, H), jnp.float32),       # hidden
            jax.ShapeDtypeStruct((B, ME), output_dtype),     # output
        ),
        in_specs=[
            batch_block((TB, M)),                            # char indices
            resident((V_pad, E)),                            # embedding table
            resident((ME, H2)), resident((1, H2)),           # lin1
            resident((H2, H)),  resident((1, H)),            # lin2
            resident((H, H2)),  resident((1, H2)),           # lin3
            resident((H2, ME)), resident((1, ME)),           # lin4
        ],
        out_specs=(
            batch_block((TB, ME)),
            batch_block((TB, H)),
            batch_block((TB, ME)),
        ),
        compiler_params=pltpu.CompilerParams(
            dimension_semantics=("parallel",),
            vmem_limit_bytes=vmem_limit,
        ),
    )(indices, emb_table, p["w1"], p["b1"], p["w2"], p["b2"],
      p["w3"], p["b3"], p["w4"], p["b4"])

    return x_flat, hidden, output


# ----------------------------------------------------------------------------
# Pure-JAX f32 reference + synthetic init
# ----------------------------------------------------------------------------
def _reference_forward(indices, emb_table, params, *, norm, activate):
    """Pure-JAX f32 reference mirroring the PyTorch module."""
    B, M = indices.shape
    E = emb_table.shape[1]
    x = jnp.take(emb_table, indices, axis=0).reshape(B, M * E)
    h1 = jnp.maximum(x @ params["w1"].T + params["b1"], 0.0)
    hidden = h1 @ params["w2"].T + params["b2"]
    if norm:
        nrm = jnp.sqrt(jnp.sum(hidden * hidden, axis=-1, keepdims=True))
        hidden = hidden / jnp.maximum(nrm, 1e-12)
    hidden = _apply_activation(hidden, activate)
    h3 = jnp.maximum(hidden @ params["w3"].T + params["b3"], 0.0)
    out = h3 @ params["w4"].T + params["b4"]
    return x, hidden, out


def _init_params(key, max_char_size, embs_size, hidden_size, vocab_size):
    """Deterministic synthetic parameter init (PyTorch Linear weight layout)."""
    ME = max_char_size * embs_size
    H2 = 2 * hidden_size
    ks = jax.random.split(key, 9)

    def lin(k, out_dim, in_dim):
        bound = 1.0 / jnp.sqrt(in_dim)
        kw, kb = jax.random.split(k)
        w = jax.random.uniform(kw, (out_dim, in_dim), jnp.float32, -bound, bound)
        b = jax.random.uniform(kb, (out_dim,), jnp.float32, -bound, bound)
        return w, b

    emb = jax.random.normal(ks[0], (vocab_size, embs_size), jnp.float32) * 0.1
    emb = emb.at[0].set(0.0)  # padding_idx=0

    w1, b1 = lin(ks[1], H2, ME)
    w2, b2 = lin(ks[2], hidden_size, H2)
    w3, b3 = lin(ks[3], H2, hidden_size)
    w4, b4 = lin(ks[4], ME, H2)

    params = dict(w1=w1, b1=b1, w2=w2, b2=b2, w3=w3, b3=b3, w4=w4, b4=b4)
    return emb, params


if __name__ == "__main__":
    MAX_CHAR = 8         # max_char_size
    EMBS = 16            # embs_size  -> flattened input dim = 128
    HIDDEN = 32          # hidden_size
    VOCAB = 20
    B = 256              # exercises the Pallas path: TB=128, grid=(2,)

    key = jax.random.PRNGKey(0)
    k_idx, k_par, k_small = jax.random.split(key, 3)

    emb_table, params = _init_params(k_par, MAX_CHAR, EMBS, HIDDEN, VOCAB)
    indices = jax.random.randint(k_idx, (B, MAX_CHAR), 0, VOCAB, dtype=jnp.int32)

    prepped = prepare_params(params)   # one-time transpose + bf16 cast

    fwd = jax.jit(functools.partial(string_autoencoder_forward,
                                    norm=True, activate="tanh"))

    # --- Pallas path ---------------------------------------------------------
    inp, hid, out = fwd(indices, emb_table, prepped)
    jax.block_until_ready((inp, hid, out))

    assert inp.shape == (B, MAX_CHAR * EMBS)
    assert hid.shape == (B, HIDDEN)
    assert out.shape == (B, MAX_CHAR * EMBS)

    r_inp, r_hid, r_out = _reference_forward(indices, emb_table, params,
                                             norm=True, activate="tanh")
    # in-kernel one-hot f32 gather is exact vs. the f32 table lookup
    assert jnp.allclose(inp, r_inp, atol=1e-6, rtol=1e-6)
    # bf16 operands / f32 MXU accumulation -> ~1e-2 relative error downstream
    assert jnp.allclose(hid, r_hid, atol=3e-2, rtol=3e-2)
    assert jnp.allclose(out, r_out, atol=3e-2, rtol=3e-2)

    # --- small-batch fallback path (plain jnp, no pallas_call launch) --------
    idx_small = jax.random.randint(k_small, (8, MAX_CHAR), 0, VOCAB, dtype=jnp.int32)
    s_inp, s_hid, s_out = fwd(idx_small, emb_table, prepped)
    jax.block_until_ready((s_inp, s_hid, s_out))
    rs_inp, rs_hid, rs_out = _reference_forward(idx_small, emb_table, params,
                                                norm=True, activate="tanh")
    assert jnp.allclose(s_inp, rs_inp, atol=1e-6, rtol=1e-6)
    assert jnp.allclose(s_hid, rs_hid, atol=3e-2, rtol=3e-2)
    assert jnp.allclose(s_out, rs_out, atol=3e-2, rtol=3e-2)

    print("KERNEL_OK")
</pallas_src>

<mosaic_0001>
module attributes {stable_mosaic.version = 11 : i64} {
  func.func @_string_ae_kernel(%arg0: i32, %arg1: memref<128x8xi32, #tpu.memory_space<vmem>>, %arg2: memref<24x16xf32, #tpu.memory_space<vmem>>, %arg3: memref<128x64xbf16, #tpu.memory_space<vmem>>, %arg4: memref<1x64xf32, #tpu.memory_space<vmem>>, %arg5: memref<64x32xbf16, #tpu.memory_space<vmem>>, %arg6: memref<1x32xf32, #tpu.memory_space<vmem>>, %arg7: memref<32x64xbf16, #tpu.memory_space<vmem>>, %arg8: memref<1x64xf32, #tpu.memory_space<vmem>>, %arg9: memref<64x128xbf16, #tpu.memory_space<vmem>>, %arg10: memref<1x128xf32, #tpu.memory_space<vmem>>, %arg11: memref<128x128xf32, #tpu.memory_space<vmem>>, %arg12: memref<128x32xf32, #tpu.memory_space<vmem>>, %arg13: memref<128x128xf32, #tpu.memory_space<vmem>>) attributes {dimension_semantics = [#tpu.dimension_semantics<parallel>], iteration_bounds = array<i64: 2>, scalar_prefetch = 0 : i64, scratch_operands = 0 : i64, tpu.core_type = #tpu.core_type<tc>, window_params = [{transform_indices = @transform_0, window_bounds = array<i64: 128, 8>}, {pipeline_mode = #tpu.pipeline_mode<synchronous>, transform_indices = @transform_1, window_bounds = array<i64: 24, 16>}, {pipeline_mode = #tpu.pipeline_mode<synchronous>, transform_indices = @transform_2, window_bounds = array<i64: 128, 64>}, {pipeline_mode = #tpu.pipeline_mode<synchronous>, transform_indices = @transform_3, window_bounds = array<i64: 1, 64>}, {pipeline_mode = #tpu.pipeline_mode<synchronous>, transform_indices = @transform_4, window_bounds = array<i64: 64, 32>}, {pipeline_mode = #tpu.pipeline_mode<synchronous>, transform_indices = @transform_5, window_bounds = array<i64: 1, 32>}, {pipeline_mode = #tpu.pipeline_mode<synchronous>, transform_indices = @transform_6, window_bounds = array<i64: 32, 64>}, {pipeline_mode = #tpu.pipeline_mode<synchronous>, transform_indices = @transform_7, window_bounds = array<i64: 1, 64>}, {pipeline_mode = #tpu.pipeline_mode<synchronous>, transform_indices = @transform_8, window_bounds = array<i64: 64, 128>}, {pipeline_mode = #tpu.pipeline_mode<synchronous>, transform_indices = @transform_9, window_bounds = array<i64: 1, 128>}, {transform_indices = @transform_10, window_bounds = array<i64: 128, 128>}, {transform_indices = @transform_11, window_bounds = array<i64: 128, 32>}, {transform_indices = @transform_12, window_bounds = array<i64: 128, 128>}]} {
    %c0 = arith.constant 0 : index
    %c0_0 = arith.constant 0 : index
    %0 = vector.load %arg1[%c0, %c0_0] : memref<128x8xi32, #tpu.memory_space<vmem>>, vector<128x8xi32>
    %c0_1 = arith.constant 0 : index
    %c0_2 = arith.constant 0 : index
    %1 = vector.load %arg2[%c0_1, %c0_2] : memref<24x16xf32, #tpu.memory_space<vmem>>, vector<24x16xf32>
    %2 = tpu.iota {dimensions = array<i32: 1>} : vector<128x24xi32>
    %3 = vector.extract_strided_slice %0 {offsets = [0, 0], sizes = [128, 1], strides = [1, 1]} : vector<128x8xi32> to vector<128x1xi32>
    %4 = vector.broadcast %3 : vector<128x1xi32> to vector<128x24xi32>
    %5 = arith.cmpi eq, %4, %2 : vector<128x24xi32>
    %6 = arith.extui %5 : vector<128x24xi1> to vector<128x24xi32>
    %7 = arith.sitofp %6 : vector<128x24xi32> to vector<128x24xf32>
    %cst = arith.constant dense<0.000000e+00> : vector<128x16xf32>
    %8 = tpu.matmul %7, %1, %cst {dimension_numbers = #tpu.dot_dimension_numbers<[1], [0], [0], [1], [0, 0, 1, 1], [], []>} : vector<128x24xf32>, vector<24x16xf32>, vector<128x16xf32> -> vector<128x16xf32>
    %9 = vector.extract_strided_slice %0 {offsets = [0, 1], sizes = [128, 1], strides = [1, 1]} : vector<128x8xi32> to vector<128x1xi32>
    %10 = vector.broadcast %9 : vector<128x1xi32> to vector<128x24xi32>
    %11 = arith.cmpi eq, %10, %2 : vector<128x24xi32>
    %12 = arith.extui %11 : vector<128x24xi1> to vector<128x24xi32>
    %13 = arith.sitofp %12 : vector<128x24xi32> to vector<128x24xf32>
    %cst_3 = arith.constant dense<0.000000e+00> : vector<128x16xf32>
    %14 = tpu.matmul %13, %1, %cst_3 {dimension_numbers = #tpu.dot_dimension_numbers<[1], [0], [0], [1], [0, 0, 1, 1], [], []>} : vector<128x24xf32>, vector<24x16xf32>, vector<128x16xf32> -> vector<128x16xf32>
    %15 = vector.extract_strided_slice %0 {offsets = [0, 2], sizes = [128, 1], strides = [1, 1]} : vector<128x8xi32> to vector<128x1xi32>
    %16 = vector.broadcast %15 : vector<128x1xi32> to vector<128x24xi32>
    %17 = arith.cmpi eq, %16, %2 : vector<128x24xi32>
    %18 = arith.extui %17 : vector<128x24xi1> to vector<128x24xi32>
    %19 = arith.sitofp %18 : vector<128x24xi32> to vector<128x24xf32>
    %cst_4 = arith.constant dense<0.000000e+00> : vector<128x16xf32>
    %20 = tpu.matmul %19, %1, %cst_4 {dimension_numbers = #tpu.dot_dimension_numbers<[1], [0], [0], [1], [0, 0, 1, 1], [], []>} : vector<128x24xf32>, vector<24x16xf32>, vector<128x16xf32> -> vector<128x16xf32>
    %21 = vector.extract_strided_slice %0 {offsets = [0, 3], sizes = [128, 1], strides = [1, 1]} : vector<128x8xi32> to vector<128x1xi32>
    %22 = vector.broadcast %21 : vector<128x1xi32> to vector<128x24xi32>
    %23 = arith.cmpi eq, %22, %2 : vector<128x24xi32>
    %24 = arith.extui %23 : vector<128x24xi1> to vector<128x24xi32>
    %25 = arith.sitofp %24 : vector<128x24xi32> to vector<128x24xf32>
    %cst_5 = arith.constant dense<0.000000e+00> : vector<128x16xf32>
    %26 = tpu.matmul %25, %1, %cst_5 {dimension_numbers = #tpu.dot_dimension_numbers<[1], [0], [0], [1], [0, 0, 1, 1], [], []>} : vector<128x24xf32>, vector<24x16xf32>, vector<128x16xf32> -> vector<128x16xf32>
    %27 = vector.extract_strided_slice %0 {offsets = [0, 4], sizes = [128, 1], strides = [1, 1]} : vector<128x8xi32> to vector<128x1xi32>
    %28 = vector.broadcast %27 : vector<128x1xi32> to vector<128x24xi32>
    %29 = arith.cmpi eq, %28, %2 : vector<128x24xi32>
    %30 = arith.extui %29 : vector<128x24xi1> to vector<128x24xi32>
    %31 = arith.sitofp %30 : vector<128x24xi32> to vector<128x24xf32>
    %cst_6 = arith.constant dense<0.000000e+00> : vector<128x16xf32>
    %32 = tpu.matmul %31, %1, %cst_6 {dimension_numbers = #tpu.dot_dimension_numbers<[1], [0], [0], [1], [0, 0, 1, 1], [], []>} : vector<128x24xf32>, vector<24x16xf32>, vector<128x16xf32> -> vector<128x16xf32>
    %33 = vector.extract_strided_slice %0 {offsets = [0, 5], sizes = [128, 1], strides = [1, 1]} : vector<128x8xi32> to vector<128x1xi32>
    %34 = vector.broadcast %33 : vector<128x1xi32> to vector<128x24xi32>
    %35 = arith.cmpi eq, %34, %2 : vector<128x24xi32>
    %36 = arith.extui %35 : vector<128x24xi1> to vector<128x24xi32>
    %37 = arith.sitofp %36 : vector<128x24xi32> to vector<128x24xf32>
    %cst_7 = arith.constant dense<0.000000e+00> : vector<128x16xf32>
    %38 = tpu.matmul %37, %1, %cst_7 {dimension_numbers = #tpu.dot_dimension_numbers<[1], [0], [0], [1], [0, 0, 1, 1], [], []>} : vector<128x24xf32>, vector<24x16xf32>, vector<128x16xf32> -> vector<128x16xf32>
    %39 = vector.extract_strided_slice %0 {offsets = [0, 6], sizes = [128, 1], strides = [1, 1]} : vector<128x8xi32> to vector<128x1xi32>
    %40 = vector.broadcast %39 : vector<128x1xi32> to vector<128x24xi32>
    %41 = arith.cmpi eq, %40, %2 : vector<128x24xi32>
    %42 = arith.extui %41 : vector<128x24xi1> to vector<128x24xi32>
    %43 = arith.sitofp %42 : vector<128x24xi32> to vector<128x24xf32>
    %cst_8 = arith.constant dense<0.000000e+00> : vector<128x16xf32>
    %44 = tpu.matmul %43, %1, %cst_8 {dimension_numbers = #tpu.dot_dimension_numbers<[1], [0], [0], [1], [0, 0, 1, 1], [], []>} : vector<128x24xf32>, vector<24x16xf32>, vector<128x16xf32> -> vector<128x16xf32>
    %45 = vector.extract_strided_slice %0 {offsets = [0, 7], sizes = [128, 1], strides = [1, 1]} : vector<128x8xi32> to vector<128x1xi32>
    %46 = vector.broadcast %45 : vector<128x1xi32> to vector<128x24xi32>
    %47 = arith.cmpi eq, %46, %2 : vector<128x24xi32>
    %48 = arith.extui %47 : vector<128x24xi1> to vector<128x24xi32>
    %49 = arith.sitofp %48 : vector<128x24xi32> to vector<128x24xf32>
    %cst_9 = arith.constant dense<0.000000e+00> : vector<128x16xf32>
    %50 = tpu.matmul %49, %1, %cst_9 {dimension_numbers = #tpu.dot_dimension_numbers<[1], [0], [0], [1], [0, 0, 1, 1], [], []>} : vector<128x24xf32>, vector<24x16xf32>, vector<128x16xf32> -> vector<128x16xf32>
    %51 = tpu.concatenate %8, %14, %20, %26, %32, %38, %44, %50 in 1 : vector<128x16xf32>, vector<128x16xf32>, vector<128x16xf32>, vector<128x16xf32>, vector<128x16xf32>, vector<128x16xf32>, vector<128x16xf32>, vector<128x16xf32> -> vector<128x128xf32>
    %c0_10 = arith.constant 0 : index
    %c0_11 = arith.constant 0 : index
    %52 = vector.load %arg11[%c0_10, %c0_11] : memref<128x128xf32, #tpu.memory_space<vmem>>, vector<128x128xf32>
    tpu.vector_store %arg11[%c0_10, %c0_11], %51 {strides = array<i32>} : memref<128x128xf32, #tpu.memory_space<vmem>>, vector<128x128xf32>,
    %53 = arith.truncf %51 : vector<128x128xf32> to vector<128x128xbf16>
    %c0_12 = arith.constant 0 : index
    %c0_13 = arith.constant 0 : index
    %54 = vector.load %arg3[%c0_12, %c0_13] : memref<128x64xbf16, #tpu.memory_space<vmem>>, vector<128x64xbf16>
    %cst_14 = arith.constant dense<0.000000e+00> : vector<128x64xf32>
    %55 = tpu.matmul %53, %54, %cst_14 {dimension_numbers = #tpu.dot_dimension_numbers<[1], [0], [0], [1], [0, 0, 1, 1], [], []>} : vector<128x128xbf16>, vector<128x64xbf16>, vector<128x64xf32> -> vector<128x64xf32>
    %c0_15 = arith.constant 0 : index
    %c0_16 = arith.constant 0 : index
    %56 = vector.load %arg4[%c0_15, %c0_16] : memref<1x64xf32, #tpu.memory_space<vmem>>, vector<1x64xf32>
    %57 = vector.broadcast %56 : vector<1x64xf32> to vector<128x64xf32>
    %58 = arith.addf %55, %57 : vector<128x64xf32>
    %cst_17 = arith.constant 0.000000e+00 : f32
    %59 = vector.broadcast %cst_17 : f32 to vector<128x64xf32>
    %60 = arith.maximumf %58, %59 : vector<128x64xf32>
    %61 = arith.truncf %60 : vector<128x64xf32> to vector<128x64xbf16>
    %c0_18 = arith.constant 0 : index
    %c0_19 = arith.constant 0 : index
    %62 = vector.load %arg5[%c0_18, %c0_19] : memref<64x32xbf16, #tpu.memory_space<vmem>>, vector<64x32xbf16>
    %cst_20 = arith.constant dense<0.000000e+00> : vector<128x32xf32>
    %63 = tpu.matmul %61, %62, %cst_20 {dimension_numbers = #tpu.dot_dimension_numbers<[1], [0], [0], [1], [0, 0, 1, 1], [], []>} : vector<128x64xbf16>, vector<64x32xbf16>, vector<128x32xf32> -> vector<128x32xf32>
    %c0_21 = arith.constant 0 : index
    %c0_22 = arith.constant 0 : index
    %64 = vector.load %arg6[%c0_21, %c0_22] : memref<1x32xf32, #tpu.memory_space<vmem>>, vector<1x32xf32>
    %65 = vector.broadcast %64 : vector<1x32xf32> to vector<128x32xf32>
    %66 = arith.addf %63, %65 : vector<128x32xf32>
    %67 = arith.mulf %66, %66 : vector<128x32xf32>
    %cst_23 = arith.constant dense<0.000000e+00> : vector<128xf32>
    %68 = vector.multi_reduction <add>, %67, %cst_23 [1] : vector<128x32xf32> to vector<128xf32>
    %69 = vector.shape_cast %68 : vector<128xf32> to vector<128x1xf32>
    %cst_24 = arith.constant 1.000000e-24 : f32
    %70 = vector.broadcast %cst_24 : f32 to vector<128x1xf32>
    %71 = arith.maximumf %69, %70 : vector<128x1xf32>
    %72 = math.rsqrt %71 : vector<128x1xf32>
    %73 = vector.broadcast %72 : vector<128x1xf32> to vector<128x32xf32>
    %74 = arith.mulf %66, %73 : vector<128x32xf32>
    %75 = math.tanh %74 : vector<128x32xf32>
    %c0_25 = arith.constant 0 : index
    %c0_26 = arith.constant 0 : index
    %76 = vector.load %arg12[%c0_25, %c0_26] : memref<128x32xf32, #tpu.memory_space<vmem>>, vector<128x32xf32>
    tpu.vector_store %arg12[%c0_25, %c0_26], %75 {strides = array<i32>} : memref<128x32xf32, #tpu.memory_space<vmem>>, vector<128x32xf32>,
    %77 = arith.truncf %75 : vector<128x32xf32> to vector<128x32xbf16>
    %c0_27 = arith.constant 0 : index
    %c0_28 = arith.constant 0 : index
    %78 = vector.load %arg7[%c0_27, %c0_28] : memref<32x64xbf16, #tpu.memory_space<vmem>>, vector<32x64xbf16>
    %cst_29 = arith.constant dense<0.000000e+00> : vector<128x64xf32>
    %79 = tpu.matmul %77, %78, %cst_29 {dimension_numbers = #tpu.dot_dimension_numbers<[1], [0], [0], [1], [0, 0, 1, 1], [], []>} : vector<128x32xbf16>, vector<32x64xbf16>, vector<128x64xf32> -> vector<128x64xf32>
    %c0_30 = arith.constant 0 : index
    %c0_31 = arith.constant 0 : index
    %80 = vector.load %arg8[%c0_30, %c0_31] : memref<1x64xf32, #tpu.memory_space<vmem>>, vector<1x64xf32>
    %81 = vector.broadcast %80 : vector<1x64xf32> to vector<128x64xf32>
    %82 = arith.addf %79, %81 : vector<128x64xf32>
    %cst_32 = arith.constant 0.000000e+00 : f32
    %83 = vector.broadcast %cst_32 : f32 to vector<128x64xf32>
    %84 = arith.maximumf %82, %83 : vector<128x64xf32>
    %85 = arith.truncf %84 : vector<128x64xf32> to vector<128x64xbf16>
    %c0_33 = arith.constant 0 : index
    %c0_34 = arith.constant 0 : index
    %86 = vector.load %arg9[%c0_33, %c0_34] : memref<64x128xbf16, #tpu.memory_space<vmem>>, vector<64x128xbf16>
    %cst_35 = arith.constant dense<0.000000e+00> : vector<128x128xf32>
    %87 = tpu.matmul %85, %86, %cst_35 {dimension_numbers = #tpu.dot_dimension_numbers<[1], [0], [0], [1], [0, 0, 1, 1], [], []>} : vector<128x64xbf16>, vector<64x128xbf16>, vector<128x128xf32> -> vector<128x128xf32>
    %c0_36 = arith.constant 0 : index
    %c0_37 = arith.constant 0 : index
    %88 = vector.load %arg10[%c0_36, %c0_37] : memref<1x128xf32, #tpu.memory_space<vmem>>, vector<1x128xf32>
    %89 = vector.broadcast %88 : vector<1x128xf32> to vector<128x128xf32>
    %90 = arith.addf %87, %89 : vector<128x128xf32>
    %c0_38 = arith.constant 0 : index
    %c0_39 = arith.constant 0 : index
    %91 = vector.load %arg13[%c0_38, %c0_39] : memref<128x128xf32, #tpu.memory_space<vmem>>, vector<128x128xf32>
    tpu.vector_store %arg13[%c0_38, %c0_39], %90 {strides = array<i32>} : memref<128x128xf32, #tpu.memory_space<vmem>>, vector<128x128xf32>,
    return
  }
  func.func @transform_0(%arg0: i32) -> (i32, i32) {
    %c0_i32 = arith.constant 0 : i32
    %c0_i32_0 = arith.constant 0 : i32
    return %arg0, %c0_i32 : i32, i32
  }
  func.func @transform_1(%arg0: i32) -> (i32, i32) {
    %c0_i32 = arith.constant 0 : i32
    %c0_i32_0 = arith.constant 0 : i32
    %c0_i32_1 = arith.constant 0 : i32
    return %c0_i32, %c0_i32_0 : i32, i32
  }
  func.func @transform_2(%arg0: i32) -> (i32, i32) {
    %c0_i32 = arith.constant 0 : i32
    %c0_i32_0 = arith.constant 0 : i32
    %c0_i32_1 = arith.constant 0 : i32
    return %c0_i32, %c0_i32_0 : i32, i32
  }
  func.func @transform_3(%arg0: i32) -> (i32, i32) {
    %c0_i32 = arith.constant 0 : i32
    %c0_i32_0 = arith.constant 0 : i32
    %c0_i32_1 = arith.constant 0 : i32
    return %c0_i32, %c0_i32_0 : i32, i32
  }
  func.func @transform_4(%arg0: i32) -> (i32, i32) {
    %c0_i32 = arith.constant 0 : i32
    %c0_i32_0 = arith.constant 0 : i32
    %c0_i32_1 = arith.constant 0 : i32
    return %c0_i32, %c0_i32_0 : i32, i32
  }
  func.func @transform_5(%arg0: i32) -> (i32, i32) {
    %c0_i32 = arith.constant 0 : i32
    %c0_i32_0 = arith.constant 0 : i32
    %c0_i32_1 = arith.constant 0 : i32
    return %c0_i32, %c0_i32_0 : i32, i32
  }
  func.func @transform_6(%arg0: i32) -> (i32, i32) {
    %c0_i32 = arith.constant 0 : i32
    %c0_i32_0 = arith.constant 0 : i32
    %c0_i32_1 = arith.constant 0 : i32
    return %c0_i32, %c0_i32_0 : i32, i32
  }
  func.func @transform_7(%arg0: i32) -> (i32, i32) {
    %c0_i32 = arith.constant 0 : i32
    %c0_i32_0 = arith.constant 0 : i32
    %c0_i32_1 = arith.constant 0 : i32
    return %c0_i32, %c0_i32_0 : i32, i32
  }
  func.func @transform_8(%arg0: i32) -> (i32, i32) {
    %c0_i32 = arith.constant 0 : i32
    %c0_i32_0 = arith.constant 0 : i32
    %c0_i32_1 = arith.constant 0 : i32
    return %c0_i32, %c0_i32_0 : i32, i32
  }
  func.func @transform_9(%arg0: i32) -> (i32, i32) {
    %c0_i32 = arith.constant 0 : i32
    %c0_i32_0 = arith.constant 0 : i32
    %c0_i32_1 = arith.constant 0 : i32
    return %c0_i32, %c0_i32_0 : i32, i32
  }
  func.func @transform_10(%arg0: i32) -> (i32, i32) {
    %c0_i32 = arith.constant 0 : i32
    %c0_i32_0 = arith.constant 0 : i32
    return %arg0, %c0_i32 : i32, i32
  }
  func.func @transform_11(%arg0: i32) -> (i32, i32) {
    %c0_i32 = arith.constant 0 : i32
    %c0_i32_0 = arith.constant 0 : i32
    return %arg0, %c0_i32 : i32, i32
  }
  func.func @transform_12(%arg0: i32) -> (i32, i32) {
    %c0_i32 = arith.constant 0 : i32
    %c0_i32_0 = arith.constant 0 : i32
    return %arg0, %c0_i32 : i32, i32
  }
}

</mosaic_0001>

<llo_original>
// kernel: string_autoencoder_forward.1
$region0: #{string_autoencoder_forward.1}
  #allocation0 [shape = 'u32[]', space=smem, size = 0x4, offset = 0x4, fixed_abs, tag = 'smem constant byte address 0x4 - core index']
  #allocation1 [shape = 'u32[72,128]{1,0:T(1,128)}', space=vmem, size = 0x9000, scoped, tag = 'internal scratch']
  %s0 = inlined_call_operand.vmem [shape: s32[256,8], index: 0, kind: input, shape index: {}]
  %s1 = inlined_call_operand.vmem [shape: f32[24,16], index: 1, kind: input, shape index: {}]
  %s2 = inlined_call_operand.vmem [shape: bf16[128,64], index: 2, kind: input, shape index: {}]
  %s3 = inlined_call_operand.vmem [shape: f32[1,64], index: 3, kind: input, shape index: {}]
  %s4 = inlined_call_operand.vmem [shape: bf16[64,32], index: 4, kind: input, shape index: {}]
  %s5 = inlined_call_operand.vmem [shape: f32[1,32], index: 5, kind: input, shape index: {}]
  %s6 = inlined_call_operand.vmem [shape: bf16[32,64], index: 6, kind: input, shape index: {}]
  %s7 = inlined_call_operand.vmem [shape: f32[1,64], index: 7, kind: input, shape index: {}]
  %s8 = inlined_call_operand.vmem [shape: bf16[64,128], index: 8, kind: input, shape index: {}]
  %s9 = inlined_call_operand.vmem [shape: f32[1,128], index: 9, kind: input, shape index: {}]
  %s10 = inlined_call_operand.hbm [shape: f32[256,128], index: 10, kind: output, shape index: {0}]
  %s11 = inlined_call_operand.vmem [shape: f32[256,32], index: 11, kind: output, shape index: {1}]
  %s12 = inlined_call_operand.hbm [shape: f32[256,128], index: 12, kind: output, shape index: {2}]
  %13 = xla_tuple %s10, %s11, %s12
  %s14 = sld [smem:[#allocation0]]
  $region89: #{string_autoencoder_forward.1} parent=0
    _
  %s16 = ssub.s32 1, %s14
  %s17 = scalar_select 0, %s16, %s14
  $region1: #{string_autoencoder_forward.1} parent=0
    #allocation2 [shape = 'u8[131072]{0}', space=vmem, size = 0x20000, scoped, tag = 'output window, operand 0']
    #allocation3 [shape = 's32[2]{0}', space=sflag, size = 0x8, scoped, tag = 'scoped memory for string_autoencoder_forward.1']
    #allocation4 [shape = 'u8[131072]{0}', space=vmem, size = 0x20000, scoped, tag = 'output window, operand 2']
    #allocation5 [shape = 's32[2]{0}', space=sflag, size = 0x8, scoped, tag = 'scoped memory for string_autoencoder_forward.1']
    %18 = vsyncpa [#allocation3], 0
    %s19 = scalar_lea.sflag [#allocation3], 1
    %20 = vsyncpa %s19, 0
    %21 = vsyncpa [#allocation5], 0
    %s22 = scalar_lea.sflag [#allocation5], 1
    %23 = vsyncpa %s22, 0
    loop: start=0, step=1, limit=4
    $region2: #{string_autoencoder_forward.1} parent=1 // loop_pre_header
      _
    $region3: #{string_autoencoder_forward.1} parent=1 // loop_header
      %s25 = sphi 0, %s29
      %p26 = scmp.ge.s32.totalorder %s25, 4
      %s35 = sphi 0, %s37
      %s38 = sphi 0, %s35
      %s39 = sphi 0, %s38
      %s55 = sphi 0, %s39
      %s59 = sphi 0, %s59
      %s61 = sphi 0, %s59
      %s62 = sphi 0, %s61
      %s76 = sphi 0, %s62
      %s80 = sphi 0, %s80
      %s82 = sphi 0, %s80
      %s83 = sphi 0, %s82
      %s97 = sphi 0, %s83
      %s101 = sphi 0, %s101
      %s103 = sphi 0, %s101
      %s104 = sphi 0, %s103
      %s118 = sphi 0, %s104
      %s122 = sphi 0, %s122
      %s124 = sphi 0, %s122
      %s125 = sphi 0, %s124
      %s139 = sphi 0, %s125
      %s143 = sphi 0, %s143
      %s145 = sphi 0, %s143
      %s146 = sphi 0, %s145
      %s160 = sphi 0, %s146
      %s164 = sphi 0, %s164
      %s166 = sphi 0, %s164
      %s167 = sphi 0, %s166
      %s181 = sphi 0, %s167
      %s185 = sphi 0, %s185
      %s187 = sphi 0, %s185
      %s188 = sphi 0, %s187
      %s202 = sphi 0, %s188
      %s206 = sphi 0, %s206
      %s208 = sphi 0, %s206
      %s209 = sphi 0, %s208
      %s223 = sphi 0, %s209
      %s227 = sphi 0, %s227
      %s229 = sphi 0, %s227
      %s230 = sphi 0, %s229
      %s244 = sphi 0, %s230
      %s250 = sphi 0, %s252
      %s253 = sphi 0, %s250
      %s254 = sphi 0, %s253
      %s270 = sphi 0, %s254
      %s276 = sphi 0, %s278
      %s279 = sphi 0, %s276
      %s280 = sphi 0, %s279
      %s296 = sphi 0, %s280
      %s302 = sphi 0, %s304
      %s305 = sphi 0, %s302
      %s306 = sphi 0, %s305
      %s322 = sphi 0, %s306
    $region4: #{string_autoencoder_forward.1} parent=1 // loop_header_branch
      %28 = sbr.rel (%p26) target = $region8
    $region5: #{string_autoencoder_forward.1} parent=1 // loop_body
      %s30 = ssub.s32 %s25, 1
      %s31 = ssub.s32 %s25, 2
      %s32 = sadd.s32 %s25, 1
      %s33 = ssub.s32 %s25, %s32
      %p34 = scmp.eq.s32.totalorder %s33, 0
      %s36 = sadd.s32 %s35, 1
      %s37 = scalar_select %p34, %s35, %s36
      %p40 = pneg %p34
      %p41 = scmp.eq.s32.totalorder %s25, 1
      %p42 = por %p40, %p41
      %p43 = scmp.ne.s32.totalorder %s35, %s38
      %p44 = scmp.eq.s32.totalorder %s25, 0
      %p45 = por %p43, %p44
      %p46 = scmp.ne.s32.totalorder %s35, %s38
      %p47 = scmp.eq.s32.totalorder %s30, 1
      %p48 = por %p46, %p47
      %p49 = scmp.ne.s32.totalorder %s38, %s39
      %p50 = scmp.eq.s32.totalorder %s30, 0
      %p51 = por %p49, %p50
      %p52 = scmp.ne.s32.totalorder %s38, %s39
      %p53 = scmp.eq.s32.totalorder %s31, 1
      %p54 = por %p52, %p53
      %p56 = scmp.ne.s32.totalorder %s39, %s55
      %p57 = scmp.eq.s32.totalorder %s31, 0
      %p58 = por %p56, %p57
      %s60 = sadd.s32 %s59, 1
      %p63 = scmp.eq.s32.totalorder %s25, 1
      %p64 = scmp.ne.s32.totalorder %s59, %s61
      %p65 = scmp.eq.s32.totalorder %s25, 0
      %p66 = por %p64, %p65
      %p67 = scmp.ne.s32.totalorder %s59, %s61
      %p68 = scmp.eq.s32.totalorder %s30, 1
      %p69 = por %p67, %p68
      %p70 = scmp.ne.s32.totalorder %s61, %s62
      %p71 = scmp.eq.s32.totalorder %s30, 0
      %p72 = por %p70, %p71
      %p73 = scmp.ne.s32.totalorder %s61, %s62
      %p74 = scmp.eq.s32.totalorder %s31, 1
      %p75 = por %p73, %p74
      %p77 = scmp.ne.s32.totalorder %s62, %s76
      %p78 = scmp.eq.s32.totalorder %s31, 0
      %p79 = por %p77, %p78
      %s81 = sadd.s32 %s80, 1
      %p84 = scmp.eq.s32.totalorder %s25, 1
      %p85 = scmp.ne.s32.totalorder %s80, %s82
      %p86 = scmp.eq.s32.totalorder %s25, 0
      %p87 = por %p85, %p86
      %p88 = scmp.ne.s32.totalorder %s80, %s82
      %p89 = scmp.eq.s32.totalorder %s30, 1
      %p90 = por %p88, %p89
      %p91 = scmp.ne.s32.totalorder %s82, %s83
      %p92 = scmp.eq.s32.totalorder %s30, 0
      %p93 = por %p91, %p92
      %p94 = scmp.ne.s32.totalorder %s82, %s83
      %p95 = scmp.eq.s32.totalorder %s31, 1
      %p96 = por %p94, %p95
      %p98 = scmp.ne.s32.totalorder %s83, %s97
      %p99 = scmp.eq.s32.totalorder %s31, 0
      %p100 = por %p98, %p99
      %s102 = sadd.s32 %s101, 1
      %p105 = scmp.eq.s32.totalorder %s25, 1
      %p106 = scmp.ne.s32.totalorder %s101, %s103
      %p107 = scmp.eq.s32.totalorder %s25, 0
      %p108 = por %p106, %p107
      %p109 = scmp.ne.s32.totalorder %s101, %s103
      %p110 = scmp.eq.s32.totalorder %s30, 1
      %p111 = por %p109, %p110
      %p112 = scmp.ne.s32.totalorder %s103, %s104
      %p113 = scmp.eq.s32.totalorder %s30, 0
      %p114 = por %p112, %p113
      %p115 = scmp.ne.s32.totalorder %s103, %s104
      %p116 = scmp.eq.s32.totalorder %s31, 1
      %p117 = por %p115, %p116
      %p119 = scmp.ne.s32.totalorder %s104, %s118
      %p120 = scmp.eq.s32.totalorder %s31, 0
      %p121 = por %p119, %p120
      %s123 = sadd.s32 %s122, 1
      %p126 = scmp.eq.s32.totalorder %s25, 1
      %p127 = scmp.ne.s32.totalorder %s122, %s124
      %p128 = scmp.eq.s32.totalorder %s25, 0
      %p129 = por %p127, %p128
      %p130 = scmp.ne.s32.totalorder %s122, %s124
      %p131 = scmp.eq.s32.totalorder %s30, 1
      %p132 = por %p130, %p131
      %p133 = scmp.ne.s32.totalorder %s124, %s125
      %p134 = scmp.eq.s32.totalorder %s30, 0
      %p135 = por %p133, %p134
      %p136 = scmp.ne.s32.totalorder %s124, %s125
      %p137 = scmp.eq.s32.totalorder %s31, 1
      %p138 = por %p136, %p137
      %p140 = scmp.ne.s32.totalorder %s125, %s139
      %p141 = scmp.eq.s32.totalorder %s31, 0
      %p142 = por %p140, %p141
      %s144 = sadd.s32 %s143, 1
      %p147 = scmp.eq.s32.totalorder %s25, 1
      %p148 = scmp.ne.s32.totalorder %s143, %s145
      %p149 = scmp.eq.s32.totalorder %s25, 0
      %p150 = por %p148, %p149
      %p151 = scmp.ne.s32.totalorder %s143, %s145
      %p152 = scmp.eq.s32.totalorder %s30, 1
      %p153 = por %p151, %p152
      %p154 = scmp.ne.s32.totalorder %s145, %s146
      %p155 = scmp.eq.s32.totalorder %s30, 0
      %p156 = por %p154, %p155
      %p157 = scmp.ne.s32.totalorder %s145, %s146
      %p158 = scmp.eq.s32.totalorder %s31, 1
      %p159 = por %p157, %p158
      %p161 = scmp.ne.s32.totalorder %s146, %s160
      %p162 = scmp.eq.s32.totalorder %s31, 0
      %p163 = por %p161, %p162
      %s165 = sadd.s32 %s164, 1
      %p168 = scmp.eq.s32.totalorder %s25, 1
      %p169 = scmp.ne.s32.totalorder %s164, %s166
      %p170 = scmp.eq.s32.totalorder %s25, 0
      %p171 = por %p169, %p170
      %p172 = scmp.ne.s32.totalorder %s164, %s166
      %p173 = scmp.eq.s32.totalorder %s30, 1
      %p174 = por %p172, %p173
      %p175 = scmp.ne.s32.totalorder %s166, %s167
      %p176 = scmp.eq.s32.totalorder %s30, 0
      %p177 = por %p175, %p176
      %p178 = scmp.ne.s32.totalorder %s166, %s167
      %p179 = scmp.eq.s32.totalorder %s31, 1
      %p180 = por %p178, %p179
      %p182 = scmp.ne.s32.totalorder %s167, %s181
      %p183 = scmp.eq.s32.totalorder %s31, 0
      %p184 = por %p182, %p183
      %s186 = sadd.s32 %s185, 1
      %p189 = scmp.eq.s32.totalorder %s25, 1
      %p190 = scmp.ne.s32.totalorder %s185, %s187
      %p191 = scmp.eq.s32.totalorder %s25, 0
      %p192 = por %p190, %p191
      %p193 = scmp.ne.s32.totalorder %s185, %s187
      %p194 = scmp.eq.s32.totalorder %s30, 1
      %p195 = por %p193, %p194
      %p196 = scmp.ne.s32.totalorder %s187, %s188
      %p197 = scmp.eq.s32.totalorder %s30, 0
      %p198 = por %p196, %p197
      %p199 = scmp.ne.s32.totalorder %s187, %s188
      %p200 = scmp.eq.s32.totalorder %s31, 1
      %p201 = por %p199, %p200
      %p203 = scmp.ne.s32.totalorder %s188, %s202
      %p204 = scmp.eq.s32.totalorder %s31, 0
      %p205 = por %p203, %p204
      %s207 = sadd.s32 %s206, 1
      %p210 = scmp.eq.s32.totalorder %s25, 1
      %p211 = scmp.ne.s32.totalorder %s206, %s208
      %p212 = scmp.eq.s32.totalorder %s25, 0
      %p213 = por %p211, %p212
      %p214 = scmp.ne.s32.totalorder %s206, %s208
      %p215 = scmp.eq.s32.totalorder %s30, 1
      %p216 = por %p214, %p215
      %p217 = scmp.ne.s32.totalorder %s208, %s209
      %p218 = scmp.eq.s32.totalorder %s30, 0
      %p219 = por %p217, %p218
      %p220 = scmp.ne.s32.totalorder %s208, %s209
      %p221 = scmp.eq.s32.totalorder %s31, 1
      %p222 = por %p220, %p221
      %p224 = scmp.ne.s32.totalorder %s209, %s223
      %p225 = scmp.eq.s32.totalorder %s31, 0
      %p226 = por %p224, %p225
      %s228 = sadd.s32 %s227, 1
      %p231 = scmp.eq.s32.totalorder %s25, 1
      %p232 = scmp.ne.s32.totalorder %s227, %s229
      %p233 = scmp.eq.s32.totalorder %s25, 0
      %p234 = por %p232, %p233
      %p235 = scmp.ne.s32.totalorder %s227, %s229
      %p236 = scmp.eq.s32.totalorder %s30, 1
      %p237 = por %p235, %p236
      %p238 = scmp.ne.s32.totalorder %s229, %s230
      %p239 = scmp.eq.s32.totalorder %s30, 0
      %p240 = por %p238, %p239
      %p241 = scmp.ne.s32.totalorder %s229, %s230
      %p242 = scmp.eq.s32.totalorder %s31, 1
      %p243 = por %p241, %p242
      %p245 = scmp.ne.s32.totalorder %s230, %s244
      %p246 = scmp.eq.s32.totalorder %s31, 0
      %p247 = por %p245, %p246
      %s248 = ssub.s32 %s25, %s32
      %p249 = scmp.eq.s32.totalorder %s248, 0
      %s251 = sadd.s32 %s250, 1
      %s252 = scalar_select %p249, %s250, %s251
      %p255 = pneg %p249
      %p256 = scmp.eq.s32.totalorder %s25, 1
      %p257 = por %p255, %p256
      %p258 = scmp.ne.s32.totalorder %s250, %s253
      %p259 = scmp.eq.s32.totalorder %s25, 0
      %p260 = por %p258, %p259
      %p261 = scmp.ne.s32.totalorder %s250, %s253
      %p262 = scmp.eq.s32.totalorder %s30, 1
      %p263 = por %p261, %p262
      %p264 = scmp.ne.s32.totalorder %s253, %s254
      %p265 = scmp.eq.s32.totalorder %s30, 0
      %p266 = por %p264, %p265
      %p267 = scmp.ne.s32.totalorder %s253, %s254
      %p268 = scmp.eq.s32.totalorder %s31, 1
      %p269 = por %p267, %p268
      %p271 = scmp.ne.s32.totalorder %s254, %s270
      %p272 = scmp.eq.s32.totalorder %s31, 0
      %p273 = por %p271, %p272
      %s274 = ssub.s32 %s25, %s32
      %p275 = scmp.eq.s32.totalorder %s274, 0
      %s277 = sadd.s32 %s276, 1
      %s278 = scalar_select %p275, %s276, %s277
      %p281 = pneg %p275
      %p282 = scmp.eq.s32.totalorder %s25, 1
      %p283 = por %p281, %p282
      %p284 = scmp.ne.s32.totalorder %s276, %s279
      %p285 = scmp.eq.s32.totalorder %s25, 0
      %p286 = por %p284, %p285
      %p287 = scmp.ne.s32.totalorder %s276, %s279
      %p288 = scmp.eq.s32.totalorder %s30, 1
      %p289 = por %p287, %p288
      %p290 = scmp.ne.s32.totalorder %s279, %s280
      %p291 = scmp.eq.s32.totalorder %s30, 0
      %p292 = por %p290, %p291
      %p293 = scmp.ne.s32.totalorder %s279, %s280
      %p294 = scmp.eq.s32.totalorder %s31, 1
      %p295 = por %p293, %p294
      %p297 = scmp.ne.s32.totalorder %s280, %s296
      %p298 = scmp.eq.s32.totalorder %s31, 0
      %p299 = por %p297, %p298
      %s300 = ssub.s32 %s25, %s32
      %p301 = scmp.eq.s32.totalorder %s300, 0
      %s303 = sadd.s32 %s302, 1
      %s304 = scalar_select %p301, %s302, %s303
      %p307 = pneg %p301
      %p308 = scmp.eq.s32.totalorder %s25, 1
      %p309 = por %p307, %p308
      %p310 = scmp.ne.s32.totalorder %s302, %s305
      %p311 = scmp.eq.s32.totalorder %s25, 0
      %p312 = por %p310, %p311
      %p313 = scmp.ne.s32.totalorder %s302, %s305
      %p314 = scmp.eq.s32.totalorder %s30, 1
      %p315 = por %p313, %p314
      %p316 = scmp.ne.s32.totalorder %s305, %s306
      %p317 = scmp.eq.s32.totalorder %s30, 0
      %p318 = por %p316, %p317
      %p319 = scmp.ne.s32.totalorder %s305, %s306
      %p320 = scmp.eq.s32.totalorder %s31, 1
      %p321 = por %p319, %p320
      %p323 = scmp.ne.s32.totalorder %s306, %s322
      %p324 = scmp.eq.s32.totalorder %s31, 0
      %p325 = por %p323, %p324
      %p326 = scmp.le.s32.totalorder 1, %s25
      %p327 = scmp.lt.s32.totalorder %s25, 3
      %p328 = pnand %p326, %p327
      %p329 = pneg %p328
      // Predicated region
      $region9: #{string_autoencoder_forward.1} parent=5 // pred_check
        _
      $region10: #{string_autoencoder_forward.1} parent=5 // pred_check_branch
        %331 = sbr.rel (%p328) target = $region12
      $region11: #{string_autoencoder_forward.1} parent=5 // pred_region
        %s332 = ssub.s32 %s25, 1
        // Predicated region
        $region13: #{string_autoencoder_forward.1} parent=11 // pred_check
          %p333 = pneg %p72
        $region14: #{string_autoencoder_forward.1} parent=11 // pred_check_branch
          %335 = sbr.rel (%p333) target = $region16
        $region15: #{string_autoencoder_forward.1} parent=11 // pred_region
          _
        $region16: #{string_autoencoder_forward.1} parent=11 // pred_fallthru
          _
        // Predicated region
        $region17: #{string_autoencoder_forward.1} parent=11 // pred_check
          %p336 = pneg %p93
        $region18: #{string_autoencoder_forward.1} parent=11 // pred_check_branch
          %338 = sbr.rel (%p336) target = $region20
        $region19: #{string_autoencoder_forward.1} parent=11 // pred_region
          _
        $region20: #{string_autoencoder_forward.1} parent=11 // pred_fallthru
          _
        // Predicated region
        $region21: #{string_autoencoder_forward.1} parent=11 // pred_check
          %p339 = pneg %p114
        $region22: #{string_autoencoder_forward.1} parent=11 // pred_check_branch
          %341 = sbr.rel (%p339) target = $region24
        $region23: #{string_autoencoder_forward.1} parent=11 // pred_region
          _
        $region24: #{string_autoencoder_forward.1} parent=11 // pred_fallthru
          _
        // Predicated region
        $region25: #{string_autoencoder_forward.1} parent=11 // pred_check
          %p342 = pneg %p135
        $region26: #{string_autoencoder_forward.1} parent=11 // pred_check_branch
          %344 = sbr.rel (%p342) target = $region28
        $region27: #{string_autoencoder_forward.1} parent=11 // pred_region
          _
        $region28: #{string_autoencoder_forward.1} parent=11 // pred_fallthru
          _
        // Predicated region
        $region29: #{string_autoencoder_forward.1} parent=11 // pred_check
          %p345 = pneg %p156
        $region30: #{string_autoencoder_forward.1} parent=11 // pred_check_branch
          %347 = sbr.rel (%p345) target = $region32
        $region31: #{string_autoencoder_forward.1} parent=11 // pred_region
          _
        $region32: #{string_autoencoder_forward.1} parent=11 // pred_fallthru
          _
        // Predicated region
        $region33: #{string_autoencoder_forward.1} parent=11 // pred_check
          %p348 = pneg %p177
        $region34: #{string_autoencoder_forward.1} parent=11 // pred_check_branch
          %350 = sbr.rel (%p348) target = $region36
        $region35: #{string_autoencoder_forward.1} parent=11 // pred_region
          _
        $region36: #{string_autoencoder_forward.1} parent=11 // pred_fallthru
          _
        // Predicated region
        $region37: #{string_autoencoder_forward.1} parent=11 // pred_check
          %p351 = pneg %p198
        $region38: #{string_autoencoder_forward.1} parent=11 // pred_check_branch
          %353 = sbr.rel (%p351) target = $region40
        $region39: #{string_autoencoder_forward.1} parent=11 // pred_region
          _
        $region40: #{string_autoencoder_forward.1} parent=11 // pred_fallthru
          _
        // Predicated region
        $region41: #{string_autoencoder_forward.1} parent=11 // pred_check
          %p354 = pneg %p219
        $region42: #{string_autoencoder_forward.1} parent=11 // pred_check_branch
          %356 = sbr.rel (%p354) target = $region44
        $region43: #{string_autoencoder_forward.1} parent=11 // pred_region
          _
        $region44: #{string_autoencoder_forward.1} parent=11 // pred_fallthru
          _
        // Predicated region
        $region45: #{string_autoencoder_forward.1} parent=11 // pred_check
          %p357 = pneg %p240
        $region46: #{string_autoencoder_forward.1} parent=11 // pred_check_branch
          %359 = sbr.rel (%p357) target = $region48
        $region47: #{string_autoencoder_forward.1} parent=11 // pred_region
          _
        $region48: #{string_autoencoder_forward.1} parent=11 // pred_fallthru
          _
      $region12: #{string_autoencoder_forward.1} parent=5 // pred_fallthru
        _
      %p360 = scmp.lt.s32.totalorder %s25, 2
      // Predicated region
      $region49: #{string_autoencoder_forward.1} parent=5 // pred_check
        %p361 = pneg %p360
      $region50: #{string_autoencoder_forward.1} parent=5 // pred_check_branch
        %363 = sbr.rel (%p361) target = $region52
      $region51: #{string_autoencoder_forward.1} parent=5 // pred_region
        // Predicated region
        $region53: #{string_autoencoder_forward.1} parent=51 // pred_check
          %p364 = pneg %p45
        $region54: #{string_autoencoder_forward.1} parent=51 // pred_check_branch
          %366 = sbr.rel (%p364) target = $region56
        $region55: #{string_autoencoder_forward.1} parent=51 // pred_region
          %s367 = smul.u32 16, %s25
          %p368 = scmp.lt.s32.totalorder %s367, 31
          %s369 = scalar_select %p368, %s367, 31
          %s370 = smul.addr %s369, 8
          %s371 = scalar_lea.vmem %s0, %s370
          %s372 = smul.u32 16, %s25
        $region56: #{string_autoencoder_forward.1} parent=51 // pred_fallthru
          _
      $region52: #{string_autoencoder_forward.1} parent=5 // pred_fallthru
        _
      %p373 = scmp.le.s32.totalorder 1, %s25
      %p374 = scmp.lt.s32.totalorder %s25, 3
      %p375 = pnand %p373, %p374
      %p376 = pneg %p375
      // Predicated region
      $region57: #{string_autoencoder_forward.1} parent=5 // pred_check
        _
      $region58: #{string_autoencoder_forward.1} parent=5 // pred_check_branch
        %378 = sbr.rel (%p375) target = $region60
      $region59: #{string_autoencoder_forward.1} parent=5 // pred_region
        %s379 = ssub.s32 %s25, 1
        %s380 = smul.u32 16, %s30
        %p381 = scmp.lt.s32.totalorder %s380, 31
        %s382 = scalar_select %p381, %s380, 31
        %s383 = smul.addr %s382, 8
        %s384 = scalar_lea.vmem %s0, %s383
        %p385 = pneg %p51
        %p386 = pneg %p48
        %p387 = pneg %p72
        %p388 = pneg %p69
        %p389 = pneg %p93
        %p390 = pneg %p90
        %p391 = pneg %p114
        %p392 = pneg %p111
        %p393 = pneg %p135
        %p394 = pneg %p132
        %p395 = pneg %p156
        %p396 = pneg %p153
        %p397 = pneg %p177
        %p398 = pneg %p174
        %p399 = pneg %p198
        %p400 = pneg %p195
        %p401 = pneg %p219
        %p402 = pneg %p216
        %p403 = pneg %p240
        %p404 = pneg %p237
        %p405 = pneg %p266
        %p406 = pneg %p263
        %s407 = sand.u32 %s253, 1
        %s408 = scalar_lea.sflag [#allocation3], %s407
        %s409 = sand.u32 %s253, 1
        %s410 = smul.addr %s409, 128
        %s411 = scalar_lea.vmem [#allocation2], %s410
        %p412 = pneg %p292
        %p413 = pneg %p289
        %s414 = smul.u32 16, %s30
        %p415 = scmp.lt.s32.totalorder %s414, 31
        %s416 = scalar_select %p415, %s414, 31
        %s417 = smul.addr %s416, 8
        %s418 = scalar_lea.vmem %s11, %s417
        %p419 = pneg %p318
        %p420 = pneg %p315
        %s421 = sand.u32 %s305, 1
        %s422 = scalar_lea.sflag [#allocation5], %s421
        %s423 = sand.u32 %s305, 1
        %s424 = smul.addr %s423, 128
        %s425 = scalar_lea.vmem [#allocation4], %s424
        %s426 = smul.u32 16, %s30
        %p427 = scmp.lt.s32.totalorder %s426, 31
        %s428 = scalar_select %p427, %s426, 31
        %s429 = smul.addr %s428, 8
        %s430 = scalar_lea.vmem %s0, %s429
        %s431 = smul.u32 16, %s30
        %s432 = smul.u32 16, %s30
        %s433 = smul.u32 16, %s30
        %p434 = scmp.lt.s32.totalorder %s433, 31
        %s435 = scalar_select %p434, %s433, 31
        %s436 = smul.addr %s435, 8
        %s437 = scalar_lea.vmem %s11, %s436
        %s438 = smul.u32 16, %s30
        %s439 = smul.u32 16, %s30
        %v441 = vld [vmem:[%s430] sm:$0xff]
        %v442 = vld [vmem:[%s430 + $0x8] sm:$0xff]
        %v443 = vld [vmem:[%s430 + $0x10] sm:$0xff]
        %v444 = vld [vmem:[%s430 + $0x18] sm:$0xff]
        %v445 = vld [vmem:[%s430 + $0x20] sm:$0xff]
        %v446 = vld [vmem:[%s430 + $0x28] sm:$0xff]
        %v447 = vld [vmem:[%s430 + $0x30] sm:$0xff]
        %v448 = vld [vmem:[%s430 + $0x38] sm:$0xff]
        %v449 = vld [vmem:[%s430 + $0x40] sm:$0xff]
        %v450 = vld [vmem:[%s430 + $0x48] sm:$0xff]
        %v451 = vld [vmem:[%s430 + $0x50] sm:$0xff]
        %v452 = vld [vmem:[%s430 + $0x58] sm:$0xff]
        %v453 = vld [vmem:[%s430 + $0x60] sm:$0xff]
        %v454 = vld [vmem:[%s430 + $0x68] sm:$0xff]
        %v455 = vld [vmem:[%s430 + $0x70] sm:$0xff]
        %v456 = vld [vmem:[%s430 + $0x78] sm:$0xff]
        %v457 = vld [vmem:[%s1] sm:$0xff]
        %v458 = vld [vmem:[%s1 + $0x8] sm:$0xff]
        %v459 = vld [vmem:[%s1 + $0x10] sm:$0xff]
        %v460 = vlaneseq
        %v461 = vand.u32 %v460, 127
        %462 = vset.pattern.permute.xlu0 0
        %463 = vperm.xlu0 %462, %v441
        %v464 = vpop.permute.xlu0 %463
        %465 = vset.pattern.permute.xlu0 0
        %466 = vperm.xlu0 %465, %v442
        %v467 = vpop.permute.xlu0 %466
        %468 = vset.pattern.permute.xlu0 0
        %469 = vperm.xlu0 %468, %v443
        %v470 = vpop.permute.xlu0 %469
        %471 = vset.pattern.permute.xlu0 0
        %472 = vperm.xlu0 %471, %v444
        %v473 = vpop.permute.xlu0 %472
        %474 = vset.pattern.permute.xlu0 0
        %475 = vperm.xlu0 %474, %v445
        %v476 = vpop.permute.xlu0 %475
        %477 = vset.pattern.permute.xlu0 0
        %478 = vperm.xlu0 %477, %v446
        %v479 = vpop.permute.xlu0 %478
        %480 = vset.pattern.permute.xlu0 0
        %481 = vperm.xlu0 %480, %v447
        %v482 = vpop.permute.xlu0 %481
        %483 = vset.pattern.permute.xlu0 0
        %484 = vperm.xlu0 %483, %v448
        %v485 = vpop.permute.xlu0 %484
        %486 = vset.pattern.permute.xlu0 0
        %487 = vperm.xlu0 %486, %v449
        %v488 = vpop.permute.xlu0 %487
        %489 = vset.pattern.permute.xlu0 0
        %490 = vperm.xlu0 %489, %v450
        %v491 = vpop.permute.xlu0 %490
        %492 = vset.pattern.permute.xlu0 0
        %493 = vperm.xlu0 %492, %v451
        %v494 = vpop.permute.xlu0 %493
        %495 = vset.pattern.permute.xlu0 0
        %496 = vperm.xlu0 %495, %v452
        %v497 = vpop.permute.xlu0 %496
        %498 = vset.pattern.permute.xlu0 0
        %499 = vperm.xlu0 %498, %v453
        %v500 = vpop.permute.xlu0 %499
        %501 = vset.pattern.permute.xlu0 0
        %502 = vperm.xlu0 %501, %v454
        %v503 = vpop.permute.xlu0 %502
        %504 = vset.pattern.permute.xlu0 0
        %505 = vperm.xlu0 %504, %v455
        %v506 = vpop.permute.xlu0 %505
        %507 = vset.pattern.permute.xlu0 0
        %508 = vperm.xlu0 %507, %v456
        %v509 = vpop.permute.xlu0 %508
        %vm510 = vcmp.eq.s32.totalorder %v464, %v461
        %vm511 = vcmp.eq.s32.totalorder %v467, %v461
        %vm512 = vcmp.eq.s32.totalorder %v470, %v461
        %vm513 = vcmp.eq.s32.totalorder %v473, %v461
        %vm514 = vcmp.eq.s32.totalorder %v476, %v461
        %vm515 = vcmp.eq.s32.totalorder %v479, %v461
        %vm516 = vcmp.eq.s32.totalorder %v482, %v461
        %vm517 = vcmp.eq.s32.totalorder %v485, %v461
        %vm518 = vcmp.eq.s32.totalorder %v488, %v461
        %vm519 = vcmp.eq.s32.totalorder %v491, %v461
        %vm520 = vcmp.eq.s32.totalorder %v494, %v461
        %vm521 = vcmp.eq.s32.totalorder %v497, %v461
        %vm522 = vcmp.eq.s32.totalorder %v500, %v461
        %vm523 = vcmp.eq.s32.totalorder %v503, %v461
        %vm524 = vcmp.eq.s32.totalorder %v506, %v461
        %vm525 = vcmp.eq.s32.totalorder %v509, %v461
        %v526 = vsel %vm510, 1, 0
        %v527 = vsel %vm511, 1, 0
        %v528 = vsel %vm512, 1, 0
        %v529 = vsel %vm513, 1, 0
        %v530 = vsel %vm514, 1, 0
        %v531 = vsel %vm515, 1, 0
        %v532 = vsel %vm516, 1, 0
        %v533 = vsel %vm517, 1, 0
        %v534 = vsel %vm518, 1, 0
        %v535 = vsel %vm519, 1, 0
        %v536 = vsel %vm520, 1, 0
        %v537 = vsel %vm521, 1, 0
        %v538 = vsel %vm522, 1, 0
        %v539 = vsel %vm523, 1, 0
        %v540 = vsel %vm524, 1, 0
        %v541 = vsel %vm525, 1, 0
        %v542 = vcvt.s32.f32 %v526
        %v543 = vcvt.s32.f32 %v527
        %v544 = vcvt.s32.f32 %v528
        %v545 = vcvt.s32.f32 %v529
        %v546 = vcvt.s32.f32 %v530
        %v547 = vcvt.s32.f32 %v531
        %v548 = vcvt.s32.f32 %v532
        %v549 = vcvt.s32.f32 %v533
        %v550 = vcvt.s32.f32 %v534
        %v551 = vcvt.s32.f32 %v535
        %v552 = vcvt.s32.f32 %v536
        %v553 = vcvt.s32.f32 %v537
        %v554 = vcvt.s32.f32 %v538
        %v555 = vcvt.s32.f32 %v539
        %v556 = vcvt.s32.f32 %v540
        %v557 = vcvt.s32.f32 %v541
        %vm558 = vcmask 195584
        %v560 = vsel %vm558, %v542, 0
        %v563 = vsel %vm558, %v543, 0
        %v566 = vsel %vm558, %v544, 0
        %v569 = vsel %vm558, %v545, 0
        %v572 = vsel %vm558, %v546, 0
        %v575 = vsel %vm558, %v547, 0
        %v578 = vsel %vm558, %v548, 0
        %v581 = vsel %vm558, %v549, 0
        %v584 = vsel %vm558, %v550, 0
        %v587 = vsel %vm558, %v551, 0
        %v590 = vsel %vm558, %v552, 0
        %v593 = vsel %vm558, %v553, 0
        %v596 = vsel %vm558, %v554, 0
        %v599 = vsel %vm558, %v555, 0
        %v602 = vsel %vm558, %v556, 0
        %v605 = vsel %vm558, %v557, 0
        %607 = vmatpush.msra.mxu0 0.0
        %608 = vmatpush.msra.mxu0 0.0
        %609 = vmatpush.msra.mxu0 0.0
        %610 = vmatpush.msra.mxu0 0.0
        %611 = vmatpush.msra.mxu0 0.0
        %612 = vmatpush.msra.mxu0 0.0
        %613 = vmatpush.msra.mxu0 0.0
        %614 = vmatpush.msra.mxu0 0.0
        %615 = vmatpush.msra.mxu0 0.0
        %616 = vmatpush.msra.mxu0 0.0
        %617 = vmatpush.msra.mxu0 0.0
        %618 = vmatpush.msra.mxu0 0.0
        %619 = vmatpush.msra.mxu0 0.0
        %620 = vmatpush.msra.mxu0 %v459
        %621 = vmatpush.msra.mxu0 %v458
        %622 = vmatpush.msra.mxu0 %v457
        %623 = vmatmul.f32.gmra.mxu0 %v560
        %v624 = vpop.f32.mrf.mxu0
        %v625 = vadd.f32 0.0, %v624
        %626 = vmatmul.f32.gmra.mxu0 %v563
        %v627 = vpop.f32.mrf.mxu0
        %v628 = vadd.f32 0.0, %v627
        %629 = vmatmul.f32.gmra.mxu0 %v566
        %v630 = vpop.f32.mrf.mxu0
        %v631 = vadd.f32 0.0, %v630
        %632 = vmatmul.f32.gmra.mxu0 %v569
        %v633 = vpop.f32.mrf.mxu0
        %v634 = vadd.f32 0.0, %v633
        %635 = vmatmul.f32.gmra.mxu0 %v572
        %v636 = vpop.f32.mrf.mxu0
        %v637 = vadd.f32 0.0, %v636
        %638 = vmatmul.f32.gmra.mxu0 %v575
        %v639 = vpop.f32.mrf.mxu0
        %v640 = vadd.f32 0.0, %v639
        %641 = vmatmul.f32.gmra.mxu0 %v578
        %v642 = vpop.f32.mrf.mxu0
        %v643 = vadd.f32 0.0, %v642
        %644 = vmatmul.f32.gmra.mxu0 %v581
        %v645 = vpop.f32.mrf.mxu0
        %v646 = vadd.f32 0.0, %v645
        %647 = vmatmul.f32.gmra.mxu0 %v584
        %v648 = vpop.f32.mrf.mxu0
        %v649 = vadd.f32 0.0, %v648
        %650 = vmatmul.f32.gmra.mxu0 %v587
        %v651 = vpop.f32.mrf.mxu0
        %v652 = vadd.f32 0.0, %v651
        %653 = vmatmul.f32.gmra.mxu0 %v590
        %v654 = vpop.f32.mrf.mxu0
        %v655 = vadd.f32 0.0, %v654
        %656 = vmatmul.f32.gmra.mxu0 %v593
        %v657 = vpop.f32.mrf.mxu0
        %v658 = vadd.f32 0.0, %v657
        %659 = vmatmul.f32.gmra.mxu0 %v596
        %v660 = vpop.f32.mrf.mxu0
        %v661 = vadd.f32 0.0, %v660
        %662 = vmatmul.f32.gmra.mxu0 %v599
        %v663 = vpop.f32.mrf.mxu0
        %v664 = vadd.f32 0.0, %v663
        %665 = vmatmul.f32.gmra.mxu0 %v602
        %v666 = vpop.f32.mrf.mxu0
        %v667 = vadd.f32 0.0, %v666
        %668 = vmatmul.f32.gmra.mxu0 %v605
        %v669 = vpop.f32.mrf.mxu0
        %v670 = vadd.f32 0.0, %v669
        %671 = vdwg.mxu0
        %672 = vset.pattern.permute.xlu0 1
        %673 = vperm.xlu0 %672, %v441
        %v674 = vpop.permute.xlu0 %673
        %675 = vset.pattern.permute.xlu0 1
        %676 = vperm.xlu0 %675, %v442
        %v677 = vpop.permute.xlu0 %676
        %678 = vset.pattern.permute.xlu0 1
        %679 = vperm.xlu0 %678, %v443
        %v680 = vpop.permute.xlu0 %679
        %681 = vset.pattern.permute.xlu0 1
        %682 = vperm.xlu0 %681, %v444
        %v683 = vpop.permute.xlu0 %682
        %684 = vset.pattern.permute.xlu0 1
        %685 = vperm.xlu0 %684, %v445
        %v686 = vpop.permute.xlu0 %685
        %687 = vset.pattern.permute.xlu0 1
        %688 = vperm.xlu0 %687, %v446
        %v689 = vpop.permute.xlu0 %688
        %690 = vset.pattern.permute.xlu0 1
        %691 = vperm.xlu0 %690, %v447
        %v692 = vpop.permute.xlu0 %691
        %693 = vset.pattern.permute.xlu0 1
        %694 = vperm.xlu0 %693, %v448
        %v695 = vpop.permute.xlu0 %694
        %696 = vset.pattern.permute.xlu0 1
        %697 = vperm.xlu0 %696, %v449
        %v698 = vpop.permute.xlu0 %697
        %699 = vset.pattern.permute.xlu0 1
        %700 = vperm.xlu0 %699, %v450
        %v701 = vpop.permute.xlu0 %700
        %702 = vset.pattern.permute.xlu0 1
        %703 = vperm.xlu0 %702, %v451
        %v704 = vpop.permute.xlu0 %703
        %705 = vset.pattern.permute.xlu0 1
        %706 = vperm.xlu0 %705, %v452
        %v707 = vpop.permute.xlu0 %706
        %708 = vset.pattern.permute.xlu0 1
        %709 = vperm.xlu0 %708, %v453
        %v710 = vpop.permute.xlu0 %709
        %711 = vset.pattern.permute.xlu0 1
        %712 = vperm.xlu0 %711, %v454
        %v713 = vpop.permute.xlu0 %712
        %714 = vset.pattern.permute.xlu0 1
        %715 = vperm.xlu0 %714, %v455
        %v716 = vpop.permute.xlu0 %715
        %717 = vset.pattern.permute.xlu0 1
        %718 = vperm.xlu0 %717, %v456
        %v719 = vpop.permute.xlu0 %718
        %vm720 = vcmp.eq.s32.totalorder %v674, %v461
        %vm721 = vcmp.eq.s32.totalorder %v677, %v461
        %vm722 = vcmp.eq.s32.totalorder %v680, %v461
        %vm723 = vcmp.eq.s32.totalorder %v683, %v461
        %vm724 = vcmp.eq.s32.totalorder %v686, %v461
        %vm725 = vcmp.eq.s32.totalorder %v689, %v461
        %vm726 = vcmp.eq.s32.totalorder %v692, %v461
        %vm727 = vcmp.eq.s32.totalorder %v695, %v461
        %vm728 = vcmp.eq.s32.totalorder %v698, %v461
        %vm729 = vcmp.eq.s32.totalorder %v701, %v461
        %vm730 = vcmp.eq.s32.totalorder %v704, %v461
        %vm731 = vcmp.eq.s32.totalorder %v707, %v461
        %vm732 = vcmp.eq.s32.totalorder %v710, %v461
        %vm733 = vcmp.eq.s32.totalorder %v713, %v461
        %vm734 = vcmp.eq.s32.totalorder %v716, %v461
        %vm735 = vcmp.eq.s32.totalorder %v719, %v461
        %v736 = vsel %vm720, 1, 0
        %v737 = vsel %vm721, 1, 0
        %v738 = vsel %vm722, 1, 0
        %v739 = vsel %vm723, 1, 0
        %v740 = vsel %vm724, 1, 0
        %v741 = vsel %vm725, 1, 0
        %v742 = vsel %vm726, 1, 0
        %v743 = vsel %vm727, 1, 0
        %v744 = vsel %vm728, 1, 0
        %v745 = vsel %vm729, 1, 0
        %v746 = vsel %vm730, 1, 0
        %v747 = vsel %vm731, 1, 0
        %v748 = vsel %vm732, 1, 0
        %v749 = vsel %vm733, 1, 0
        %v750 = vsel %vm734, 1, 0
        %v751 = vsel %vm735, 1, 0
        %v752 = vcvt.s32.f32 %v736
        %v753 = vcvt.s32.f32 %v737
        %v754 = vcvt.s32.f32 %v738
        %v755 = vcvt.s32.f32 %v739
        %v756 = vcvt.s32.f32 %v740
        %v757 = vcvt.s32.f32 %v741
        %v758 = vcvt.s32.f32 %v742
        %v759 = vcvt.s32.f32 %v743
        %v760 = vcvt.s32.f32 %v744
        %v761 = vcvt.s32.f32 %v745
        %v762 = vcvt.s32.f32 %v746
        %v763 = vcvt.s32.f32 %v747
        %v764 = vcvt.s32.f32 %v748
        %v765 = vcvt.s32.f32 %v749
        %v766 = vcvt.s32.f32 %v750
        %v767 = vcvt.s32.f32 %v751
        %v769 = vsel %vm558, %v752, 0
        %v772 = vsel %vm558, %v753, 0
        %v775 = vsel %vm558, %v754, 0
        %v778 = vsel %vm558, %v755, 0
        %v781 = vsel %vm558, %v756, 0
        %v784 = vsel %vm558, %v757, 0
        %v787 = vsel %vm558, %v758, 0
        %v790 = vsel %vm558, %v759, 0
        %v793 = vsel %vm558, %v760, 0
        %v796 = vsel %vm558, %v761, 0
        %v799 = vsel %vm558, %v762, 0
        %v802 = vsel %vm558, %v763, 0
        %v805 = vsel %vm558, %v764, 0
        %v808 = vsel %vm558, %v765, 0
        %v811 = vsel %vm558, %v766, 0
        %v814 = vsel %vm558, %v767, 0
        %816 = vmatpush.msra.mxu0 0.0
        %817 = vmatpush.msra.mxu0 0.0
        %818 = vmatpush.msra.mxu0 0.0
        %819 = vmatpush.msra.mxu0 0.0
        %820 = vmatpush.msra.mxu0 0.0
        %821 = vmatpush.msra.mxu0 0.0
        %822 = vmatpush.msra.mxu0 0.0
        %823 = vmatpush.msra.mxu0 0.0
        %824 = vmatpush.msra.mxu0 0.0
        %825 = vmatpush.msra.mxu0 0.0
        %826 = vmatpush.msra.mxu0 0.0
        %827 = vmatpush.msra.mxu0 0.0
        %828 = vmatpush.msra.mxu0 0.0
        %829 = vmatpush.msra.mxu0 %v459
        %830 = vmatpush.msra.mxu0 %v458
        %831 = vmatpush.msra.mxu0 %v457
        %832 = vmatmul.f32.gmra.mxu0 %v769
        %v833 = vpop.f32.mrf.mxu0
        %v834 = vadd.f32 0.0, %v833
        %835 = vmatmul.f32.gmra.mxu0 %v772
        %v836 = vpop.f32.mrf.mxu0
        %v837 = vadd.f32 0.0, %v836
        %838 = vmatmul.f32.gmra.mxu0 %v775
        %v839 = vpop.f32.mrf.mxu0
        %v840 = vadd.f32 0.0, %v839
        %841 = vmatmul.f32.gmra.mxu0 %v778
        %v842 = vpop.f32.mrf.mxu0
        %v843 = vadd.f32 0.0, %v842
        %844 = vmatmul.f32.gmra.mxu0 %v781
        %v845 = vpop.f32.mrf.mxu0
        %v846 = vadd.f32 0.0, %v845
        %847 = vmatmul.f32.gmra.mxu0 %v784
        %v848 = vpop.f32.mrf.mxu0
        %v849 = vadd.f32 0.0, %v848
        %850 = vmatmul.f32.gmra.mxu0 %v787
        %v851 = vpop.f32.mrf.mxu0
        %v852 = vadd.f32 0.0, %v851
        %853 = vmatmul.f32.gmra.mxu0 %v790
        %v854 = vpop.f32.mrf.mxu0
        %v855 = vadd.f32 0.0, %v854
        %856 = vmatmul.f32.gmra.mxu0 %v793
        %v857 = vpop.f32.mrf.mxu0
        %v858 = vadd.f32 0.0, %v857
        %859 = vmatmul.f32.gmra.mxu0 %v796
        %v860 = vpop.f32.mrf.mxu0
        %v861 = vadd.f32 0.0, %v860
        %862 = vmatmul.f32.gmra.mxu0 %v799
        %v863 = vpop.f32.mrf.mxu0
        %v864 = vadd.f32 0.0, %v863
        %865 = vmatmul.f32.gmra.mxu0 %v802
        %v866 = vpop.f32.mrf.mxu0
        %v867 = vadd.f32 0.0, %v866
        %868 = vmatmul.f32.gmra.mxu0 %v805
        %v869 = vpop.f32.mrf.mxu0
        %v870 = vadd.f32 0.0, %v869
        %871 = vmatmul.f32.gmra.mxu0 %v808
        %v872 = vpop.f32.mrf.mxu0
        %v873 = vadd.f32 0.0, %v872
        %874 = vmatmul.f32.gmra.mxu0 %v811
        %v875 = vpop.f32.mrf.mxu0
        %v876 = vadd.f32 0.0, %v875
        %877 = vmatmul.f32.gmra.mxu0 %v814
        %v878 = vpop.f32.mrf.mxu0
        %v879 = vadd.f32 0.0, %v878
        %880 = vdwg.mxu0
        %881 = vset.pattern.permute.xlu0 2
        %882 = vperm.xlu0 %881, %v441
        %v883 = vpop.permute.xlu0 %882
        %884 = vset.pattern.permute.xlu0 2
        %885 = vperm.xlu0 %884, %v442
        %v886 = vpop.permute.xlu0 %885
        %887 = vset.pattern.permute.xlu0 2
        %888 = vperm.xlu0 %887, %v443
        %v889 = vpop.permute.xlu0 %888
        %890 = vset.pattern.permute.xlu0 2
        %891 = vperm.xlu0 %890, %v444
        %v892 = vpop.permute.xlu0 %891
        %893 = vset.pattern.permute.xlu0 2
        %894 = vperm.xlu0 %893, %v445
        %v895 = vpop.permute.xlu0 %894
        %896 = vset.pattern.permute.xlu0 2
        %897 = vperm.xlu0 %896, %v446
        %v898 = vpop.permute.xlu0 %897
        %899 = vset.pattern.permute.xlu0 2
        %900 = vperm.xlu0 %899, %v447
        %v901 = vpop.permute.xlu0 %900
        %902 = vset.pattern.permute.xlu0 2
        %903 = vperm.xlu0 %902, %v448
        %v904 = vpop.permute.xlu0 %903
        %905 = vset.pattern.permute.xlu0 2
        %906 = vperm.xlu0 %905, %v449
        %v907 = vpop.permute.xlu0 %906
        %908 = vset.pattern.permute.xlu0 2
        %909 = vperm.xlu0 %908, %v450
        %v910 = vpop.permute.xlu0 %909
        %911 = vset.pattern.permute.xlu0 2
        %912 = vperm.xlu0 %911, %v451
        %v913 = vpop.permute.xlu0 %912
        %914 = vset.pattern.permute.xlu0 2
        %915 = vperm.xlu0 %914, %v452
        %v916 = vpop.permute.xlu0 %915
        %917 = vset.pattern.permute.xlu0 2
        %918 = vperm.xlu0 %917, %v453
        %v919 = vpop.permute.xlu0 %918
        %920 = vset.pattern.permute.xlu0 2
        %921 = vperm.xlu0 %920, %v454
        %v922 = vpop.permute.xlu0 %921
        %923 = vset.pattern.permute.xlu0 2
        %924 = vperm.xlu0 %923, %v455
        %v925 = vpop.permute.xlu0 %924
        %926 = vset.pattern.permute.xlu0 2
        %927 = vperm.xlu0 %926, %v456
        %v928 = vpop.permute.xlu0 %927
        %vm929 = vcmp.eq.s32.totalorder %v883, %v461
        %vm930 = vcmp.eq.s32.totalorder %v886, %v461
        %vm931 = vcmp.eq.s32.totalorder %v889, %v461
        %vm932 = vcmp.eq.s32.totalorder %v892, %v461
        %vm933 = vcmp.eq.s32.totalorder %v895, %v461
        %vm934 = vcmp.eq.s32.totalorder %v898, %v461
        %vm935 = vcmp.eq.s32.totalorder %v901, %v461
        %vm936 = vcmp.eq.s32.totalorder %v904, %v461
        %vm937 = vcmp.eq.s32.totalorder %v907, %v461
        %vm938 = vcmp.eq.s32.totalorder %v910, %v461
        %vm939 = vcmp.eq.s32.totalorder %v913, %v461
        %vm940 = vcmp.eq.s32.totalorder %v916, %v461
        %vm941 = vcmp.eq.s32.totalorder %v919, %v461
        %vm942 = vcmp.eq.s32.totalorder %v922, %v461
        %vm943 = vcmp.eq.s32.totalorder %v925, %v461
        %vm944 = vcmp.eq.s32.totalorder %v928, %v461
        %v945 = vsel %vm929, 1, 0
        %v946 = vsel %vm930, 1, 0
        %v947 = vsel %vm931, 1, 0
        %v948 = vsel %vm932, 1, 0
        %v949 = vsel %vm933, 1, 0
        %v950 = vsel %vm934, 1, 0
        %v951 = vsel %vm935, 1, 0
        %v952 = vsel %vm936, 1, 0
        %v953 = vsel %vm937, 1, 0
        %v954 = vsel %vm938, 1, 0
        %v955 = vsel %vm939, 1, 0
        %v956 = vsel %vm940, 1, 0
        %v957 = vsel %vm941, 1, 0
        %v958 = vsel %vm942, 1, 0
        %v959 = vsel %vm943, 1, 0
        %v960 = vsel %vm944, 1, 0
        %v961 = vcvt.s32.f32 %v945
        %v962 = vcvt.s32.f32 %v946
        %v963 = vcvt.s32.f32 %v947
        %v964 = vcvt.s32.f32 %v948
        %v965 = vcvt.s32.f32 %v949
        %v966 = vcvt.s32.f32 %v950
        %v967 = vcvt.s32.f32 %v951
        %v968 = vcvt.s32.f32 %v952
        %v969 = vcvt.s32.f32 %v953
        %v970 = vcvt.s32.f32 %v954
        %v971 = vcvt.s32.f32 %v955
        %v972 = vcvt.s32.f32 %v956
        %v973 = vcvt.s32.f32 %v957
        %v974 = vcvt.s32.f32 %v958
        %v975 = vcvt.s32.f32 %v959
        %v976 = vcvt.s32.f32 %v960
        %v978 = vsel %vm558, %v961, 0
        %v981 = vsel %vm558, %v962, 0
        %v984 = vsel %vm558, %v963, 0
        %v987 = vsel %vm558, %v964, 0
        %v990 = vsel %vm558, %v965, 0
        %v993 = vsel %vm558, %v966, 0
        %v996 = vsel %vm558, %v967, 0
        %v999 = vsel %vm558, %v968, 0
        %v1002 = vsel %vm558, %v969, 0
        %v1005 = vsel %vm558, %v970, 0
        %v1008 = vsel %vm558, %v971, 0
        %v1011 = vsel %vm558, %v972, 0
        %v1014 = vsel %vm558, %v973, 0
        %v1017 = vsel %vm558, %v974, 0
        %v1020 = vsel %vm558, %v975, 0
        %v1023 = vsel %vm558, %v976, 0
        %1025 = vmatpush.msra.mxu0 0.0
        %1026 = vmatpush.msra.mxu0 0.0
        %1027 = vmatpush.msra.mxu0 0.0
        %1028 = vmatpush.msra.mxu0 0.0
        %1029 = vmatpush.msra.mxu0 0.0
        %1030 = vmatpush.msra.mxu0 0.0
        %1031 = vmatpush.msra.mxu0 0.0
        %1032 = vmatpush.msra.mxu0 0.0
        %1033 = vmatpush.msra.mxu0 0.0
        %1034 = vmatpush.msra.mxu0 0.0
        %1035 = vmatpush.msra.mxu0 0.0
        %1036 = vmatpush.msra.mxu0 0.0
        %1037 = vmatpush.msra.mxu0 0.0
        %1038 = vmatpush.msra.mxu0 %v459
        %1039 = vmatpush.msra.mxu0 %v458
        %1040 = vmatpush.msra.mxu0 %v457
        %1041 = vmatmul.f32.gmra.mxu0 %v978
        %v1042 = vpop.f32.mrf.mxu0
        %v1043 = vadd.f32 0.0, %v1042
        %1044 = vmatmul.f32.gmra.mxu0 %v981
        %v1045 = vpop.f32.mrf.mxu0
        %v1046 = vadd.f32 0.0, %v1045
        %1047 = vmatmul.f32.gmra.mxu0 %v984
        %v1048 = vpop.f32.mrf.mxu0
        %v1049 = vadd.f32 0.0, %v1048
        %1050 = vmatmul.f32.gmra.mxu0 %v987
        %v1051 = vpop.f32.mrf.mxu0
        %v1052 = vadd.f32 0.0, %v1051
        %1053 = vmatmul.f32.gmra.mxu0 %v990
        %v1054 = vpop.f32.mrf.mxu0
        %v1055 = vadd.f32 0.0, %v1054
        %1056 = vmatmul.f32.gmra.mxu0 %v993
        %v1057 = vpop.f32.mrf.mxu0
        %v1058 = vadd.f32 0.0, %v1057
        %1059 = vmatmul.f32.gmra.mxu0 %v996
        %v1060 = vpop.f32.mrf.mxu0
        %v1061 = vadd.f32 0.0, %v1060
        %1062 = vmatmul.f32.gmra.mxu0 %v999
        %v1063 = vpop.f32.mrf.mxu0
        %v1064 = vadd.f32 0.0, %v1063
        %1065 = vmatmul.f32.gmra.mxu0 %v1002
        %v1066 = vpop.f32.mrf.mxu0
        %v1067 = vadd.f32 0.0, %v1066
        %1068 = vmatmul.f32.gmra.mxu0 %v1005
        %v1069 = vpop.f32.mrf.mxu0
        %v1070 = vadd.f32 0.0, %v1069
        %1071 = vmatmul.f32.gmra.mxu0 %v1008
        %v1072 = vpop.f32.mrf.mxu0
        %v1073 = vadd.f32 0.0, %v1072
        %1074 = vmatmul.f32.gmra.mxu0 %v1011
        %v1075 = vpop.f32.mrf.mxu0
        %v1076 = vadd.f32 0.0, %v1075
        %1077 = vmatmul.f32.gmra.mxu0 %v1014
        %v1078 = vpop.f32.mrf.mxu0
        %v1079 = vadd.f32 0.0, %v1078
        %1080 = vmatmul.f32.gmra.mxu0 %v1017
        %v1081 = vpop.f32.mrf.mxu0
        %v1082 = vadd.f32 0.0, %v1081
        %1083 = vmatmul.f32.gmra.mxu0 %v1020
        %v1084 = vpop.f32.mrf.mxu0
        %v1085 = vadd.f32 0.0, %v1084
        %1086 = vmatmul.f32.gmra.mxu0 %v1023
        %v1087 = vpop.f32.mrf.mxu0
        %v1088 = vadd.f32 0.0, %v1087
        %1089 = vdwg.mxu0
        %1090 = vset.pattern.permute.xlu0 3
        %1091 = vperm.xlu0 %1090, %v441
        %v1092 = vpop.permute.xlu0 %1091
        %1093 = vset.pattern.permute.xlu0 3
        %1094 = vperm.xlu0 %1093, %v442
        %v1095 = vpop.permute.xlu0 %1094
        %1096 = vset.pattern.permute.xlu0 3
        %1097 = vperm.xlu0 %1096, %v443
        %v1098 = vpop.permute.xlu0 %1097
        %1099 = vset.pattern.permute.xlu0 3
        %1100 = vperm.xlu0 %1099, %v444
        %v1101 = vpop.permute.xlu0 %1100
        %1102 = vset.pattern.permute.xlu0 3
        %1103 = vperm.xlu0 %1102, %v445
        %v1104 = vpop.permute.xlu0 %1103
        %1105 = vset.pattern.permute.xlu0 3
        %1106 = vperm.xlu0 %1105, %v446
        %v1107 = vpop.permute.xlu0 %1106
        %1108 = vset.pattern.permute.xlu0 3
        %1109 = vperm.xlu0 %1108, %v447
        %v1110 = vpop.permute.xlu0 %1109
        %1111 = vset.pattern.permute.xlu0 3
        %1112 = vperm.xlu0 %1111, %v448
        %v1113 = vpop.permute.xlu0 %1112
        %1114 = vset.pattern.permute.xlu0 3
        %1115 = vperm.xlu0 %1114, %v449
        %v1116 = vpop.permute.xlu0 %1115
        %1117 = vset.pattern.permute.xlu0 3
        %1118 = vperm.xlu0 %1117, %v450
        %v1119 = vpop.permute.xlu0 %1118
        %1120 = vset.pattern.permute.xlu0 3
        %1121 = vperm.xlu0 %1120, %v451
        %v1122 = vpop.permute.xlu0 %1121
        %1123 = vset.pattern.permute.xlu0 3
        %1124 = vperm.xlu0 %1123, %v452
        %v1125 = vpop.permute.xlu0 %1124
        %1126 = vset.pattern.permute.xlu0 3
        %1127 = vperm.xlu0 %1126, %v453
        %v1128 = vpop.permute.xlu0 %1127
        %1129 = vset.pattern.permute.xlu0 3
        %1130 = vperm.xlu0 %1129, %v454
        %v1131 = vpop.permute.xlu0 %1130
        %1132 = vset.pattern.permute.xlu0 3
        %1133 = vperm.xlu0 %1132, %v455
        %v1134 = vpop.permute.xlu0 %1133
        %1135 = vset.pattern.permute.xlu0 3
        %1136 = vperm.xlu0 %1135, %v456
        %v1137 = vpop.permute.xlu0 %1136
        %vm1138 = vcmp.eq.s32.totalorder %v1092, %v461
        %vm1139 = vcmp.eq.s32.totalorder %v1095, %v461
        %vm1140 = vcmp.eq.s32.totalorder %v1098, %v461
        %vm1141 = vcmp.eq.s32.totalorder %v1101, %v461
        %vm1142 = vcmp.eq.s32.totalorder %v1104, %v461
        %vm1143 = vcmp.eq.s32.totalorder %v1107, %v461
        %vm1144 = vcmp.eq.s32.totalorder %v1110, %v461
        %vm1145 = vcmp.eq.s32.totalorder %v1113, %v461
        %vm1146 = vcmp.eq.s32.totalorder %v1116, %v461
        %vm1147 = vcmp.eq.s32.totalorder %v1119, %v461
        %vm1148 = vcmp.eq.s32.totalorder %v1122, %v461
        %vm1149 = vcmp.eq.s32.totalorder %v1125, %v461
        %vm1150 = vcmp.eq.s32.totalorder %v1128, %v461
        %vm1151 = vcmp.eq.s32.totalorder %v1131, %v461
        %vm1152 = vcmp.eq.s32.totalorder %v1134, %v461
        %vm1153 = vcmp.eq.s32.totalorder %v1137, %v461
        %v1154 = vsel %vm1138, 1, 0
        %v1155 = vsel %vm1139, 1, 0
        %v1156 = vsel %vm1140, 1, 0
        %v1157 = vsel %vm1141, 1, 0
        %v1158 = vsel %vm1142, 1, 0
        %v1159 = vsel %vm1143, 1, 0
        %v1160 = vsel %vm1144, 1, 0
        %v1161 = vsel %vm1145, 1, 0
        %v1162 = vsel %vm1146, 1, 0
        %v1163 = vsel %vm1147, 1, 0
        %v1164 = vsel %vm1148, 1, 0
        %v1165 = vsel %vm1149, 1, 0
        %v1166 = vsel %vm1150, 1, 0
        %v1167 = vsel %vm1151, 1, 0
        %v1168 = vsel %vm1152, 1, 0
        %v1169 = vsel %vm1153, 1, 0
        %v1170 = vcvt.s32.f32 %v1154
        %v1171 = vcvt.s32.f32 %v1155
        %v1172 = vcvt.s32.f32 %v1156
        %v1173 = vcvt.s32.f32 %v1157
        %v1174 = vcvt.s32.f32 %v1158
        %v1175 = vcvt.s32.f32 %v1159
        %v1176 = vcvt.s32.f32 %v1160
        %v1177 = vcvt.s32.f32 %v1161
        %v1178 = vcvt.s32.f32 %v1162
        %v1179 = vcvt.s32.f32 %v1163
        %v1180 = vcvt.s32.f32 %v1164
        %v1181 = vcvt.s32.f32 %v1165
        %v1182 = vcvt.s32.f32 %v1166
        %v1183 = vcvt.s32.f32 %v1167
        %v1184 = vcvt.s32.f32 %v1168
        %v1185 = vcvt.s32.f32 %v1169
        %v1187 = vsel %vm558, %v1170, 0
        %v1190 = vsel %vm558, %v1171, 0
        %v1193 = vsel %vm558, %v1172, 0
        %v1196 = vsel %vm558, %v1173, 0
        %v1199 = vsel %vm558, %v1174, 0
        %v1202 = vsel %vm558, %v1175, 0
        %v1205 = vsel %vm558, %v1176, 0
        %v1208 = vsel %vm558, %v1177, 0
        %v1211 = vsel %vm558, %v1178, 0
        %v1214 = vsel %vm558, %v1179, 0
        %v1217 = vsel %vm558, %v1180, 0
        %v1220 = vsel %vm558, %v1181, 0
        %v1223 = vsel %vm558, %v1182, 0
        %v1226 = vsel %vm558, %v1183, 0
        %v1229 = vsel %vm558, %v1184, 0
        %v1232 = vsel %vm558, %v1185, 0
        %1234 = vmatpush.msra.mxu0 0.0
        %1235 = vmatpush.msra.mxu0 0.0
        %1236 = vmatpush.msra.mxu0 0.0
        %1237 = vmatpush.msra.mxu0 0.0
        %1238 = vmatpush.msra.mxu0 0.0
        %1239 = vmatpush.msra.mxu0 0.0
        %1240 = vmatpush.msra.mxu0 0.0
        %1241 = vmatpush.msra.mxu0 0.0
        %1242 = vmatpush.msra.mxu0 0.0
        %1243 = vmatpush.msra.mxu0 0.0
        %1244 = vmatpush.msra.mxu0 0.0
        %1245 = vmatpush.msra.mxu0 0.0
        %1246 = vmatpush.msra.mxu0 0.0
        %1247 = vmatpush.msra.mxu0 %v459
        %1248 = vmatpush.msra.mxu0 %v458
        %1249 = vmatpush.msra.mxu0 %v457
        %1250 = vmatmul.f32.gmra.mxu0 %v1187
        %v1251 = vpop.f32.mrf.mxu0
        %v1252 = vadd.f32 0.0, %v1251
        %1253 = vmatmul.f32.gmra.mxu0 %v1190
        %v1254 = vpop.f32.mrf.mxu0
        %v1255 = vadd.f32 0.0, %v1254
        %1256 = vmatmul.f32.gmra.mxu0 %v1193
        %v1257 = vpop.f32.mrf.mxu0
        %v1258 = vadd.f32 0.0, %v1257
        %1259 = vmatmul.f32.gmra.mxu0 %v1196
        %v1260 = vpop.f32.mrf.mxu0
        %v1261 = vadd.f32 0.0, %v1260
        %1262 = vmatmul.f32.gmra.mxu0 %v1199
        %v1263 = vpop.f32.mrf.mxu0
        %v1264 = vadd.f32 0.0, %v1263
        %1265 = vmatmul.f32.gmra.mxu0 %v1202
        %v1266 = vpop.f32.mrf.mxu0
        %v1267 = vadd.f32 0.0, %v1266
        %1268 = vmatmul.f32.gmra.mxu0 %v1205
        %v1269 = vpop.f32.mrf.mxu0
        %v1270 = vadd.f32 0.0, %v1269
        %1271 = vmatmul.f32.gmra.mxu0 %v1208
        %v1272 = vpop.f32.mrf.mxu0
        %v1273 = vadd.f32 0.0, %v1272
        %1274 = vmatmul.f32.gmra.mxu0 %v1211
        %v1275 = vpop.f32.mrf.mxu0
        %v1276 = vadd.f32 0.0, %v1275
        %1277 = vmatmul.f32.gmra.mxu0 %v1214
        %v1278 = vpop.f32.mrf.mxu0
        %v1279 = vadd.f32 0.0, %v1278
        %1280 = vmatmul.f32.gmra.mxu0 %v1217
        %v1281 = vpop.f32.mrf.mxu0
        %v1282 = vadd.f32 0.0, %v1281
        %1283 = vmatmul.f32.gmra.mxu0 %v1220
        %v1284 = vpop.f32.mrf.mxu0
        %v1285 = vadd.f32 0.0, %v1284
        %1286 = vmatmul.f32.gmra.mxu0 %v1223
        %v1287 = vpop.f32.mrf.mxu0
        %v1288 = vadd.f32 0.0, %v1287
        %1289 = vmatmul.f32.gmra.mxu0 %v1226
        %v1290 = vpop.f32.mrf.mxu0
        %v1291 = vadd.f32 0.0, %v1290
        %1292 = vmatmul.f32.gmra.mxu0 %v1229
        %v1293 = vpop.f32.mrf.mxu0
        %v1294 = vadd.f32 0.0, %v1293
        %1295 = vmatmul.f32.gmra.mxu0 %v1232
        %v1296 = vpop.f32.mrf.mxu0
        %v1297 = vadd.f32 0.0, %v1296
        %1298 = vdwg.mxu0
        %1299 = vset.pattern.permute.xlu0 4
        %1300 = vperm.xlu0 %1299, %v441
        %v1301 = vpop.permute.xlu0 %1300
        %1302 = vset.pattern.permute.xlu0 4
        %1303 = vperm.xlu0 %1302, %v442
        %v1304 = vpop.permute.xlu0 %1303
        %1305 = vset.pattern.permute.xlu0 4
        %1306 = vperm.xlu0 %1305, %v443
        %v1307 = vpop.permute.xlu0 %1306
        %1308 = vset.pattern.permute.xlu0 4
        %1309 = vperm.xlu0 %1308, %v444
        %v1310 = vpop.permute.xlu0 %1309
        %1311 = vset.pattern.permute.xlu0 4
        %1312 = vperm.xlu0 %1311, %v445
        %v1313 = vpop.permute.xlu0 %1312
        %1314 = vset.pattern.permute.xlu0 4
        %1315 = vperm.xlu0 %1314, %v446
        %v1316 = vpop.permute.xlu0 %1315
        %1317 = vset.pattern.permute.xlu0 4
        %1318 = vperm.xlu0 %1317, %v447
        %v1319 = vpop.permute.xlu0 %1318
        %1320 = vset.pattern.permute.xlu0 4
        %1321 = vperm.xlu0 %1320, %v448
        %v1322 = vpop.permute.xlu0 %1321
        %1323 = vset.pattern.permute.xlu0 4
        %1324 = vperm.xlu0 %1323, %v449
        %v1325 = vpop.permute.xlu0 %1324
        %1326 = vset.pattern.permute.xlu0 4
        %1327 = vperm.xlu0 %1326, %v450
        %v1328 = vpop.permute.xlu0 %1327
        %1329 = vset.pattern.permute.xlu0 4
        %1330 = vperm.xlu0 %1329, %v451
        %v1331 = vpop.permute.xlu0 %1330
        %1332 = vset.pattern.permute.xlu0 4
        %1333 = vperm.xlu0 %1332, %v452
        %v1334 = vpop.permute.xlu0 %1333
        %1335 = vset.pattern.permute.xlu0 4
        %1336 = vperm.xlu0 %1335, %v453
        %v1337 = vpop.permute.xlu0 %1336
        %1338 = vset.pattern.permute.xlu0 4
        %1339 = vperm.xlu0 %1338, %v454
        %v1340 = vpop.permute.xlu0 %1339
        %1341 = vset.pattern.permute.xlu0 4
        %1342 = vperm.xlu0 %1341, %v455
        %v1343 = vpop.permute.xlu0 %1342
        %1344 = vset.pattern.permute.xlu0 4
        %1345 = vperm.xlu0 %1344, %v456
        %v1346 = vpop.permute.xlu0 %1345
        %vm1347 = vcmp.eq.s32.totalorder %v1301, %v461
        %vm1348 = vcmp.eq.s32.totalorder %v1304, %v461
        %vm1349 = vcmp.eq.s32.totalorder %v1307, %v461
        %vm1350 = vcmp.eq.s32.totalorder %v1310, %v461
        %vm1351 = vcmp.eq.s32.totalorder %v1313, %v461
        %vm1352 = vcmp.eq.s32.totalorder %v1316, %v461
        %vm1353 = vcmp.eq.s32.totalorder %v1319, %v461
        %vm1354 = vcmp.eq.s32.totalorder %v1322, %v461
        %vm1355 = vcmp.eq.s32.totalorder %v1325, %v461
        %vm1356 = vcmp.eq.s32.totalorder %v1328, %v461
        %vm1357 = vcmp.eq.s32.totalorder %v1331, %v461
        %vm1358 = vcmp.eq.s32.totalorder %v1334, %v461
        %vm1359 = vcmp.eq.s32.totalorder %v1337, %v461
        %vm1360 = vcmp.eq.s32.totalorder %v1340, %v461
        %vm1361 = vcmp.eq.s32.totalorder %v1343, %v461
        %vm1362 = vcmp.eq.s32.totalorder %v1346, %v461
        %v1363 = vsel %vm1347, 1, 0
        %v1364 = vsel %vm1348, 1, 0
        %v1365 = vsel %vm1349, 1, 0
        %v1366 = vsel %vm1350, 1, 0
        %v1367 = vsel %vm1351, 1, 0
        %v1368 = vsel %vm1352, 1, 0
        %v1369 = vsel %vm1353, 1, 0
        %v1370 = vsel %vm1354, 1, 0
        %v1371 = vsel %vm1355, 1, 0
        %v1372 = vsel %vm1356, 1, 0
        %v1373 = vsel %vm1357, 1, 0
        %v1374 = vsel %vm1358, 1, 0
        %v1375 = vsel %vm1359, 1, 0
        %v1376 = vsel %vm1360, 1, 0
        %v1377 = vsel %vm1361, 1, 0
        %v1378 = vsel %vm1362, 1, 0
        %v1379 = vcvt.s32.f32 %v1363
        %v1380 = vcvt.s32.f32 %v1364
        %v1381 = vcvt.s32.f32 %v1365
        %v1382 = vcvt.s32.f32 %v1366
        %v1383 = vcvt.s32.f32 %v1367
        %v1384 = vcvt.s32.f32 %v1368
        %v1385 = vcvt.s32.f32 %v1369
        %v1386 = vcvt.s32.f32 %v1370
        %v1387 = vcvt.s32.f32 %v1371
        %v1388 = vcvt.s32.f32 %v1372
        %v1389 = vcvt.s32.f32 %v1373
        %v1390 = vcvt.s32.f32 %v1374
        %v1391 = vcvt.s32.f32 %v1375
        %v1392 = vcvt.s32.f32 %v1376
        %v1393 = vcvt.s32.f32 %v1377
        %v1394 = vcvt.s32.f32 %v1378
        %v1396 = vsel %vm558, %v1379, 0
        %v1399 = vsel %vm558, %v1380, 0
        %v1402 = vsel %vm558, %v1381, 0
        %v1405 = vsel %vm558, %v1382, 0
        %v1408 = vsel %vm558, %v1383, 0
        %v1411 = vsel %vm558, %v1384, 0
        %v1414 = vsel %vm558, %v1385, 0
        %v1417 = vsel %vm558, %v1386, 0
        %v1420 = vsel %vm558, %v1387, 0
        %v1423 = vsel %vm558, %v1388, 0
        %v1426 = vsel %vm558, %v1389, 0
        %v1429 = vsel %vm558, %v1390, 0
        %v1432 = vsel %vm558, %v1391, 0
        %v1435 = vsel %vm558, %v1392, 0
        %v1438 = vsel %vm558, %v1393, 0
        %v1441 = vsel %vm558, %v1394, 0
        %1443 = vmatpush.msra.mxu0 0.0
        %1444 = vmatpush.msra.mxu0 0.0
        %1445 = vmatpush.msra.mxu0 0.0
        %1446 = vmatpush.msra.mxu0 0.0
        %1447 = vmatpush.msra.mxu0 0.0
        %1448 = vmatpush.msra.mxu0 0.0
        %1449 = vmatpush.msra.mxu0 0.0
        %1450 = vmatpush.msra.mxu0 0.0
        %1451 = vmatpush.msra.mxu0 0.0
        %1452 = vmatpush.msra.mxu0 0.0
        %1453 = vmatpush.msra.mxu0 0.0
        %1454 = vmatpush.msra.mxu0 0.0
        %1455 = vmatpush.msra.mxu0 0.0
        %1456 = vmatpush.msra.mxu0 %v459
        %1457 = vmatpush.msra.mxu0 %v458
        %1458 = vmatpush.msra.mxu0 %v457
        %1459 = vmatmul.f32.gmra.mxu0 %v1396
        %v1460 = vpop.f32.mrf.mxu0
        %v1461 = vadd.f32 0.0, %v1460
        %1462 = vmatmul.f32.gmra.mxu0 %v1399
        %v1463 = vpop.f32.mrf.mxu0
        %v1464 = vadd.f32 0.0, %v1463
        %1465 = vmatmul.f32.gmra.mxu0 %v1402
        %v1466 = vpop.f32.mrf.mxu0
        %v1467 = vadd.f32 0.0, %v1466
        %1468 = vmatmul.f32.gmra.mxu0 %v1405
        %v1469 = vpop.f32.mrf.mxu0
        %v1470 = vadd.f32 0.0, %v1469
        %1471 = vmatmul.f32.gmra.mxu0 %v1408
        %v1472 = vpop.f32.mrf.mxu0
        %v1473 = vadd.f32 0.0, %v1472
        %1474 = vmatmul.f32.gmra.mxu0 %v1411
        %v1475 = vpop.f32.mrf.mxu0
        %v1476 = vadd.f32 0.0, %v1475
        %1477 = vmatmul.f32.gmra.mxu0 %v1414
        %v1478 = vpop.f32.mrf.mxu0
        %v1479 = vadd.f32 0.0, %v1478
        %1480 = vmatmul.f32.gmra.mxu0 %v1417
        %v1481 = vpop.f32.mrf.mxu0
        %v1482 = vadd.f32 0.0, %v1481
        %1483 = vmatmul.f32.gmra.mxu0 %v1420
        %v1484 = vpop.f32.mrf.mxu0
        %v1485 = vadd.f32 0.0, %v1484
        %1486 = vmatmul.f32.gmra.mxu0 %v1423
        %v1487 = vpop.f32.mrf.mxu0
        %v1488 = vadd.f32 0.0, %v1487
        %1489 = vmatmul.f32.gmra.mxu0 %v1426
        %v1490 = vpop.f32.mrf.mxu0
        %v1491 = vadd.f32 0.0, %v1490
        %1492 = vmatmul.f32.gmra.mxu0 %v1429
        %v1493 = vpop.f32.mrf.mxu0
        %v1494 = vadd.f32 0.0, %v1493
        %1495 = vmatmul.f32.gmra.mxu0 %v1432
        %v1496 = vpop.f32.mrf.mxu0
        %v1497 = vadd.f32 0.0, %v1496
        %1498 = vmatmul.f32.gmra.mxu0 %v1435
        %v1499 = vpop.f32.mrf.mxu0
        %v1500 = vadd.f32 0.0, %v1499
        %1501 = vmatmul.f32.gmra.mxu0 %v1438
        %v1502 = vpop.f32.mrf.mxu0
        %v1503 = vadd.f32 0.0, %v1502
        %1504 = vmatmul.f32.gmra.mxu0 %v1441
        %v1505 = vpop.f32.mrf.mxu0
        %v1506 = vadd.f32 0.0, %v1505
        %1507 = vdwg.mxu0
        %1508 = vset.pattern.permute.xlu0 5
        %1509 = vperm.xlu0 %1508, %v441
        %v1510 = vpop.permute.xlu0 %1509
        %1511 = vset.pattern.permute.xlu0 5
        %1512 = vperm.xlu0 %1511, %v442
        %v1513 = vpop.permute.xlu0 %1512
        %1514 = vset.pattern.permute.xlu0 5
        %1515 = vperm.xlu0 %1514, %v443
        %v1516 = vpop.permute.xlu0 %1515
        %1517 = vset.pattern.permute.xlu0 5
        %1518 = vperm.xlu0 %1517, %v444
        %v1519 = vpop.permute.xlu0 %1518
        %1520 = vset.pattern.permute.xlu0 5
        %1521 = vperm.xlu0 %1520, %v445
        %v1522 = vpop.permute.xlu0 %1521
        %1523 = vset.pattern.permute.xlu0 5
        %1524 = vperm.xlu0 %1523, %v446
        %v1525 = vpop.permute.xlu0 %1524
        %1526 = vset.pattern.permute.xlu0 5
        %1527 = vperm.xlu0 %1526, %v447
        %v1528 = vpop.permute.xlu0 %1527
        %1529 = vset.pattern.permute.xlu0 5
        %1530 = vperm.xlu0 %1529, %v448
        %v1531 = vpop.permute.xlu0 %1530
        %1532 = vset.pattern.permute.xlu0 5
        %1533 = vperm.xlu0 %1532, %v449
        %v1534 = vpop.permute.xlu0 %1533
        %1535 = vset.pattern.permute.xlu0 5
        %1536 = vperm.xlu0 %1535, %v450
        %v1537 = vpop.permute.xlu0 %1536
        %1538 = vset.pattern.permute.xlu0 5
        %1539 = vperm.xlu0 %1538, %v451
        %v1540 = vpop.permute.xlu0 %1539
        %1541 = vset.pattern.permute.xlu0 5
        %1542 = vperm.xlu0 %1541, %v452
        %v1543 = vpop.permute.xlu0 %1542
        %1544 = vset.pattern.permute.xlu0 5
        %1545 = vperm.xlu0 %1544, %v453
        %v1546 = vpop.permute.xlu0 %1545
        %1547 = vset.pattern.permute.xlu0 5
        %1548 = vperm.xlu0 %1547, %v454
        %v1549 = vpop.permute.xlu0 %1548
        %1550 = vset.pattern.permute.xlu0 5
        %1551 = vperm.xlu0 %1550, %v455
        %v1552 = vpop.permute.xlu0 %1551
        %1553 = vset.pattern.permute.xlu0 5
        %1554 = vperm.xlu0 %1553, %v456
        %v1555 = vpop.permute.xlu0 %1554
        %vm1556 = vcmp.eq.s32.totalorder %v1510, %v461
        %vm1557 = vcmp.eq.s32.totalorder %v1513, %v461
        %vm1558 = vcmp.eq.s32.totalorder %v1516, %v461
        %vm1559 = vcmp.eq.s32.totalorder %v1519, %v461
        %vm1560 = vcmp.eq.s32.totalorder %v1522, %v461
        %vm1561 = vcmp.eq.s32.totalorder %v1525, %v461
        %vm1562 = vcmp.eq.s32.totalorder %v1528, %v461
        %vm1563 = vcmp.eq.s32.totalorder %v1531, %v461
        %vm1564 = vcmp.eq.s32.totalorder %v1534, %v461
        %vm1565 = vcmp.eq.s32.totalorder %v1537, %v461
        %vm1566 = vcmp.eq.s32.totalorder %v1540, %v461
        %vm1567 = vcmp.eq.s32.totalorder %v1543, %v461
        %vm1568 = vcmp.eq.s32.totalorder %v1546, %v461
        %vm1569 = vcmp.eq.s32.totalorder %v1549, %v461
        %vm1570 = vcmp.eq.s32.totalorder %v1552, %v461
        %vm1571 = vcmp.eq.s32.totalorder %v1555, %v461
        %v1572 = vsel %vm1556, 1, 0
        %v1573 = vsel %vm1557, 1, 0
        %v1574 = vsel %vm1558, 1, 0
        %v1575 = vsel %vm1559, 1, 0
        %v1576 = vsel %vm1560, 1, 0
        %v1577 = vsel %vm1561, 1, 0
        %v1578 = vsel %vm1562, 1, 0
        %v1579 = vsel %vm1563, 1, 0
        %v1580 = vsel %vm1564, 1, 0
        %v1581 = vsel %vm1565, 1, 0
        %v1582 = vsel %vm1566, 1, 0
        %v1583 = vsel %vm1567, 1, 0
        %v1584 = vsel %vm1568, 1, 0
        %v1585 = vsel %vm1569, 1, 0
        %v1586 = vsel %vm1570, 1, 0
        %v1587 = vsel %vm1571, 1, 0
        %v1588 = vcvt.s32.f32 %v1572
        %v1589 = vcvt.s32.f32 %v1573
        %v1590 = vcvt.s32.f32 %v1574
        %v1591 = vcvt.s32.f32 %v1575
        %v1592 = vcvt.s32.f32 %v1576
        %v1593 = vcvt.s32.f32 %v1577
        %v1594 = vcvt.s32.f32 %v1578
        %v1595 = vcvt.s32.f32 %v1579
        %v1596 = vcvt.s32.f32 %v1580
        %v1597 = vcvt.s32.f32 %v1581
        %v1598 = vcvt.s32.f32 %v1582
        %v1599 = vcvt.s32.f32 %v1583
        %v1600 = vcvt.s32.f32 %v1584
        %v1601 = vcvt.s32.f32 %v1585
        %v1602 = vcvt.s32.f32 %v1586
        %v1603 = vcvt.s32.f32 %v1587
        %v1605 = vsel %vm558, %v1588, 0
        %v1608 = vsel %vm558, %v1589, 0
        %v1611 = vsel %vm558, %v1590, 0
        %v1614 = vsel %vm558, %v1591, 0
        %v1617 = vsel %vm558, %v1592, 0
        %v1620 = vsel %vm558, %v1593, 0
        %v1623 = vsel %vm558, %v1594, 0
        %v1626 = vsel %vm558, %v1595, 0
        %v1629 = vsel %vm558, %v1596, 0
        %v1632 = vsel %vm558, %v1597, 0
        %v1635 = vsel %vm558, %v1598, 0
        %v1638 = vsel %vm558, %v1599, 0
        %v1641 = vsel %vm558, %v1600, 0
        %v1644 = vsel %vm558, %v1601, 0
        %v1647 = vsel %vm558, %v1602, 0
        %v1650 = vsel %vm558, %v1603, 0
        %1652 = vmatpush.msra.mxu0 0.0
        %1653 = vmatpush.msra.mxu0 0.0
        %1654 = vmatpush.msra.mxu0 0.0
        %1655 = vmatpush.msra.mxu0 0.0
        %1656 = vmatpush.msra.mxu0 0.0
        %1657 = vmatpush.msra.mxu0 0.0
        %1658 = vmatpush.msra.mxu0 0.0
        %1659 = vmatpush.msra.mxu0 0.0
        %1660 = vmatpush.msra.mxu0 0.0
        %1661 = vmatpush.msra.mxu0 0.0
        %1662 = vmatpush.msra.mxu0 0.0
        %1663 = vmatpush.msra.mxu0 0.0
        %1664 = vmatpush.msra.mxu0 0.0
        %1665 = vmatpush.msra.mxu0 %v459
        %1666 = vmatpush.msra.mxu0 %v458
        %1667 = vmatpush.msra.mxu0 %v457
        %1668 = vmatmul.f32.gmra.mxu0 %v1605
        %v1669 = vpop.f32.mrf.mxu0
        %v1670 = vadd.f32 0.0, %v1669
        %1671 = vmatmul.f32.gmra.mxu0 %v1608
        %v1672 = vpop.f32.mrf.mxu0
        %v1673 = vadd.f32 0.0, %v1672
        %1674 = vmatmul.f32.gmra.mxu0 %v1611
        %v1675 = vpop.f32.mrf.mxu0
        %v1676 = vadd.f32 0.0, %v1675
        %1677 = vmatmul.f32.gmra.mxu0 %v1614
        %v1678 = vpop.f32.mrf.mxu0
        %v1679 = vadd.f32 0.0, %v1678
        %1680 = vmatmul.f32.gmra.mxu0 %v1617
        %v1681 = vpop.f32.mrf.mxu0
        %v1682 = vadd.f32 0.0, %v1681
        %1683 = vmatmul.f32.gmra.mxu0 %v1620
        %v1684 = vpop.f32.mrf.mxu0
        %v1685 = vadd.f32 0.0, %v1684
        %1686 = vmatmul.f32.gmra.mxu0 %v1623
        %v1687 = vpop.f32.mrf.mxu0
        %v1688 = vadd.f32 0.0, %v1687
        %1689 = vmatmul.f32.gmra.mxu0 %v1626
        %v1690 = vpop.f32.mrf.mxu0
        %v1691 = vadd.f32 0.0, %v1690
        %1692 = vmatmul.f32.gmra.mxu0 %v1629
        %v1693 = vpop.f32.mrf.mxu0
        %v1694 = vadd.f32 0.0, %v1693
        %1695 = vmatmul.f32.gmra.mxu0 %v1632
        %v1696 = vpop.f32.mrf.mxu0
        %v1697 = vadd.f32 0.0, %v1696
        %1698 = vmatmul.f32.gmra.mxu0 %v1635
        %v1699 = vpop.f32.mrf.mxu0
        %v1700 = vadd.f32 0.0, %v1699
        %1701 = vmatmul.f32.gmra.mxu0 %v1638
        %v1702 = vpop.f32.mrf.mxu0
        %v1703 = vadd.f32 0.0, %v1702
        %1704 = vmatmul.f32.gmra.mxu0 %v1641
        %v1705 = vpop.f32.mrf.mxu0
        %v1706 = vadd.f32 0.0, %v1705
        %1707 = vmatmul.f32.gmra.mxu0 %v1644
        %v1708 = vpop.f32.mrf.mxu0
        %v1709 = vadd.f32 0.0, %v1708
        %1710 = vmatmul.f32.gmra.mxu0 %v1647
        %v1711 = vpop.f32.mrf.mxu0
        %v1712 = vadd.f32 0.0, %v1711
        %1713 = vmatmul.f32.gmra.mxu0 %v1650
        %v1714 = vpop.f32.mrf.mxu0
        %v1715 = vadd.f32 0.0, %v1714
        %1716 = vdwg.mxu0
        %1717 = vset.pattern.permute.xlu0 6
        %1718 = vperm.xlu0 %1717, %v441
        %v1719 = vpop.permute.xlu0 %1718
        %1720 = vset.pattern.permute.xlu0 6
        %1721 = vperm.xlu0 %1720, %v442
        %v1722 = vpop.permute.xlu0 %1721
        %1723 = vset.pattern.permute.xlu0 6
        %1724 = vperm.xlu0 %1723, %v443
        %v1725 = vpop.permute.xlu0 %1724
        %1726 = vset.pattern.permute.xlu0 6
        %1727 = vperm.xlu0 %1726, %v444
        %v1728 = vpop.permute.xlu0 %1727
        %1729 = vset.pattern.permute.xlu0 6
        %1730 = vperm.xlu0 %1729, %v445
        %v1731 = vpop.permute.xlu0 %1730
        %1732 = vset.pattern.permute.xlu0 6
        %1733 = vperm.xlu0 %1732, %v446
        %v1734 = vpop.permute.xlu0 %1733
        %1735 = vset.pattern.permute.xlu0 6
        %1736 = vperm.xlu0 %1735, %v447
        %v1737 = vpop.permute.xlu0 %1736
        %1738 = vset.pattern.permute.xlu0 6
        %1739 = vperm.xlu0 %1738, %v448
        %v1740 = vpop.permute.xlu0 %1739
        %1741 = vset.pattern.permute.xlu0 6
        %1742 = vperm.xlu0 %1741, %v449
        %v1743 = vpop.permute.xlu0 %1742
        %1744 = vset.pattern.permute.xlu0 6
        %1745 = vperm.xlu0 %1744, %v450
        %v1746 = vpop.permute.xlu0 %1745
        %1747 = vset.pattern.permute.xlu0 6
        %1748 = vperm.xlu0 %1747, %v451
        %v1749 = vpop.permute.xlu0 %1748
        %1750 = vset.pattern.permute.xlu0 6
        %1751 = vperm.xlu0 %1750, %v452
        %v1752 = vpop.permute.xlu0 %1751
        %1753 = vset.pattern.permute.xlu0 6
        %1754 = vperm.xlu0 %1753, %v453
        %v1755 = vpop.permute.xlu0 %1754
        %1756 = vset.pattern.permute.xlu0 6
        %1757 = vperm.xlu0 %1756, %v454
        %v1758 = vpop.permute.xlu0 %1757
        %1759 = vset.pattern.permute.xlu0 6
        %1760 = vperm.xlu0 %1759, %v455
        %v1761 = vpop.permute.xlu0 %1760
        %1762 = vset.pattern.permute.xlu0 6
        %1763 = vperm.xlu0 %1762, %v456
        %v1764 = vpop.permute.xlu0 %1763
        %vm1765 = vcmp.eq.s32.totalorder %v1719, %v461
        %vm1766 = vcmp.eq.s32.totalorder %v1722, %v461
        %vm1767 = vcmp.eq.s32.totalorder %v1725, %v461
        %vm1768 = vcmp.eq.s32.totalorder %v1728, %v461
        %vm1769 = vcmp.eq.s32.totalorder %v1731, %v461
        %vm1770 = vcmp.eq.s32.totalorder %v1734, %v461
        %vm1771 = vcmp.eq.s32.totalorder %v1737, %v461
        %vm1772 = vcmp.eq.s32.totalorder %v1740, %v461
        %vm1773 = vcmp.eq.s32.totalorder %v1743, %v461
        %vm1774 = vcmp.eq.s32.totalorder %v1746, %v461
        %vm1775 = vcmp.eq.s32.totalorder %v1749, %v461
        %vm1776 = vcmp.eq.s32.totalorder %v1752, %v461
        %vm1777 = vcmp.eq.s32.totalorder %v1755, %v461
        %vm1778 = vcmp.eq.s32.totalorder %v1758, %v461
        %vm1779 = vcmp.eq.s32.totalorder %v1761, %v461
        %vm1780 = vcmp.eq.s32.totalorder %v1764, %v461
        %v1781 = vsel %vm1765, 1, 0
        %v1782 = vsel %vm1766, 1, 0
        %v1783 = vsel %vm1767, 1, 0
        %v1784 = vsel %vm1768, 1, 0
        %v1785 = vsel %vm1769, 1, 0
        %v1786 = vsel %vm1770, 1, 0
        %v1787 = vsel %vm1771, 1, 0
        %v1788 = vsel %vm1772, 1, 0
        %v1789 = vsel %vm1773, 1, 0
        %v1790 = vsel %vm1774, 1, 0
        %v1791 = vsel %vm1775, 1, 0
        %v1792 = vsel %vm1776, 1, 0
        %v1793 = vsel %vm1777, 1, 0
        %v1794 = vsel %vm1778, 1, 0
        %v1795 = vsel %vm1779, 1, 0
        %v1796 = vsel %vm1780, 1, 0
        %v1797 = vcvt.s32.f32 %v1781
        %v1798 = vcvt.s32.f32 %v1782
        %v1799 = vcvt.s32.f32 %v1783
        %v1800 = vcvt.s32.f32 %v1784
        %v1801 = vcvt.s32.f32 %v1785
        %v1802 = vcvt.s32.f32 %v1786
        %v1803 = vcvt.s32.f32 %v1787
        %v1804 = vcvt.s32.f32 %v1788
        %v1805 = vcvt.s32.f32 %v1789
        %v1806 = vcvt.s32.f32 %v1790
        %v1807 = vcvt.s32.f32 %v1791
        %v1808 = vcvt.s32.f32 %v1792
        %v1809 = vcvt.s32.f32 %v1793
        %v1810 = vcvt.s32.f32 %v1794
        %v1811 = vcvt.s32.f32 %v1795
        %v1812 = vcvt.s32.f32 %v1796
        %v1814 = vsel %vm558, %v1797, 0
        %v1817 = vsel %vm558, %v1798, 0
        %v1820 = vsel %vm558, %v1799, 0
        %v1823 = vsel %vm558, %v1800, 0
        %v1826 = vsel %vm558, %v1801, 0
        %v1829 = vsel %vm558, %v1802, 0
        %v1832 = vsel %vm558, %v1803, 0
        %v1835 = vsel %vm558, %v1804, 0
        %v1838 = vsel %vm558, %v1805, 0
        %v1841 = vsel %vm558, %v1806, 0
        %v1844 = vsel %vm558, %v1807, 0
        %v1847 = vsel %vm558, %v1808, 0
        %v1850 = vsel %vm558, %v1809, 0
        %v1853 = vsel %vm558, %v1810, 0
        %v1856 = vsel %vm558, %v1811, 0
        %v1859 = vsel %vm558, %v1812, 0
        %1861 = vmatpush.msra.mxu0 0.0
        %1862 = vmatpush.msra.mxu0 0.0
        %1863 = vmatpush.msra.mxu0 0.0
        %1864 = vmatpush.msra.mxu0 0.0
        %1865 = vmatpush.msra.mxu0 0.0
        %1866 = vmatpush.msra.mxu0 0.0
        %1867 = vmatpush.msra.mxu0 0.0
        %1868 = vmatpush.msra.mxu0 0.0
        %1869 = vmatpush.msra.mxu0 0.0
        %1870 = vmatpush.msra.mxu0 0.0
        %1871 = vmatpush.msra.mxu0 0.0
        %1872 = vmatpush.msra.mxu0 0.0
        %1873 = vmatpush.msra.mxu0 0.0
        %1874 = vmatpush.msra.mxu0 %v459
        %1875 = vmatpush.msra.mxu0 %v458
        %1876 = vmatpush.msra.mxu0 %v457
        %1877 = vmatmul.f32.gmra.mxu0 %v1814
        %v1878 = vpop.f32.mrf.mxu0
        %v1879 = vadd.f32 0.0, %v1878
        %1880 = vmatmul.f32.gmra.mxu0 %v1817
        %v1881 = vpop.f32.mrf.mxu0
        %v1882 = vadd.f32 0.0, %v1881
        %1883 = vmatmul.f32.gmra.mxu0 %v1820
        %v1884 = vpop.f32.mrf.mxu0
        %v1885 = vadd.f32 0.0, %v1884
        %1886 = vmatmul.f32.gmra.mxu0 %v1823
        %v1887 = vpop.f32.mrf.mxu0
        %v1888 = vadd.f32 0.0, %v1887
        %1889 = vmatmul.f32.gmra.mxu0 %v1826
        %v1890 = vpop.f32.mrf.mxu0
        %v1891 = vadd.f32 0.0, %v1890
        %1892 = vmatmul.f32.gmra.mxu0 %v1829
        %v1893 = vpop.f32.mrf.mxu0
        %v1894 = vadd.f32 0.0, %v1893
        %1895 = vmatmul.f32.gmra.mxu0 %v1832
        %v1896 = vpop.f32.mrf.mxu0
        %v1897 = vadd.f32 0.0, %v1896
        %1898 = vmatmul.f32.gmra.mxu0 %v1835
        %v1899 = vpop.f32.mrf.mxu0
        %v1900 = vadd.f32 0.0, %v1899
        %1901 = vmatmul.f32.gmra.mxu0 %v1838
        %v1902 = vpop.f32.mrf.mxu0
        %v1903 = vadd.f32 0.0, %v1902
        %1904 = vmatmul.f32.gmra.mxu0 %v1841
        %v1905 = vpop.f32.mrf.mxu0
        %v1906 = vadd.f32 0.0, %v1905
        %1907 = vmatmul.f32.gmra.mxu0 %v1844
        %v1908 = vpop.f32.mrf.mxu0
        %v1909 = vadd.f32 0.0, %v1908
        %1910 = vmatmul.f32.gmra.mxu0 %v1847
        %v1911 = vpop.f32.mrf.mxu0
        %v1912 = vadd.f32 0.0, %v1911
        %1913 = vmatmul.f32.gmra.mxu0 %v1850
        %v1914 = vpop.f32.mrf.mxu0
        %v1915 = vadd.f32 0.0, %v1914
        %1916 = vmatmul.f32.gmra.mxu0 %v1853
        %v1917 = vpop.f32.mrf.mxu0
        %v1918 = vadd.f32 0.0, %v1917
        %1919 = vmatmul.f32.gmra.mxu0 %v1856
        %v1920 = vpop.f32.mrf.mxu0
        %v1921 = vadd.f32 0.0, %v1920
        %1922 = vmatmul.f32.gmra.mxu0 %v1859
        %v1923 = vpop.f32.mrf.mxu0
        %v1924 = vadd.f32 0.0, %v1923
        %1925 = vdwg.mxu0
        %1926 = vset.pattern.permute.xlu0 7
        %1927 = vperm.xlu0 %1926, %v441
        %v1928 = vpop.permute.xlu0 %1927
        %1929 = vset.pattern.permute.xlu0 7
        %1930 = vperm.xlu0 %1929, %v442
        %v1931 = vpop.permute.xlu0 %1930
        %1932 = vset.pattern.permute.xlu0 7
        %1933 = vperm.xlu0 %1932, %v443
        %v1934 = vpop.permute.xlu0 %1933
        %1935 = vset.pattern.permute.xlu0 7
        %1936 = vperm.xlu0 %1935, %v444
        %v1937 = vpop.permute.xlu0 %1936
        %1938 = vset.pattern.permute.xlu0 7
        %1939 = vperm.xlu0 %1938, %v445
        %v1940 = vpop.permute.xlu0 %1939
        %1941 = vset.pattern.permute.xlu0 7
        %1942 = vperm.xlu0 %1941, %v446
        %v1943 = vpop.permute.xlu0 %1942
        %1944 = vset.pattern.permute.xlu0 7
        %1945 = vperm.xlu0 %1944, %v447
        %v1946 = vpop.permute.xlu0 %1945
        %1947 = vset.pattern.permute.xlu0 7
        %1948 = vperm.xlu0 %1947, %v448
        %v1949 = vpop.permute.xlu0 %1948
        %1950 = vset.pattern.permute.xlu0 7
        %1951 = vperm.xlu0 %1950, %v449
        %v1952 = vpop.permute.xlu0 %1951
        %1953 = vset.pattern.permute.xlu0 7
        %1954 = vperm.xlu0 %1953, %v450
        %v1955 = vpop.permute.xlu0 %1954
        %1956 = vset.pattern.permute.xlu0 7
        %1957 = vperm.xlu0 %1956, %v451
        %v1958 = vpop.permute.xlu0 %1957
        %1959 = vset.pattern.permute.xlu0 7
        %1960 = vperm.xlu0 %1959, %v452
        %v1961 = vpop.permute.xlu0 %1960
        %1962 = vset.pattern.permute.xlu0 7
        %1963 = vperm.xlu0 %1962, %v453
        %v1964 = vpop.permute.xlu0 %1963
        %1965 = vset.pattern.permute.xlu0 7
        %1966 = vperm.xlu0 %1965, %v454
        %v1967 = vpop.permute.xlu0 %1966
        %1968 = vset.pattern.permute.xlu0 7
        %1969 = vperm.xlu0 %1968, %v455
        %v1970 = vpop.permute.xlu0 %1969
        %1971 = vset.pattern.permute.xlu0 7
        %1972 = vperm.xlu0 %1971, %v456
        %v1973 = vpop.permute.xlu0 %1972
        %vm1974 = vcmp.eq.s32.totalorder %v1928, %v461
        %vm1975 = vcmp.eq.s32.totalorder %v1931, %v461
        %vm1976 = vcmp.eq.s32.totalorder %v1934, %v461
        %vm1977 = vcmp.eq.s32.totalorder %v1937, %v461
        %vm1978 = vcmp.eq.s32.totalorder %v1940, %v461
        %vm1979 = vcmp.eq.s32.totalorder %v1943, %v461
        %vm1980 = vcmp.eq.s32.totalorder %v1946, %v461
        %vm1981 = vcmp.eq.s32.totalorder %v1949, %v461
        %vm1982 = vcmp.eq.s32.totalorder %v1952, %v461
        %vm1983 = vcmp.eq.s32.totalorder %v1955, %v461
        %vm1984 = vcmp.eq.s32.totalorder %v1958, %v461
        %vm1985 = vcmp.eq.s32.totalorder %v1961, %v461
        %vm1986 = vcmp.eq.s32.totalorder %v1964, %v461
        %vm1987 = vcmp.eq.s32.totalorder %v1967, %v461
        %vm1988 = vcmp.eq.s32.totalorder %v1970, %v461
        %vm1989 = vcmp.eq.s32.totalorder %v1973, %v461
        %v1990 = vsel %vm1974, 1, 0
        %v1991 = vsel %vm1975, 1, 0
        %v1992 = vsel %vm1976, 1, 0
        %v1993 = vsel %vm1977, 1, 0
        %v1994 = vsel %vm1978, 1, 0
        %v1995 = vsel %vm1979, 1, 0
        %v1996 = vsel %vm1980, 1, 0
        %v1997 = vsel %vm1981, 1, 0
        %v1998 = vsel %vm1982, 1, 0
        %v1999 = vsel %vm1983, 1, 0
        %v2000 = vsel %vm1984, 1, 0
        %v2001 = vsel %vm1985, 1, 0
        %v2002 = vsel %vm1986, 1, 0
        %v2003 = vsel %vm1987, 1, 0
        %v2004 = vsel %vm1988, 1, 0
        %v2005 = vsel %vm1989, 1, 0
        %v2006 = vcvt.s32.f32 %v1990
        %v2007 = vcvt.s32.f32 %v1991
        %v2008 = vcvt.s32.f32 %v1992
        %v2009 = vcvt.s32.f32 %v1993
        %v2010 = vcvt.s32.f32 %v1994
        %v2011 = vcvt.s32.f32 %v1995
        %v2012 = vcvt.s32.f32 %v1996
        %v2013 = vcvt.s32.f32 %v1997
        %v2014 = vcvt.s32.f32 %v1998
        %v2015 = vcvt.s32.f32 %v1999
        %v2016 = vcvt.s32.f32 %v2000
        %v2017 = vcvt.s32.f32 %v2001
        %v2018 = vcvt.s32.f32 %v2002
        %v2019 = vcvt.s32.f32 %v2003
        %v2020 = vcvt.s32.f32 %v2004
        %v2021 = vcvt.s32.f32 %v2005
        %v2023 = vsel %vm558, %v2006, 0
        %v2026 = vsel %vm558, %v2007, 0
        %v2029 = vsel %vm558, %v2008, 0
        %v2032 = vsel %vm558, %v2009, 0
        %v2035 = vsel %vm558, %v2010, 0
        %v2038 = vsel %vm558, %v2011, 0
        %v2041 = vsel %vm558, %v2012, 0
        %v2044 = vsel %vm558, %v2013, 0
        %v2047 = vsel %vm558, %v2014, 0
        %v2050 = vsel %vm558, %v2015, 0
        %v2053 = vsel %vm558, %v2016, 0
        %v2056 = vsel %vm558, %v2017, 0
        %v2059 = vsel %vm558, %v2018, 0
        %v2062 = vsel %vm558, %v2019, 0
        %v2065 = vsel %vm558, %v2020, 0
        %v2068 = vsel %vm558, %v2021, 0
        %2070 = vmatpush.msra.mxu0 0.0
        %2071 = vmatpush.msra.mxu0 0.0
        %2072 = vmatpush.msra.mxu0 0.0
        %2073 = vmatpush.msra.mxu0 0.0
        %2074 = vmatpush.msra.mxu0 0.0
        %2075 = vmatpush.msra.mxu0 0.0
        %2076 = vmatpush.msra.mxu0 0.0
        %2077 = vmatpush.msra.mxu0 0.0
        %2078 = vmatpush.msra.mxu0 0.0
        %2079 = vmatpush.msra.mxu0 0.0
        %2080 = vmatpush.msra.mxu0 0.0
        %2081 = vmatpush.msra.mxu0 0.0
        %2082 = vmatpush.msra.mxu0 0.0
        %2083 = vmatpush.msra.mxu0 %v459
        %2084 = vmatpush.msra.mxu0 %v458
        %2085 = vmatpush.msra.mxu0 %v457
        %2086 = vmatmul.f32.gmra.mxu0 %v2023
        %v2087 = vpop.f32.mrf.mxu0
        %v2088 = vadd.f32 0.0, %v2087
        %2089 = vmatmul.f32.gmra.mxu0 %v2026
        %v2090 = vpop.f32.mrf.mxu0
        %v2091 = vadd.f32 0.0, %v2090
        %2092 = vmatmul.f32.gmra.mxu0 %v2029
        %v2093 = vpop.f32.mrf.mxu0
        %v2094 = vadd.f32 0.0, %v2093
        %2095 = vmatmul.f32.gmra.mxu0 %v2032
        %v2096 = vpop.f32.mrf.mxu0
        %v2097 = vadd.f32 0.0, %v2096
        %2098 = vmatmul.f32.gmra.mxu0 %v2035
        %v2099 = vpop.f32.mrf.mxu0
        %v2100 = vadd.f32 0.0, %v2099
        %2101 = vmatmul.f32.gmra.mxu0 %v2038
        %v2102 = vpop.f32.mrf.mxu0
        %v2103 = vadd.f32 0.0, %v2102
        %2104 = vmatmul.f32.gmra.mxu0 %v2041
        %v2105 = vpop.f32.mrf.mxu0
        %v2106 = vadd.f32 0.0, %v2105
        %2107 = vmatmul.f32.gmra.mxu0 %v2044
        %v2108 = vpop.f32.mrf.mxu0
        %v2109 = vadd.f32 0.0, %v2108
        %2110 = vmatmul.f32.gmra.mxu0 %v2047
        %v2111 = vpop.f32.mrf.mxu0
        %v2112 = vadd.f32 0.0, %v2111
        %2113 = vmatmul.f32.gmra.mxu0 %v2050
        %v2114 = vpop.f32.mrf.mxu0
        %v2115 = vadd.f32 0.0, %v2114
        %2116 = vmatmul.f32.gmra.mxu0 %v2053
        %v2117 = vpop.f32.mrf.mxu0
        %v2118 = vadd.f32 0.0, %v2117
        %2119 = vmatmul.f32.gmra.mxu0 %v2056
        %v2120 = vpop.f32.mrf.mxu0
        %v2121 = vadd.f32 0.0, %v2120
        %2122 = vmatmul.f32.gmra.mxu0 %v2059
        %v2123 = vpop.f32.mrf.mxu0
        %v2124 = vadd.f32 0.0, %v2123
        %2125 = vmatmul.f32.gmra.mxu0 %v2062
        %v2126 = vpop.f32.mrf.mxu0
        %v2127 = vadd.f32 0.0, %v2126
        %2128 = vmatmul.f32.gmra.mxu0 %v2065
        %v2129 = vpop.f32.mrf.mxu0
        %v2130 = vadd.f32 0.0, %v2129
        %2131 = vmatmul.f32.gmra.mxu0 %v2068
        %v2132 = vpop.f32.mrf.mxu0
        %v2133 = vadd.f32 0.0, %v2132
        %2134 = vdwg.mxu0
        %2151 = vrot.lane.b32.xlu0 %v834, 16
        %v2152 = vpop.permute.xlu0 %2151
        %2153 = vrot.lane.b32.xlu0 %v837, 16
        %v2154 = vpop.permute.xlu0 %2153
        %2155 = vrot.lane.b32.xlu0 %v840, 16
        %v2156 = vpop.permute.xlu0 %2155
        %2157 = vrot.lane.b32.xlu0 %v843, 16
        %v2158 = vpop.permute.xlu0 %2157
        %2159 = vrot.lane.b32.xlu0 %v846, 16
        %v2160 = vpop.permute.xlu0 %2159
        %2161 = vrot.lane.b32.xlu0 %v849, 16
        %v2162 = vpop.permute.xlu0 %2161
        %2163 = vrot.lane.b32.xlu0 %v852, 16
        %v2164 = vpop.permute.xlu0 %2163
        %2165 = vrot.lane.b32.xlu0 %v855, 16
        %v2166 = vpop.permute.xlu0 %2165
        %2167 = vrot.lane.b32.xlu0 %v858, 16
        %v2168 = vpop.permute.xlu0 %2167
        %2169 = vrot.lane.b32.xlu0 %v861, 16
        %v2170 = vpop.permute.xlu0 %2169
        %2171 = vrot.lane.b32.xlu0 %v864, 16
        %v2172 = vpop.permute.xlu0 %2171
        %2173 = vrot.lane.b32.xlu0 %v867, 16
        %v2174 = vpop.permute.xlu0 %2173
        %2175 = vrot.lane.b32.xlu0 %v870, 16
        %v2176 = vpop.permute.xlu0 %2175
        %2177 = vrot.lane.b32.xlu0 %v873, 16
        %v2178 = vpop.permute.xlu0 %2177
        %2179 = vrot.lane.b32.xlu0 %v876, 16
        %v2180 = vpop.permute.xlu0 %2179
        %2181 = vrot.lane.b32.xlu0 %v879, 16
        %v2182 = vpop.permute.xlu0 %2181
        %2215 = vrot.lane.b32.xlu0 %v1043, 32
        %v2216 = vpop.permute.xlu0 %2215
        %2217 = vrot.lane.b32.xlu0 %v1046, 32
        %v2218 = vpop.permute.xlu0 %2217
        %2219 = vrot.lane.b32.xlu0 %v1049, 32
        %v2220 = vpop.permute.xlu0 %2219
        %2221 = vrot.lane.b32.xlu0 %v1052, 32
        %v2222 = vpop.permute.xlu0 %2221
        %2223 = vrot.lane.b32.xlu0 %v1055, 32
        %v2224 = vpop.permute.xlu0 %2223
        %2225 = vrot.lane.b32.xlu0 %v1058, 32
        %v2226 = vpop.permute.xlu0 %2225
        %2227 = vrot.lane.b32.xlu0 %v1061, 32
        %v2228 = vpop.permute.xlu0 %2227
        %2229 = vrot.lane.b32.xlu0 %v1064, 32
        %v2230 = vpop.permute.xlu0 %2229
        %2231 = vrot.lane.b32.xlu0 %v1067, 32
        %v2232 = vpop.permute.xlu0 %2231
        %2233 = vrot.lane.b32.xlu0 %v1070, 32
        %v2234 = vpop.permute.xlu0 %2233
        %2235 = vrot.lane.b32.xlu0 %v1073, 32
        %v2236 = vpop.permute.xlu0 %2235
        %2237 = vrot.lane.b32.xlu0 %v1076, 32
        %v2238 = vpop.permute.xlu0 %2237
        %2239 = vrot.lane.b32.xlu0 %v1079, 32
        %v2240 = vpop.permute.xlu0 %2239
        %2241 = vrot.lane.b32.xlu0 %v1082, 32
        %v2242 = vpop.permute.xlu0 %2241
        %2243 = vrot.lane.b32.xlu0 %v1085, 32
        %v2244 = vpop.permute.xlu0 %2243
        %2245 = vrot.lane.b32.xlu0 %v1088, 32
        %v2246 = vpop.permute.xlu0 %2245
        %2279 = vrot.lane.b32.xlu0 %v1252, 48
        %v2280 = vpop.permute.xlu0 %2279
        %2281 = vrot.lane.b32.xlu0 %v1255, 48
        %v2282 = vpop.permute.xlu0 %2281
        %2283 = vrot.lane.b32.xlu0 %v1258, 48
        %v2284 = vpop.permute.xlu0 %2283
        %2285 = vrot.lane.b32.xlu0 %v1261, 48
        %v2286 = vpop.permute.xlu0 %2285
        %2287 = vrot.lane.b32.xlu0 %v1264, 48
        %v2288 = vpop.permute.xlu0 %2287
        %2289 = vrot.lane.b32.xlu0 %v1267, 48
        %v2290 = vpop.permute.xlu0 %2289
        %2291 = vrot.lane.b32.xlu0 %v1270, 48
        %v2292 = vpop.permute.xlu0 %2291
        %2293 = vrot.lane.b32.xlu0 %v1273, 48
        %v2294 = vpop.permute.xlu0 %2293
        %2295 = vrot.lane.b32.xlu0 %v1276, 48
        %v2296 = vpop.permute.xlu0 %2295
        %2297 = vrot.lane.b32.xlu0 %v1279, 48
        %v2298 = vpop.permute.xlu0 %2297
        %2299 = vrot.lane.b32.xlu0 %v1282, 48
        %v2300 = vpop.permute.xlu0 %2299
        %2301 = vrot.lane.b32.xlu0 %v1285, 48
        %v2302 = vpop.permute.xlu0 %2301
        %2303 = vrot.lane.b32.xlu0 %v1288, 48
        %v2304 = vpop.permute.xlu0 %2303
        %2305 = vrot.lane.b32.xlu0 %v1291, 48
        %v2306 = vpop.permute.xlu0 %2305
        %2307 = vrot.lane.b32.xlu0 %v1294, 48
        %v2308 = vpop.permute.xlu0 %2307
        %2309 = vrot.lane.b32.xlu0 %v1297, 48
        %v2310 = vpop.permute.xlu0 %2309
        %2343 = vrot.lane.b32.xlu0 %v1461, 64
        %v2344 = vpop.permute.xlu0 %2343
        %2345 = vrot.lane.b32.xlu0 %v1464, 64
        %v2346 = vpop.permute.xlu0 %2345
        %2347 = vrot.lane.b32.xlu0 %v1467, 64
        %v2348 = vpop.permute.xlu0 %2347
        %2349 = vrot.lane.b32.xlu0 %v1470, 64
        %v2350 = vpop.permute.xlu0 %2349
        %2351 = vrot.lane.b32.xlu0 %v1473, 64
        %v2352 = vpop.permute.xlu0 %2351
        %2353 = vrot.lane.b32.xlu0 %v1476, 64
        %v2354 = vpop.permute.xlu0 %2353
        %2355 = vrot.lane.b32.xlu0 %v1479, 64
        %v2356 = vpop.permute.xlu0 %2355
        %2357 = vrot.lane.b32.xlu0 %v1482, 64
        %v2358 = vpop.permute.xlu0 %2357
        %2359 = vrot.lane.b32.xlu0 %v1485, 64
        %v2360 = vpop.permute.xlu0 %2359
        %2361 = vrot.lane.b32.xlu0 %v1488, 64
        %v2362 = vpop.permute.xlu0 %2361
        %2363 = vrot.lane.b32.xlu0 %v1491, 64
        %v2364 = vpop.permute.xlu0 %2363
        %2365 = vrot.lane.b32.xlu0 %v1494, 64
        %v2366 = vpop.permute.xlu0 %2365
        %2367 = vrot.lane.b32.xlu0 %v1497, 64
        %v2368 = vpop.permute.xlu0 %2367
        %2369 = vrot.lane.b32.xlu0 %v1500, 64
        %v2370 = vpop.permute.xlu0 %2369
        %2371 = vrot.lane.b32.xlu0 %v1503, 64
        %v2372 = vpop.permute.xlu0 %2371
        %2373 = vrot.lane.b32.xlu0 %v1506, 64
        %v2374 = vpop.permute.xlu0 %2373
        %2407 = vrot.lane.b32.xlu0 %v1670, 80
        %v2408 = vpop.permute.xlu0 %2407
        %2409 = vrot.lane.b32.xlu0 %v1673, 80
        %v2410 = vpop.permute.xlu0 %2409
        %2411 = vrot.lane.b32.xlu0 %v1676, 80
        %v2412 = vpop.permute.xlu0 %2411
        %2413 = vrot.lane.b32.xlu0 %v1679, 80
        %v2414 = vpop.permute.xlu0 %2413
        %2415 = vrot.lane.b32.xlu0 %v1682, 80
        %v2416 = vpop.permute.xlu0 %2415
        %2417 = vrot.lane.b32.xlu0 %v1685, 80
        %v2418 = vpop.permute.xlu0 %2417
        %2419 = vrot.lane.b32.xlu0 %v1688, 80
        %v2420 = vpop.permute.xlu0 %2419
        %2421 = vrot.lane.b32.xlu0 %v1691, 80
        %v2422 = vpop.permute.xlu0 %2421
        %2423 = vrot.lane.b32.xlu0 %v1694, 80
        %v2424 = vpop.permute.xlu0 %2423
        %2425 = vrot.lane.b32.xlu0 %v1697, 80
        %v2426 = vpop.permute.xlu0 %2425
        %2427 = vrot.lane.b32.xlu0 %v1700, 80
        %v2428 = vpop.permute.xlu0 %2427
        %2429 = vrot.lane.b32.xlu0 %v1703, 80
        %v2430 = vpop.permute.xlu0 %2429
        %2431 = vrot.lane.b32.xlu0 %v1706, 80
        %v2432 = vpop.permute.xlu0 %2431
        %2433 = vrot.lane.b32.xlu0 %v1709, 80
        %v2434 = vpop.permute.xlu0 %2433
        %2435 = vrot.lane.b32.xlu0 %v1712, 80
        %v2436 = vpop.permute.xlu0 %2435
        %2437 = vrot.lane.b32.xlu0 %v1715, 80
        %v2438 = vpop.permute.xlu0 %2437
        %2471 = vrot.lane.b32.xlu0 %v1879, 96
        %v2472 = vpop.permute.xlu0 %2471
        %2473 = vrot.lane.b32.xlu0 %v1882, 96
        %v2474 = vpop.permute.xlu0 %2473
        %2475 = vrot.lane.b32.xlu0 %v1885, 96
        %v2476 = vpop.permute.xlu0 %2475
        %2477 = vrot.lane.b32.xlu0 %v1888, 96
        %v2478 = vpop.permute.xlu0 %2477
        %2479 = vrot.lane.b32.xlu0 %v1891, 96
        %v2480 = vpop.permute.xlu0 %2479
        %2481 = vrot.lane.b32.xlu0 %v1894, 96
        %v2482 = vpop.permute.xlu0 %2481
        %2483 = vrot.lane.b32.xlu0 %v1897, 96
        %v2484 = vpop.permute.xlu0 %2483
        %2485 = vrot.lane.b32.xlu0 %v1900, 96
        %v2486 = vpop.permute.xlu0 %2485
        %2487 = vrot.lane.b32.xlu0 %v1903, 96
        %v2488 = vpop.permute.xlu0 %2487
        %2489 = vrot.lane.b32.xlu0 %v1906, 96
        %v2490 = vpop.permute.xlu0 %2489
        %2491 = vrot.lane.b32.xlu0 %v1909, 96
        %v2492 = vpop.permute.xlu0 %2491
        %2493 = vrot.lane.b32.xlu0 %v1912, 96
        %v2494 = vpop.permute.xlu0 %2493
        %2495 = vrot.lane.b32.xlu0 %v1915, 96
        %v2496 = vpop.permute.xlu0 %2495
        %2497 = vrot.lane.b32.xlu0 %v1918, 96
        %v2498 = vpop.permute.xlu0 %2497
        %2499 = vrot.lane.b32.xlu0 %v1921, 96
        %v2500 = vpop.permute.xlu0 %2499
        %2501 = vrot.lane.b32.xlu0 %v1924, 96
        %v2502 = vpop.permute.xlu0 %2501
        %2535 = vrot.lane.b32.xlu0 %v2088, 112
        %v2536 = vpop.permute.xlu0 %2535
        %2537 = vrot.lane.b32.xlu0 %v2091, 112
        %v2538 = vpop.permute.xlu0 %2537
        %2539 = vrot.lane.b32.xlu0 %v2094, 112
        %v2540 = vpop.permute.xlu0 %2539
        %2541 = vrot.lane.b32.xlu0 %v2097, 112
        %v2542 = vpop.permute.xlu0 %2541
        %2543 = vrot.lane.b32.xlu0 %v2100, 112
        %v2544 = vpop.permute.xlu0 %2543
        %2545 = vrot.lane.b32.xlu0 %v2103, 112
        %v2546 = vpop.permute.xlu0 %2545
        %2547 = vrot.lane.b32.xlu0 %v2106, 112
        %v2548 = vpop.permute.xlu0 %2547
        %2549 = vrot.lane.b32.xlu0 %v2109, 112
        %v2550 = vpop.permute.xlu0 %2549
        %2551 = vrot.lane.b32.xlu0 %v2112, 112
        %v2552 = vpop.permute.xlu0 %2551
        %2553 = vrot.lane.b32.xlu0 %v2115, 112
        %v2554 = vpop.permute.xlu0 %2553
        %2555 = vrot.lane.b32.xlu0 %v2118, 112
        %v2556 = vpop.permute.xlu0 %2555
        %2557 = vrot.lane.b32.xlu0 %v2121, 112
        %v2558 = vpop.permute.xlu0 %2557
        %2559 = vrot.lane.b32.xlu0 %v2124, 112
        %v2560 = vpop.permute.xlu0 %2559
        %2561 = vrot.lane.b32.xlu0 %v2127, 112
        %v2562 = vpop.permute.xlu0 %2561
        %2563 = vrot.lane.b32.xlu0 %v2130, 112
        %v2564 = vpop.permute.xlu0 %2563
        %2565 = vrot.lane.b32.xlu0 %v2133, 112
        %v2566 = vpop.permute.xlu0 %2565
        %vm2583 = vcmask 130048
        %v2584 = vsel %vm2583, %v625, %v2152
        %v2585 = vsel %vm2583, %v628, %v2154
        %v2586 = vsel %vm2583, %v631, %v2156
        %v2587 = vsel %vm2583, %v634, %v2158
        %v2588 = vsel %vm2583, %v637, %v2160
        %v2589 = vsel %vm2583, %v640, %v2162
        %v2590 = vsel %vm2583, %v643, %v2164
        %v2591 = vsel %vm2583, %v646, %v2166
        %v2592 = vsel %vm2583, %v649, %v2168
        %v2593 = vsel %vm2583, %v652, %v2170
        %v2594 = vsel %vm2583, %v655, %v2172
        %v2595 = vsel %vm2583, %v658, %v2174
        %v2596 = vsel %vm2583, %v661, %v2176
        %v2597 = vsel %vm2583, %v664, %v2178
        %v2598 = vsel %vm2583, %v667, %v2180
        %v2599 = vsel %vm2583, %v670, %v2182
        %vm2600 = vcmask 261120
        %v2601 = vsel %vm2600, %v2584, %v2216
        %v2602 = vsel %vm2600, %v2585, %v2218
        %v2603 = vsel %vm2600, %v2586, %v2220
        %v2604 = vsel %vm2600, %v2587, %v2222
        %v2605 = vsel %vm2600, %v2588, %v2224
        %v2606 = vsel %vm2600, %v2589, %v2226
        %v2607 = vsel %vm2600, %v2590, %v2228
        %v2608 = vsel %vm2600, %v2591, %v2230
        %v2609 = vsel %vm2600, %v2592, %v2232
        %v2610 = vsel %vm2600, %v2593, %v2234
        %v2611 = vsel %vm2600, %v2594, %v2236
        %v2612 = vsel %vm2600, %v2595, %v2238
        %v2613 = vsel %vm2600, %v2596, %v2240
        %v2614 = vsel %vm2600, %v2597, %v2242
        %v2615 = vsel %vm2600, %v2598, %v2244
        %v2616 = vsel %vm2600, %v2599, %v2246
        %vm2617 = vcmask 392192
        %v2618 = vsel %vm2617, %v2601, %v2280
        %v2619 = vsel %vm2617, %v2602, %v2282
        %v2620 = vsel %vm2617, %v2603, %v2284
        %v2621 = vsel %vm2617, %v2604, %v2286
        %v2622 = vsel %vm2617, %v2605, %v2288
        %v2623 = vsel %vm2617, %v2606, %v2290
        %v2624 = vsel %vm2617, %v2607, %v2292
        %v2625 = vsel %vm2617, %v2608, %v2294
        %v2626 = vsel %vm2617, %v2609, %v2296
        %v2627 = vsel %vm2617, %v2610, %v2298
        %v2628 = vsel %vm2617, %v2611, %v2300
        %v2629 = vsel %vm2617, %v2612, %v2302
        %v2630 = vsel %vm2617, %v2613, %v2304
        %v2631 = vsel %vm2617, %v2614, %v2306
        %v2632 = vsel %vm2617, %v2615, %v2308
        %v2633 = vsel %vm2617, %v2616, %v2310
        %vm2634 = vcmask 523264
        %v2635 = vsel %vm2634, %v2618, %v2344
        %v2636 = vsel %vm2634, %v2619, %v2346
        %v2637 = vsel %vm2634, %v2620, %v2348
        %v2638 = vsel %vm2634, %v2621, %v2350
        %v2639 = vsel %vm2634, %v2622, %v2352
        %v2640 = vsel %vm2634, %v2623, %v2354
        %v2641 = vsel %vm2634, %v2624, %v2356
        %v2642 = vsel %vm2634, %v2625, %v2358
        %v2643 = vsel %vm2634, %v2626, %v2360
        %v2644 = vsel %vm2634, %v2627, %v2362
        %v2645 = vsel %vm2634, %v2628, %v2364
        %v2646 = vsel %vm2634, %v2629, %v2366
        %v2647 = vsel %vm2634, %v2630, %v2368
        %v2648 = vsel %vm2634, %v2631, %v2370
        %v2649 = vsel %vm2634, %v2632, %v2372
        %v2650 = vsel %vm2634, %v2633, %v2374
        %vm2651 = vcmask 654336
        %v2652 = vsel %vm2651, %v2635, %v2408
        %v2653 = vsel %vm2651, %v2636, %v2410
        %v2654 = vsel %vm2651, %v2637, %v2412
        %v2655 = vsel %vm2651, %v2638, %v2414
        %v2656 = vsel %vm2651, %v2639, %v2416
        %v2657 = vsel %vm2651, %v2640, %v2418
        %v2658 = vsel %vm2651, %v2641, %v2420
        %v2659 = vsel %vm2651, %v2642, %v2422
        %v2660 = vsel %vm2651, %v2643, %v2424
        %v2661 = vsel %vm2651, %v2644, %v2426
        %v2662 = vsel %vm2651, %v2645, %v2428
        %v2663 = vsel %vm2651, %v2646, %v2430
        %v2664 = vsel %vm2651, %v2647, %v2432
        %v2665 = vsel %vm2651, %v2648, %v2434
        %v2666 = vsel %vm2651, %v2649, %v2436
        %v2667 = vsel %vm2651, %v2650, %v2438
        %vm2668 = vcmask 785408
        %v2669 = vsel %vm2668, %v2652, %v2472
        %v2670 = vsel %vm2668, %v2653, %v2474
        %v2671 = vsel %vm2668, %v2654, %v2476
        %v2672 = vsel %vm2668, %v2655, %v2478
        %v2673 = vsel %vm2668, %v2656, %v2480
        %v2674 = vsel %vm2668, %v2657, %v2482
        %v2675 = vsel %vm2668, %v2658, %v2484
        %v2676 = vsel %vm2668, %v2659, %v2486
        %v2677 = vsel %vm2668, %v2660, %v2488
        %v2678 = vsel %vm2668, %v2661, %v2490
        %v2679 = vsel %vm2668, %v2662, %v2492
        %v2680 = vsel %vm2668, %v2663, %v2494
        %v2681 = vsel %vm2668, %v2664, %v2496
        %v2682 = vsel %vm2668, %v2665, %v2498
        %v2683 = vsel %vm2668, %v2666, %v2500
        %v2684 = vsel %vm2668, %v2667, %v2502
        %vm2685 = vcmask 916480
        %v2686 = vsel %vm2685, %v2669, %v2536
        %v2687 = vsel %vm2685, %v2670, %v2538
        %v2688 = vsel %vm2685, %v2671, %v2540
        %v2689 = vsel %vm2685, %v2672, %v2542
        %v2690 = vsel %vm2685, %v2673, %v2544
        %v2691 = vsel %vm2685, %v2674, %v2546
        %v2692 = vsel %vm2685, %v2675, %v2548
        %v2693 = vsel %vm2685, %v2676, %v2550
        %v2694 = vsel %vm2685, %v2677, %v2552
        %v2695 = vsel %vm2685, %v2678, %v2554
        %v2696 = vsel %vm2685, %v2679, %v2556
        %v2697 = vsel %vm2685, %v2680, %v2558
        %v2698 = vsel %vm2685, %v2681, %v2560
        %v2699 = vsel %vm2685, %v2682, %v2562
        %v2700 = vsel %vm2685, %v2683, %v2564
        %v2701 = vsel %vm2685, %v2684, %v2566
        %2702 = vst [vmem:[%s411] sm:$0xff] %v2686
        %2703 = vst [vmem:[%s411 + $0x8] sm:$0xff] %v2687
        %2704 = vst [vmem:[%s411 + $0x10] sm:$0xff] %v2688
        %2705 = vst [vmem:[%s411 + $0x18] sm:$0xff] %v2689
        %2706 = vst [vmem:[%s411 + $0x20] sm:$0xff] %v2690
        %2707 = vst [vmem:[%s411 + $0x28] sm:$0xff] %v2691
        %2708 = vst [vmem:[%s411 + $0x30] sm:$0xff] %v2692
        %2709 = vst [vmem:[%s411 + $0x38] sm:$0xff] %v2693
        %2710 = vst [vmem:[%s411 + $0x40] sm:$0xff] %v2694
        %2711 = vst [vmem:[%s411 + $0x48] sm:$0xff] %v2695
        %2712 = vst [vmem:[%s411 + $0x50] sm:$0xff] %v2696
        %2713 = vst [vmem:[%s411 + $0x58] sm:$0xff] %v2697
        %2714 = vst [vmem:[%s411 + $0x60] sm:$0xff] %v2698
        %2715 = vst [vmem:[%s411 + $0x68] sm:$0xff] %v2699
        %2716 = vst [vmem:[%s411 + $0x70] sm:$0xff] %v2700
        %2717 = vst [vmem:[%s411 + $0x78] sm:$0xff] %v2701
        %v2718 = vpack.c.bf16 %v2687, %v2686
        %v2719 = vpack.c.bf16 %v2689, %v2688
        %v2720 = vpack.c.bf16 %v2691, %v2690
        %v2721 = vpack.c.bf16 %v2693, %v2692
        %v2722 = vpack.c.bf16 %v2695, %v2694
        %v2723 = vpack.c.bf16 %v2697, %v2696
        %v2724 = vpack.c.bf16 %v2699, %v2698
        %v2725 = vpack.c.bf16 %v2701, %v2700
        %v2726 = vld [vmem:[%s2] sm:$0xf]
        %v2727 = vld [vmem:[%s2 + $0x4] sm:$0xf]
        %v2728 = vld [vmem:[%s2 + $0x8] sm:$0xf]
        %v2729 = vld [vmem:[%s2 + $0xc] sm:$0xf]
        %v2730 = vld [vmem:[%s2 + $0x10] sm:$0xf]
        %v2731 = vld [vmem:[%s2 + $0x14] sm:$0xf]
        %v2732 = vld [vmem:[%s2 + $0x18] sm:$0xf]
        %v2733 = vld [vmem:[%s2 + $0x1c] sm:$0xf]
        %v2734 = vld [vmem:[%s2 + $0x20] sm:$0xf]
        %v2735 = vld [vmem:[%s2 + $0x24] sm:$0xf]
        %v2736 = vld [vmem:[%s2 + $0x28] sm:$0xf]
        %v2737 = vld [vmem:[%s2 + $0x2c] sm:$0xf]
        %v2738 = vld [vmem:[%s2 + $0x30] sm:$0xf]
        %v2739 = vld [vmem:[%s2 + $0x34] sm:$0xf]
        %v2740 = vld [vmem:[%s2 + $0x38] sm:$0xf]
        %v2741 = vld [vmem:[%s2 + $0x3c] sm:$0xf]
        %v2742 = vld [vmem:[%s3] sm:$0x1]
        %v2744 = vperm.slane %v2742, 0
        %v2762 = vunpack.c.l.b16 %v2726
        %v2763 = vunpack.c.l.b16 %v2727
        %v2764 = vunpack.c.l.b16 %v2728
        %v2765 = vunpack.c.l.b16 %v2729
        %v2766 = vunpack.c.l.b16 %v2730
        %v2767 = vunpack.c.l.b16 %v2731
        %v2768 = vunpack.c.l.b16 %v2732
        %v2769 = vunpack.c.l.b16 %v2733
        %v2770 = vunpack.c.l.b16 %v2734
        %v2771 = vunpack.c.l.b16 %v2735
        %v2772 = vunpack.c.l.b16 %v2736
        %v2773 = vunpack.c.l.b16 %v2737
        %v2774 = vunpack.c.l.b16 %v2738
        %v2775 = vunpack.c.l.b16 %v2739
        %v2776 = vunpack.c.l.b16 %v2740
        %v2777 = vunpack.c.l.b16 %v2741
        %v2778 = vpack.c.b16 %v2763, %v2762
        %v2779 = vpack.c.b16 %v2765, %v2764
        %v2780 = vpack.c.b16 %v2767, %v2766
        %v2781 = vpack.c.b16 %v2769, %v2768
        %v2782 = vpack.c.b16 %v2771, %v2770
        %v2783 = vpack.c.b16 %v2773, %v2772
        %v2784 = vpack.c.b16 %v2775, %v2774
        %v2785 = vpack.c.b16 %v2777, %v2776
        %2794 = vmatpush.bf16.msra.mxu0 %v2785
        %2795 = vmatpush.bf16.msra.mxu0 %v2784
        %2796 = vmatpush.bf16.msra.mxu0 %v2783
        %2797 = vmatpush.bf16.msra.mxu0 %v2782
        %2798 = vmatpush.bf16.msra.mxu0 %v2781
        %2799 = vmatpush.bf16.msra.mxu0 %v2780
        %2800 = vmatpush.bf16.msra.mxu0 %v2779
        %2801 = vmatpush.bf16.msra.mxu0 %v2778
        %2802 = vmatmul.bf16.gmra.mxu0 %v2718
        %v2803 = vpop.f32.mrf.mxu0
        %v2804 = vadd.f32 %v2744, %v2803
        %v2805 = vpop.f32.mrf.mxu0
        %v2806 = vadd.f32 %v2744, %v2805
        %2807 = vmatmul.bf16.gmra.mxu0 %v2719
        %v2808 = vpop.f32.mrf.mxu0
        %v2809 = vadd.f32 %v2744, %v2808
        %v2810 = vpop.f32.mrf.mxu0
        %v2811 = vadd.f32 %v2744, %v2810
        %2812 = vmatmul.bf16.gmra.mxu0 %v2720
        %v2813 = vpop.f32.mrf.mxu0
        %v2814 = vadd.f32 %v2744, %v2813
        %v2815 = vpop.f32.mrf.mxu0
        %v2816 = vadd.f32 %v2744, %v2815
        %2817 = vmatmul.bf16.gmra.mxu0 %v2721
        %v2818 = vpop.f32.mrf.mxu0
        %v2819 = vadd.f32 %v2744, %v2818
        %v2820 = vpop.f32.mrf.mxu0
        %v2821 = vadd.f32 %v2744, %v2820
        %2822 = vmatmul.bf16.gmra.mxu0 %v2722
        %v2823 = vpop.f32.mrf.mxu0
        %v2824 = vadd.f32 %v2744, %v2823
        %v2825 = vpop.f32.mrf.mxu0
        %v2826 = vadd.f32 %v2744, %v2825
        %2827 = vmatmul.bf16.gmra.mxu0 %v2723
        %v2828 = vpop.f32.mrf.mxu0
        %v2829 = vadd.f32 %v2744, %v2828
        %v2830 = vpop.f32.mrf.mxu0
        %v2831 = vadd.f32 %v2744, %v2830
        %2832 = vmatmul.bf16.gmra.mxu0 %v2724
        %v2833 = vpop.f32.mrf.mxu0
        %v2834 = vadd.f32 %v2744, %v2833
        %v2835 = vpop.f32.mrf.mxu0
        %v2836 = vadd.f32 %v2744, %v2835
        %2837 = vmatmul.bf16.gmra.mxu0 %v2725
        %v2838 = vpop.f32.mrf.mxu0
        %v2839 = vadd.f32 %v2744, %v2838
        %v2840 = vpop.f32.mrf.mxu0
        %v2841 = vadd.f32 %v2744, %v2840
        %2842 = vdwg.mxu0
        %v2843 = vmax.f32 %v2804, 0.0
        %v2844 = vmax.f32 %v2806, 0.0
        %v2845 = vmax.f32 %v2809, 0.0
        %v2846 = vmax.f32 %v2811, 0.0
        %v2847 = vmax.f32 %v2814, 0.0
        %v2848 = vmax.f32 %v2816, 0.0
        %v2849 = vmax.f32 %v2819, 0.0
        %v2850 = vmax.f32 %v2821, 0.0
        %v2851 = vmax.f32 %v2824, 0.0
        %v2852 = vmax.f32 %v2826, 0.0
        %v2853 = vmax.f32 %v2829, 0.0
        %v2854 = vmax.f32 %v2831, 0.0
        %v2855 = vmax.f32 %v2834, 0.0
        %v2856 = vmax.f32 %v2836, 0.0
        %v2857 = vmax.f32 %v2839, 0.0
        %v2858 = vmax.f32 %v2841, 0.0
        %v2859 = vpack.c.bf16 %v2844, %v2843
        %v2860 = vpack.c.bf16 %v2846, %v2845
        %v2861 = vpack.c.bf16 %v2848, %v2847
        %v2862 = vpack.c.bf16 %v2850, %v2849
        %v2863 = vpack.c.bf16 %v2852, %v2851
        %v2864 = vpack.c.bf16 %v2854, %v2853
        %v2865 = vpack.c.bf16 %v2856, %v2855
        %v2866 = vpack.c.bf16 %v2858, %v2857
        %v2867 = vld [vmem:[%s4] sm:$0xf]
        %v2868 = vld [vmem:[%s4 + $0x4] sm:$0xf]
        %v2869 = vld [vmem:[%s4 + $0x8] sm:$0xf]
        %v2870 = vld [vmem:[%s4 + $0xc] sm:$0xf]
        %v2871 = vld [vmem:[%s4 + $0x10] sm:$0xf]
        %v2872 = vld [vmem:[%s4 + $0x14] sm:$0xf]
        %v2873 = vld [vmem:[%s4 + $0x18] sm:$0xf]
        %v2874 = vld [vmem:[%s4 + $0x1c] sm:$0xf]
        %v2875 = vld [vmem:[%s5] sm:$0x1]
        %v2877 = vperm.slane %v2875, 0
        %v2887 = vunpack.c.l.b16 %v2867
        %v2888 = vunpack.c.l.b16 %v2868
        %v2889 = vunpack.c.l.b16 %v2869
        %v2890 = vunpack.c.l.b16 %v2870
        %v2891 = vunpack.c.l.b16 %v2871
        %v2892 = vunpack.c.l.b16 %v2872
        %v2893 = vunpack.c.l.b16 %v2873
        %v2894 = vunpack.c.l.b16 %v2874
        %v2895 = vpack.c.b16 %v2888, %v2887
        %v2896 = vpack.c.b16 %v2890, %v2889
        %v2897 = vpack.c.b16 %v2892, %v2891
        %v2898 = vpack.c.b16 %v2894, %v2893
        %v2904 = vsel %vm2634, %v2859, 0
        %v2907 = vsel %vm2634, %v2860, 0
        %v2910 = vsel %vm2634, %v2861, 0
        %v2913 = vsel %vm2634, %v2862, 0
        %v2916 = vsel %vm2634, %v2863, 0
        %v2919 = vsel %vm2634, %v2864, 0
        %v2922 = vsel %vm2634, %v2865, 0
        %v2925 = vsel %vm2634, %v2866, 0
        %2927 = vmatpush.bf16.msra.mxu0 0
        %2928 = vmatpush.bf16.msra.mxu0 0
        %2929 = vmatpush.bf16.msra.mxu0 0
        %2930 = vmatpush.bf16.msra.mxu0 0
        %2931 = vmatpush.bf16.msra.mxu0 %v2898
        %2932 = vmatpush.bf16.msra.mxu0 %v2897
        %2933 = vmatpush.bf16.msra.mxu0 %v2896
        %2934 = vmatpush.bf16.msra.mxu0 %v2895
        %2935 = vmatmul.bf16.gmra.mxu0 %v2904
        %v2936 = vpop.f32.mrf.mxu0
        %v2937 = vadd.f32 %v2877, %v2936
        %v2938 = vpop.f32.mrf.mxu0
        %v2939 = vadd.f32 %v2877, %v2938
        %2940 = vmatmul.bf16.gmra.mxu0 %v2907
        %v2941 = vpop.f32.mrf.mxu0
        %v2942 = vadd.f32 %v2877, %v2941
        %v2943 = vpop.f32.mrf.mxu0
        %v2944 = vadd.f32 %v2877, %v2943
        %2945 = vmatmul.bf16.gmra.mxu0 %v2910
        %v2946 = vpop.f32.mrf.mxu0
        %v2947 = vadd.f32 %v2877, %v2946
        %v2948 = vpop.f32.mrf.mxu0
        %v2949 = vadd.f32 %v2877, %v2948
        %2950 = vmatmul.bf16.gmra.mxu0 %v2913
        %v2951 = vpop.f32.mrf.mxu0
        %v2952 = vadd.f32 %v2877, %v2951
        %v2953 = vpop.f32.mrf.mxu0
        %v2954 = vadd.f32 %v2877, %v2953
        %2955 = vmatmul.bf16.gmra.mxu0 %v2916
        %v2956 = vpop.f32.mrf.mxu0
        %v2957 = vadd.f32 %v2877, %v2956
        %v2958 = vpop.f32.mrf.mxu0
        %v2959 = vadd.f32 %v2877, %v2958
        %2960 = vmatmul.bf16.gmra.mxu0 %v2919
        %v2961 = vpop.f32.mrf.mxu0
        %v2962 = vadd.f32 %v2877, %v2961
        %v2963 = vpop.f32.mrf.mxu0
        %v2964 = vadd.f32 %v2877, %v2963
        %2965 = vmatmul.bf16.gmra.mxu0 %v2922
        %v2966 = vpop.f32.mrf.mxu0
        %v2967 = vadd.f32 %v2877, %v2966
        %v2968 = vpop.f32.mrf.mxu0
        %v2969 = vadd.f32 %v2877, %v2968
        %2970 = vmatmul.bf16.gmra.mxu0 %v2925
        %v2971 = vpop.f32.mrf.mxu0
        %v2972 = vadd.f32 %v2877, %v2971
        %v2973 = vpop.f32.mrf.mxu0
        %v2974 = vadd.f32 %v2877, %v2973
        %2975 = vdwg.mxu0
        %v2976 = vmul.f32 %v2937, %v2937
        %v2977 = vmul.f32 %v2939, %v2939
        %v2978 = vmul.f32 %v2942, %v2942
        %v2979 = vmul.f32 %v2944, %v2944
        %v2980 = vmul.f32 %v2947, %v2947
        %v2981 = vmul.f32 %v2949, %v2949
        %v2982 = vmul.f32 %v2952, %v2952
        %v2983 = vmul.f32 %v2954, %v2954
        %v2984 = vmul.f32 %v2957, %v2957
        %v2985 = vmul.f32 %v2959, %v2959
        %v2986 = vmul.f32 %v2962, %v2962
        %v2987 = vmul.f32 %v2964, %v2964
        %v2988 = vmul.f32 %v2967, %v2967
        %v2989 = vmul.f32 %v2969, %v2969
        %v2990 = vmul.f32 %v2972, %v2972
        %v2991 = vmul.f32 %v2974, %v2974
        %v2992 = vsel %vm2600, %v2976, 0.0
        %2993 = vadd.xlane.f32.xlu0 %v2992
        %v2994 = vpop.xlane.xlu0 %2993
        %v2995 = vsel %vm2600, %v2977, 0.0
        %2996 = vadd.xlane.f32.xlu0 %v2995
        %v2997 = vpop.xlane.xlu0 %2996
        %v2998 = vsel %vm2600, %v2978, 0.0
        %2999 = vadd.xlane.f32.xlu0 %v2998
        %v3000 = vpop.xlane.xlu0 %2999
        %v3001 = vsel %vm2600, %v2979, 0.0
        %3002 = vadd.xlane.f32.xlu0 %v3001
        %v3003 = vpop.xlane.xlu0 %3002
        %v3004 = vsel %vm2600, %v2980, 0.0
        %3005 = vadd.xlane.f32.xlu0 %v3004
        %v3006 = vpop.xlane.xlu0 %3005
        %v3007 = vsel %vm2600, %v2981, 0.0
        %3008 = vadd.xlane.f32.xlu0 %v3007
        %v3009 = vpop.xlane.xlu0 %3008
        %v3010 = vsel %vm2600, %v2982, 0.0
        %3011 = vadd.xlane.f32.xlu0 %v3010
        %v3012 = vpop.xlane.xlu0 %3011
        %v3013 = vsel %vm2600, %v2983, 0.0
        %3014 = vadd.xlane.f32.xlu0 %v3013
        %v3015 = vpop.xlane.xlu0 %3014
        %v3016 = vsel %vm2600, %v2984, 0.0
        %3017 = vadd.xlane.f32.xlu0 %v3016
        %v3018 = vpop.xlane.xlu0 %3017
        %v3019 = vsel %vm2600, %v2985, 0.0
        %3020 = vadd.xlane.f32.xlu0 %v3019
        %v3021 = vpop.xlane.xlu0 %3020
        %v3022 = vsel %vm2600, %v2986, 0.0
        %3023 = vadd.xlane.f32.xlu0 %v3022
        %v3024 = vpop.xlane.xlu0 %3023
        %v3025 = vsel %vm2600, %v2987, 0.0
        %3026 = vadd.xlane.f32.xlu0 %v3025
        %v3027 = vpop.xlane.xlu0 %3026
        %v3028 = vsel %vm2600, %v2988, 0.0
        %3029 = vadd.xlane.f32.xlu0 %v3028
        %v3030 = vpop.xlane.xlu0 %3029
        %v3031 = vsel %vm2600, %v2989, 0.0
        %3032 = vadd.xlane.f32.xlu0 %v3031
        %v3033 = vpop.xlane.xlu0 %3032
        %v3034 = vsel %vm2600, %v2990, 0.0
        %3035 = vadd.xlane.f32.xlu0 %v3034
        %v3036 = vpop.xlane.xlu0 %3035
        %v3037 = vsel %vm2600, %v2991, 0.0
        %3038 = vadd.xlane.f32.xlu0 %v3037
        %v3039 = vpop.xlane.xlu0 %3038
        %v3040 = vmax.f32 %v2994, 1e-24
        %v3041 = vmax.f32 %v2997, 1e-24
        %v3042 = vmax.f32 %v3000, 1e-24
        %v3043 = vmax.f32 %v3003, 1e-24
        %v3044 = vmax.f32 %v3006, 1e-24
        %v3045 = vmax.f32 %v3009, 1e-24
        %v3046 = vmax.f32 %v3012, 1e-24
        %v3047 = vmax.f32 %v3015, 1e-24
        %v3048 = vmax.f32 %v3018, 1e-24
        %v3049 = vmax.f32 %v3021, 1e-24
        %v3050 = vmax.f32 %v3024, 1e-24
        %v3051 = vmax.f32 %v3027, 1e-24
        %v3052 = vmax.f32 %v3030, 1e-24
        %v3053 = vmax.f32 %v3033, 1e-24
        %v3054 = vmax.f32 %v3036, 1e-24
        %v3055 = vmax.f32 %v3039, 1e-24
        %v3056 = vrsqrt.pop %v3040
        %v3057 = vmul.f32 %v3056, %v3040
        %v3058 = vmul.f32 %v3057, %v3056
        %v3059 = vmul.f32 0.5, %v3058
        %v3060 = vsub.f32 1.5, %v3059
        %v3061 = vmul.f32 %v3056, %v3060
        %vm3062 = vweird.f32 %v3040
        %vm3063 = vweird.f32 %v3056
        %vm3064 = vmor %vm3062, %vm3063
        %v3065 = vsel %vm3064, %v3056, %v3061
        %v3066 = vrsqrt.pop %v3041
        %v3067 = vmul.f32 %v3066, %v3041
        %v3068 = vmul.f32 %v3067, %v3066
        %v3069 = vmul.f32 0.5, %v3068
        %v3070 = vsub.f32 1.5, %v3069
        %v3071 = vmul.f32 %v3066, %v3070
        %vm3072 = vweird.f32 %v3041
        %vm3073 = vweird.f32 %v3066
        %vm3074 = vmor %vm3072, %vm3073
        %v3075 = vsel %vm3074, %v3066, %v3071
        %v3076 = vrsqrt.pop %v3042
        %v3077 = vmul.f32 %v3076, %v3042
        %v3078 = vmul.f32 %v3077, %v3076
        %v3079 = vmul.f32 0.5, %v3078
        %v3080 = vsub.f32 1.5, %v3079
        %v3081 = vmul.f32 %v3076, %v3080
        %vm3082 = vweird.f32 %v3042
        %vm3083 = vweird.f32 %v3076
        %vm3084 = vmor %vm3082, %vm3083
        %v3085 = vsel %vm3084, %v3076, %v3081
        %v3086 = vrsqrt.pop %v3043
        %v3087 = vmul.f32 %v3086, %v3043
        %v3088 = vmul.f32 %v3087, %v3086
        %v3089 = vmul.f32 0.5, %v3088
        %v3090 = vsub.f32 1.5, %v3089
        %v3091 = vmul.f32 %v3086, %v3090
        %vm3092 = vweird.f32 %v3043
        %vm3093 = vweird.f32 %v3086
        %vm3094 = vmor %vm3092, %vm3093
        %v3095 = vsel %vm3094, %v3086, %v3091
        %v3096 = vrsqrt.pop %v3044
        %v3097 = vmul.f32 %v3096, %v3044
        %v3098 = vmul.f32 %v3097, %v3096
        %v3099 = vmul.f32 0.5, %v3098
        %v3100 = vsub.f32 1.5, %v3099
        %v3101 = vmul.f32 %v3096, %v3100
        %vm3102 = vweird.f32 %v3044
        %vm3103 = vweird.f32 %v3096
        %vm3104 = vmor %vm3102, %vm3103
        %v3105 = vsel %vm3104, %v3096, %v3101
        %v3106 = vrsqrt.pop %v3045
        %v3107 = vmul.f32 %v3106, %v3045
        %v3108 = vmul.f32 %v3107, %v3106
        %v3109 = vmul.f32 0.5, %v3108
        %v3110 = vsub.f32 1.5, %v3109
        %v3111 = vmul.f32 %v3106, %v3110
        %vm3112 = vweird.f32 %v3045
        %vm3113 = vweird.f32 %v3106
        %vm3114 = vmor %vm3112, %vm3113
        %v3115 = vsel %vm3114, %v3106, %v3111
        %v3116 = vrsqrt.pop %v3046
        %v3117 = vmul.f32 %v3116, %v3046
        %v3118 = vmul.f32 %v3117, %v3116
        %v3119 = vmul.f32 0.5, %v3118
        %v3120 = vsub.f32 1.5, %v3119
        %v3121 = vmul.f32 %v3116, %v3120
        %vm3122 = vweird.f32 %v3046
        %vm3123 = vweird.f32 %v3116
        %vm3124 = vmor %vm3122, %vm3123
        %v3125 = vsel %vm3124, %v3116, %v3121
        %v3126 = vrsqrt.pop %v3047
        %v3127 = vmul.f32 %v3126, %v3047
        %v3128 = vmul.f32 %v3127, %v3126
        %v3129 = vmul.f32 0.5, %v3128
        %v3130 = vsub.f32 1.5, %v3129
        %v3131 = vmul.f32 %v3126, %v3130
        %vm3132 = vweird.f32 %v3047
        %vm3133 = vweird.f32 %v3126
        %vm3134 = vmor %vm3132, %vm3133
        %v3135 = vsel %vm3134, %v3126, %v3131
        %v3136 = vrsqrt.pop %v3048
        %v3137 = vmul.f32 %v3136, %v3048
        %v3138 = vmul.f32 %v3137, %v3136
        %v3139 = vmul.f32 0.5, %v3138
        %v3140 = vsub.f32 1.5, %v3139
        %v3141 = vmul.f32 %v3136, %v3140
        %vm3142 = vweird.f32 %v3048
        %vm3143 = vweird.f32 %v3136
        %vm3144 = vmor %vm3142, %vm3143
        %v3145 = vsel %vm3144, %v3136, %v3141
        %v3146 = vrsqrt.pop %v3049
        %v3147 = vmul.f32 %v3146, %v3049
        %v3148 = vmul.f32 %v3147, %v3146
        %v3149 = vmul.f32 0.5, %v3148
        %v3150 = vsub.f32 1.5, %v3149
        %v3151 = vmul.f32 %v3146, %v3150
        %vm3152 = vweird.f32 %v3049
        %vm3153 = vweird.f32 %v3146
        %vm3154 = vmor %vm3152, %vm3153
        %v3155 = vsel %vm3154, %v3146, %v3151
        %v3156 = vrsqrt.pop %v3050
        %v3157 = vmul.f32 %v3156, %v3050
        %v3158 = vmul.f32 %v3157, %v3156
        %v3159 = vmul.f32 0.5, %v3158
        %v3160 = vsub.f32 1.5, %v3159
        %v3161 = vmul.f32 %v3156, %v3160
        %vm3162 = vweird.f32 %v3050
        %vm3163 = vweird.f32 %v3156
        %vm3164 = vmor %vm3162, %vm3163
        %v3165 = vsel %vm3164, %v3156, %v3161
        %v3166 = vrsqrt.pop %v3051
        %v3167 = vmul.f32 %v3166, %v3051
        %v3168 = vmul.f32 %v3167, %v3166
        %v3169 = vmul.f32 0.5, %v3168
        %v3170 = vsub.f32 1.5, %v3169
        %v3171 = vmul.f32 %v3166, %v3170
        %vm3172 = vweird.f32 %v3051
        %vm3173 = vweird.f32 %v3166
        %vm3174 = vmor %vm3172, %vm3173
        %v3175 = vsel %vm3174, %v3166, %v3171
        %v3176 = vrsqrt.pop %v3052
        %v3177 = vmul.f32 %v3176, %v3052
        %v3178 = vmul.f32 %v3177, %v3176
        %v3179 = vmul.f32 0.5, %v3178
        %v3180 = vsub.f32 1.5, %v3179
        %v3181 = vmul.f32 %v3176, %v3180
        %vm3182 = vweird.f32 %v3052
        %vm3183 = vweird.f32 %v3176
        %vm3184 = vmor %vm3182, %vm3183
        %v3185 = vsel %vm3184, %v3176, %v3181
        %v3186 = vrsqrt.pop %v3053
        %v3187 = vmul.f32 %v3186, %v3053
        %v3188 = vmul.f32 %v3187, %v3186
        %v3189 = vmul.f32 0.5, %v3188
        %v3190 = vsub.f32 1.5, %v3189
        %v3191 = vmul.f32 %v3186, %v3190
        %vm3192 = vweird.f32 %v3053
        %vm3193 = vweird.f32 %v3186
        %vm3194 = vmor %vm3192, %vm3193
        %v3195 = vsel %vm3194, %v3186, %v3191
        %v3196 = vrsqrt.pop %v3054
        %v3197 = vmul.f32 %v3196, %v3054
        %v3198 = vmul.f32 %v3197, %v3196
        %v3199 = vmul.f32 0.5, %v3198
        %v3200 = vsub.f32 1.5, %v3199
        %v3201 = vmul.f32 %v3196, %v3200
        %vm3202 = vweird.f32 %v3054
        %vm3203 = vweird.f32 %v3196
        %vm3204 = vmor %vm3202, %vm3203
        %v3205 = vsel %vm3204, %v3196, %v3201
        %v3206 = vrsqrt.pop %v3055
        %v3207 = vmul.f32 %v3206, %v3055
        %v3208 = vmul.f32 %v3207, %v3206
        %v3209 = vmul.f32 0.5, %v3208
        %v3210 = vsub.f32 1.5, %v3209
        %v3211 = vmul.f32 %v3206, %v3210
        %vm3212 = vweird.f32 %v3055
        %vm3213 = vweird.f32 %v3206
        %vm3214 = vmor %vm3212, %vm3213
        %v3215 = vsel %vm3214, %v3206, %v3211
        %v3216 = vmul.f32 %v2937, %v3065
        %v3217 = vmul.f32 %v2939, %v3075
        %v3218 = vmul.f32 %v2942, %v3085
        %v3219 = vmul.f32 %v2944, %v3095
        %v3220 = vmul.f32 %v2947, %v3105
        %v3221 = vmul.f32 %v2949, %v3115
        %v3222 = vmul.f32 %v2952, %v3125
        %v3223 = vmul.f32 %v2954, %v3135
        %v3224 = vmul.f32 %v2957, %v3145
        %v3225 = vmul.f32 %v2959, %v3155
        %v3226 = vmul.f32 %v2962, %v3165
        %v3227 = vmul.f32 %v2964, %v3175
        %v3228 = vmul.f32 %v2967, %v3185
        %v3229 = vmul.f32 %v2969, %v3195
        %v3230 = vmul.f32 %v2972, %v3205
        %v3231 = vmul.f32 %v2974, %v3215
        %v3232 = vtanh.pop %v3216
        %v3233 = vtanh.pop %v3217
        %v3234 = vtanh.pop %v3218
        %v3235 = vtanh.pop %v3219
        %v3236 = vtanh.pop %v3220
        %v3237 = vtanh.pop %v3221
        %v3238 = vtanh.pop %v3222
        %v3239 = vtanh.pop %v3223
        %v3240 = vtanh.pop %v3224
        %v3241 = vtanh.pop %v3225
        %v3242 = vtanh.pop %v3226
        %v3243 = vtanh.pop %v3227
        %v3244 = vtanh.pop %v3228
        %v3245 = vtanh.pop %v3229
        %v3246 = vtanh.pop %v3230
        %v3247 = vtanh.pop %v3231
        %3248 = vst.msk [vmem:[%s437] sm:$0xff] %vm2600, %v3232
        %3249 = vst.msk [vmem:[%s437 + $0x8] sm:$0xff] %vm2600, %v3233
        %3250 = vst.msk [vmem:[%s437 + $0x10] sm:$0xff] %vm2600, %v3234
        %3251 = vst.msk [vmem:[%s437 + $0x18] sm:$0xff] %vm2600, %v3235
        %3252 = vst.msk [vmem:[%s437 + $0x20] sm:$0xff] %vm2600, %v3236
        %3253 = vst.msk [vmem:[%s437 + $0x28] sm:$0xff] %vm2600, %v3237
        %3254 = vst.msk [vmem:[%s437 + $0x30] sm:$0xff] %vm2600, %v3238
        %3255 = vst.msk [vmem:[%s437 + $0x38] sm:$0xff] %vm2600, %v3239
        %3256 = vst.msk [vmem:[%s437 + $0x40] sm:$0xff] %vm2600, %v3240
        %3257 = vst.msk [vmem:[%s437 + $0x48] sm:$0xff] %vm2600, %v3241
        %3258 = vst.msk [vmem:[%s437 + $0x50] sm:$0xff] %vm2600, %v3242
        %3259 = vst.msk [vmem:[%s437 + $0x58] sm:$0xff] %vm2600, %v3243
        %3260 = vst.msk [vmem:[%s437 + $0x60] sm:$0xff] %vm2600, %v3244
        %3261 = vst.msk [vmem:[%s437 + $0x68] sm:$0xff] %vm2600, %v3245
        %3262 = vst.msk [vmem:[%s437 + $0x70] sm:$0xff] %vm2600, %v3246
        %3263 = vst.msk [vmem:[%s437 + $0x78] sm:$0xff] %vm2600, %v3247
        %v3264 = vpack.c.bf16 %v3233, %v3232
        %v3265 = vpack.c.bf16 %v3235, %v3234
        %v3266 = vpack.c.bf16 %v3237, %v3236
        %v3267 = vpack.c.bf16 %v3239, %v3238
        %v3268 = vpack.c.bf16 %v3241, %v3240
        %v3269 = vpack.c.bf16 %v3243, %v3242
        %v3270 = vpack.c.bf16 %v3245, %v3244
        %v3271 = vpack.c.bf16 %v3247, %v3246
        %v3272 = vld [vmem:[%s6] sm:$0xf]
        %v3273 = vld [vmem:[%s6 + $0x4] sm:$0xf]
        %v3274 = vld [vmem:[%s6 + $0x8] sm:$0xf]
        %v3275 = vld [vmem:[%s6 + $0xc] sm:$0xf]
        %v3276 = vld [vmem:[%s7] sm:$0x1]
        %v3278 = vperm.slane %v3276, 0
        %v3284 = vunpack.c.l.b16 %v3272
        %v3285 = vunpack.c.l.b16 %v3273
        %v3286 = vunpack.c.l.b16 %v3274
        %v3287 = vunpack.c.l.b16 %v3275
        %v3288 = vpack.c.b16 %v3285, %v3284
        %v3289 = vpack.c.b16 %v3287, %v3286
        %v3293 = vsel %vm2600, %v3264, 0
        %v3296 = vsel %vm2600, %v3265, 0
        %v3299 = vsel %vm2600, %v3266, 0
        %v3302 = vsel %vm2600, %v3267, 0
        %v3305 = vsel %vm2600, %v3268, 0
        %v3308 = vsel %vm2600, %v3269, 0
        %v3311 = vsel %vm2600, %v3270, 0
        %v3314 = vsel %vm2600, %v3271, 0
        %3316 = vmatpush.bf16.msra.mxu0 0
        %3317 = vmatpush.bf16.msra.mxu0 0
        %3318 = vmatpush.bf16.msra.mxu0 0
        %3319 = vmatpush.bf16.msra.mxu0 0
        %3320 = vmatpush.bf16.msra.mxu0 0
        %3321 = vmatpush.bf16.msra.mxu0 0
        %3322 = vmatpush.bf16.msra.mxu0 %v3289
        %3323 = vmatpush.bf16.msra.mxu0 %v3288
        %3324 = vmatmul.bf16.gmra.mxu0 %v3293
        %v3325 = vpop.f32.mrf.mxu0
        %v3326 = vadd.f32 %v3278, %v3325
        %v3327 = vpop.f32.mrf.mxu0
        %v3328 = vadd.f32 %v3278, %v3327
        %3329 = vmatmul.bf16.gmra.mxu0 %v3296
        %v3330 = vpop.f32.mrf.mxu0
        %v3331 = vadd.f32 %v3278, %v3330
        %v3332 = vpop.f32.mrf.mxu0
        %v3333 = vadd.f32 %v3278, %v3332
        %3334 = vmatmul.bf16.gmra.mxu0 %v3299
        %v3335 = vpop.f32.mrf.mxu0
        %v3336 = vadd.f32 %v3278, %v3335
        %v3337 = vpop.f32.mrf.mxu0
        %v3338 = vadd.f32 %v3278, %v3337
        %3339 = vmatmul.bf16.gmra.mxu0 %v3302
        %v3340 = vpop.f32.mrf.mxu0
        %v3341 = vadd.f32 %v3278, %v3340
        %v3342 = vpop.f32.mrf.mxu0
        %v3343 = vadd.f32 %v3278, %v3342
        %3344 = vmatmul.bf16.gmra.mxu0 %v3305
        %v3345 = vpop.f32.mrf.mxu0
        %v3346 = vadd.f32 %v3278, %v3345
        %v3347 = vpop.f32.mrf.mxu0
        %v3348 = vadd.f32 %v3278, %v3347
        %3349 = vmatmul.bf16.gmra.mxu0 %v3308
        %v3350 = vpop.f32.mrf.mxu0
        %v3351 = vadd.f32 %v3278, %v3350
        %v3352 = vpop.f32.mrf.mxu0
        %v3353 = vadd.f32 %v3278, %v3352
        %3354 = vmatmul.bf16.gmra.mxu0 %v3311
        %v3355 = vpop.f32.mrf.mxu0
        %v3356 = vadd.f32 %v3278, %v3355
        %v3357 = vpop.f32.mrf.mxu0
        %v3358 = vadd.f32 %v3278, %v3357
        %3359 = vmatmul.bf16.gmra.mxu0 %v3314
        %v3360 = vpop.f32.mrf.mxu0
        %v3361 = vadd.f32 %v3278, %v3360
        %v3362 = vpop.f32.mrf.mxu0
        %v3363 = vadd.f32 %v3278, %v3362
        %3364 = vdwg.mxu0
        %v3365 = vmax.f32 %v3326, 0.0
        %v3366 = vmax.f32 %v3328, 0.0
        %v3367 = vmax.f32 %v3331, 0.0
        %v3368 = vmax.f32 %v3333, 0.0
        %v3369 = vmax.f32 %v3336, 0.0
        %v3370 = vmax.f32 %v3338, 0.0
        %v3371 = vmax.f32 %v3341, 0.0
        %v3372 = vmax.f32 %v3343, 0.0
        %v3373 = vmax.f32 %v3346, 0.0
        %v3374 = vmax.f32 %v3348, 0.0
        %v3375 = vmax.f32 %v3351, 0.0
        %v3376 = vmax.f32 %v3353, 0.0
        %v3377 = vmax.f32 %v3356, 0.0
        %v3378 = vmax.f32 %v3358, 0.0
        %v3379 = vmax.f32 %v3361, 0.0
        %v3380 = vmax.f32 %v3363, 0.0
        %v3381 = vpack.c.bf16 %v3366, %v3365
        %v3382 = vpack.c.bf16 %v3368, %v3367
        %v3383 = vpack.c.bf16 %v3370, %v3369
        %v3384 = vpack.c.bf16 %v3372, %v3371
        %v3385 = vpack.c.bf16 %v3374, %v3373
        %v3386 = vpack.c.bf16 %v3376, %v3375
        %v3387 = vpack.c.bf16 %v3378, %v3377
        %v3388 = vpack.c.bf16 %v3380, %v3379
        %v3389 = vld [vmem:[%s8] sm:$0xf]
        %v3390 = vld [vmem:[%s8 + $0x4] sm:$0xf]
        %v3391 = vld [vmem:[%s8 + $0x8] sm:$0xf]
        %v3392 = vld [vmem:[%s8 + $0xc] sm:$0xf]
        %v3393 = vld [vmem:[%s8 + $0x10] sm:$0xf]
        %v3394 = vld [vmem:[%s8 + $0x14] sm:$0xf]
        %v3395 = vld [vmem:[%s8 + $0x18] sm:$0xf]
        %v3396 = vld [vmem:[%s8 + $0x1c] sm:$0xf]
        %v3397 = vld [vmem:[%s9] sm:$0x1]
        %v3399 = vperm.slane %v3397, 0
        %v3409 = vunpack.c.l.b16 %v3389
        %v3410 = vunpack.c.l.b16 %v3390
        %v3411 = vunpack.c.l.b16 %v3391
        %v3412 = vunpack.c.l.b16 %v3392
        %v3413 = vunpack.c.l.b16 %v3393
        %v3414 = vunpack.c.l.b16 %v3394
        %v3415 = vunpack.c.l.b16 %v3395
        %v3416 = vunpack.c.l.b16 %v3396
        %v3417 = vpack.c.b16 %v3410, %v3409
        %v3418 = vpack.c.b16 %v3412, %v3411
        %v3419 = vpack.c.b16 %v3414, %v3413
        %v3420 = vpack.c.b16 %v3416, %v3415
        %v3426 = vsel %vm2634, %v3381, 0
        %v3429 = vsel %vm2634, %v3382, 0
        %v3432 = vsel %vm2634, %v3383, 0
        %v3435 = vsel %vm2634, %v3384, 0
        %v3438 = vsel %vm2634, %v3385, 0
        %v3441 = vsel %vm2634, %v3386, 0
        %v3444 = vsel %vm2634, %v3387, 0
        %v3447 = vsel %vm2634, %v3388, 0
        %3449 = vmatpush.bf16.msra.mxu0 0
        %3450 = vmatpush.bf16.msra.mxu0 0
        %3451 = vmatpush.bf16.msra.mxu0 0
        %3452 = vmatpush.bf16.msra.mxu0 0
        %3453 = vmatpush.bf16.msra.mxu0 %v3420
        %3454 = vmatpush.bf16.msra.mxu0 %v3419
        %3455 = vmatpush.bf16.msra.mxu0 %v3418
        %3456 = vmatpush.bf16.msra.mxu0 %v3417
        %3457 = vmatmul.bf16.gmra.mxu0 %v3426
        %v3458 = vpop.f32.mrf.mxu0
        %v3459 = vadd.f32 %v3399, %v3458
        %v3460 = vpop.f32.mrf.mxu0
        %v3461 = vadd.f32 %v3399, %v3460
        %3462 = vmatmul.bf16.gmra.mxu0 %v3429
        %v3463 = vpop.f32.mrf.mxu0
        %v3464 = vadd.f32 %v3399, %v3463
        %v3465 = vpop.f32.mrf.mxu0
        %v3466 = vadd.f32 %v3399, %v3465
        %3467 = vmatmul.bf16.gmra.mxu0 %v3432
        %v3468 = vpop.f32.mrf.mxu0
        %v3469 = vadd.f32 %v3399, %v3468
        %v3470 = vpop.f32.mrf.mxu0
        %v3471 = vadd.f32 %v3399, %v3470
        %3472 = vmatmul.bf16.gmra.mxu0 %v3435
        %v3473 = vpop.f32.mrf.mxu0
        %v3474 = vadd.f32 %v3399, %v3473
        %v3475 = vpop.f32.mrf.mxu0
        %v3476 = vadd.f32 %v3399, %v3475
        %3477 = vmatmul.bf16.gmra.mxu0 %v3438
        %v3478 = vpop.f32.mrf.mxu0
        %v3479 = vadd.f32 %v3399, %v3478
        %v3480 = vpop.f32.mrf.mxu0
        %v3481 = vadd.f32 %v3399, %v3480
        %3482 = vmatmul.bf16.gmra.mxu0 %v3441
        %v3483 = vpop.f32.mrf.mxu0
        %v3484 = vadd.f32 %v3399, %v3483
        %v3485 = vpop.f32.mrf.mxu0
        %v3486 = vadd.f32 %v3399, %v3485
        %3487 = vmatmul.bf16.gmra.mxu0 %v3444
        %v3488 = vpop.f32.mrf.mxu0
        %v3489 = vadd.f32 %v3399, %v3488
        %v3490 = vpop.f32.mrf.mxu0
        %v3491 = vadd.f32 %v3399, %v3490
        %3492 = vmatmul.bf16.gmra.mxu0 %v3447
        %v3493 = vpop.f32.mrf.mxu0
        %v3494 = vadd.f32 %v3399, %v3493
        %v3495 = vpop.f32.mrf.mxu0
        %v3496 = vadd.f32 %v3399, %v3495
        %3497 = vdwg.mxu0
        %3498 = vst [vmem:[%s425] sm:$0xff] %v3459
        %3499 = vst [vmem:[%s425 + $0x8] sm:$0xff] %v3461
        %3500 = vst [vmem:[%s425 + $0x10] sm:$0xff] %v3464
        %3501 = vst [vmem:[%s425 + $0x18] sm:$0xff] %v3466
        %3502 = vst [vmem:[%s425 + $0x20] sm:$0xff] %v3469
        %3503 = vst [vmem:[%s425 + $0x28] sm:$0xff] %v3471
        %3504 = vst [vmem:[%s425 + $0x30] sm:$0xff] %v3474
        %3505 = vst [vmem:[%s425 + $0x38] sm:$0xff] %v3476
        %3506 = vst [vmem:[%s425 + $0x40] sm:$0xff] %v3479
        %3507 = vst [vmem:[%s425 + $0x48] sm:$0xff] %v3481
        %3508 = vst [vmem:[%s425 + $0x50] sm:$0xff] %v3484
        %3509 = vst [vmem:[%s425 + $0x58] sm:$0xff] %v3486
        %3510 = vst [vmem:[%s425 + $0x60] sm:$0xff] %v3489
        %3511 = vst [vmem:[%s425 + $0x68] sm:$0xff] %v3491
        %3512 = vst [vmem:[%s425 + $0x70] sm:$0xff] %v3494
        %3513 = vst [vmem:[%s425 + $0x78] sm:$0xff] %v3496
        %s3514 = sand.u32 %s253, 1
        %s3515 = scalar_lea.sflag [#allocation3], %s3514
        %s3516 = sand.u32 %s253, 1
        %s3517 = smul.addr %s3516, 128
        %s3518 = scalar_lea.vmem [#allocation2], %s3517
        %s3519 = smul.u32 16, %s30
        %p3520 = scmp.lt.s32.totalorder %s3519, 31
        %s3521 = scalar_select %p3520, %s3519, 31
        %s3522 = smul.addr %s3521, 8
        %s3523 = scalar_lea.vmem %s11, %s3522
        %s3524 = sand.u32 %s305, 1
        %s3525 = scalar_lea.sflag [#allocation5], %s3524
        %s3526 = sand.u32 %s305, 1
        %s3527 = smul.addr %s3526, 128
        %s3528 = scalar_lea.vmem [#allocation4], %s3527
        // Predicated region
        $region61: #{string_autoencoder_forward.1} parent=59 // pred_check
          %p3529 = pneg %p263
        $region62: #{string_autoencoder_forward.1} parent=59 // pred_check_branch
          %3531 = sbr.rel (%p3529) target = $region64
        $region63: #{string_autoencoder_forward.1} parent=59 // pred_region
          %s3532 = smul.u32 16, %s30
          %3534 = vsyncadd %s3515, 0
          %s3535 = smul.addr %s3532, 8
          %s3536 = scalar_lea.hbm %s10, %s3535
          %s3537 = sshll.u32 %s3518, 4
          %s3538 = int_to_ptr.vmem [resolvable:$true] %s3537
          %s3539 = sshll.u32 %s3536, 4
          %s3540 = int_to_ptr.hbm [resolvable:$true] %s3539
          %3545 = dma.vmem_to_hbm [thread:$0]  %s3538, 2048, %s3540, %s3515, 128, 128, 8
        $region64: #{string_autoencoder_forward.1} parent=59 // pred_fallthru
          _
        // Predicated region
        $region65: #{string_autoencoder_forward.1} parent=59 // pred_check
          %p3546 = pneg %p289
        $region66: #{string_autoencoder_forward.1} parent=59 // pred_check_branch
          %3548 = sbr.rel (%p3546) target = $region68
        $region67: #{string_autoencoder_forward.1} parent=59 // pred_region
          %s3549 = smul.u32 16, %s30
        $region68: #{string_autoencoder_forward.1} parent=59 // pred_fallthru
          _
        // Predicated region
        $region69: #{string_autoencoder_forward.1} parent=59 // pred_check
          %p3550 = pneg %p315
        $region70: #{string_autoencoder_forward.1} parent=59 // pred_check_branch
          %3552 = sbr.rel (%p3550) target = $region72
        $region71: #{string_autoencoder_forward.1} parent=59 // pred_region
          %s3553 = smul.u32 16, %s30
          %3555 = vsyncadd %s3525, 0
          %s3556 = smul.addr %s3553, 8
          %s3557 = scalar_lea.hbm %s12, %s3556
          %s3558 = sshll.u32 %s3528, 4
          %s3559 = int_to_ptr.vmem [resolvable:$true] %s3558
          %s3560 = sshll.u32 %s3557, 4
          %s3561 = int_to_ptr.hbm [resolvable:$true] %s3560
          %3566 = dma.vmem_to_hbm [thread:$0]  %s3559, 2048, %s3561, %s3525, 128, 128, 8
        $region72: #{string_autoencoder_forward.1} parent=59 // pred_fallthru
          _
      $region60: #{string_autoencoder_forward.1} parent=5 // pred_fallthru
        _
      %p3567 = scmp.le.s32.totalorder 2, %s25
      // Predicated region
      $region73: #{string_autoencoder_forward.1} parent=5 // pred_check
        %p3568 = pneg %p3567
      $region74: #{string_autoencoder_forward.1} parent=5 // pred_check_branch
        %3570 = sbr.rel (%p3568) target = $region76
      $region75: #{string_autoencoder_forward.1} parent=5 // pred_region
        %s3571 = ssub.s32 %s25, 2
        // Predicated region
        $region77: #{string_autoencoder_forward.1} parent=75 // pred_check
          %p3572 = pneg %p269
        $region78: #{string_autoencoder_forward.1} parent=75 // pred_check_branch
          %3574 = sbr.rel (%p3572) target = $region80
        $region79: #{string_autoencoder_forward.1} parent=75 // pred_region
          %s3575 = sand.u32 %s254, 1
          %s3576 = scalar_lea.sflag [#allocation3], %s3575
          %s3577 = sand.u32 %s254, 1
          %s3578 = smul.addr %s3577, 128
          %s3579 = scalar_lea.vmem [#allocation2], %s3578
          %3581 = dma.done %s3576, 2048
        $region80: #{string_autoencoder_forward.1} parent=75 // pred_fallthru
          _
        // Predicated region
        $region81: #{string_autoencoder_forward.1} parent=75 // pred_check
          %p3582 = pneg %p295
        $region82: #{string_autoencoder_forward.1} parent=75 // pred_check_branch
          %3584 = sbr.rel (%p3582) target = $region84
        $region83: #{string_autoencoder_forward.1} parent=75 // pred_region
          %s3585 = smul.u32 16, %s31
          %p3586 = scmp.lt.s32.totalorder %s3585, 31
          %s3587 = scalar_select %p3586, %s3585, 31
          %s3588 = smul.addr %s3587, 8
          %s3589 = scalar_lea.vmem %s11, %s3588
        $region84: #{string_autoencoder_forward.1} parent=75 // pred_fallthru
          _
        // Predicated region
        $region85: #{string_autoencoder_forward.1} parent=75 // pred_check
          %p3590 = pneg %p321
        $region86: #{string_autoencoder_forward.1} parent=75 // pred_check_branch
          %3592 = sbr.rel (%p3590) target = $region88
        $region87: #{string_autoencoder_forward.1} parent=75 // pred_region
          %s3593 = sand.u32 %s306, 1
          %s3594 = scalar_lea.sflag [#allocation5], %s3593
          %s3595 = sand.u32 %s306, 1
          %s3596 = smul.addr %s3595, 128
          %s3597 = scalar_lea.vmem [#allocation4], %s3596
          %3599 = dma.done %s3594, 2048
        $region88: #{string_autoencoder_forward.1} parent=75 // pred_fallthru
          _
      $region76: #{string_autoencoder_forward.1} parent=5 // pred_fallthru
        _
    $region6: #{string_autoencoder_forward.1} parent=1 // loop_footer
      %s29 = sadd.s32 1, %s25
    $region7: #{string_autoencoder_forward.1} parent=1 // loop_footer_branch
      %24 = sbr.rel target = $region3
    $region8: #{string_autoencoder_forward.1} parent=1 // loop_exit
      _
    %3600 = vsyncpa [#allocation3], 1
    %s3601 = scalar_lea.sflag [#allocation3], 1
    %3602 = vsyncpa %s3601, 1
    %3603 = vsyncpa [#allocation5], 1
    %s3604 = scalar_lea.sflag [#allocation5], 1
    %3605 = vsyncpa %s3604, 1

</llo_original>
